<compile_context>
chip_gen: v5e
topology: v5e:2x2
jax: 0.10.0
libtpu: 0.0.40
codegen_flags: <defaults>
</compile_context>

<pallas_src>
import math

import jax
import jax.numpy as jnp
import numpy as np
from jax.experimental import pallas as pl
from jax.experimental.pallas import tpu as pltpu


# ---------------------------------------------------------------------------
# Fused Pallas kernel
# ---------------------------------------------------------------------------

def _make_fused_kernel(T, B, F, H, L, n_out):
    """Builds the fused LSTM(+FC+sigmoid) kernel for static (T, B, F, H, L)."""

    def kernel(*refs):
        # refs layout:
        #   refs[0]                : x2d          (T*B, F)   time-major rows (t*B + b)
        #   refs[1 + 3l + 0]       : wih_l        (4, in, H) per-gate W_ih^T
        #   refs[1 + 3l + 1]       : whh_l        (4, H, H)  per-gate W_hh^T
        #   refs[1 + 3l + 2]       : b_l          (4, 1, H)  b_ih + b_hh per gate
        #   refs[1 + 3L]           : fc_w         (H, n_out)
        #   refs[2 + 3L]           : fc_b         (1, n_out)
        #   refs[3 + 3L]           : out          (B, n_out)           [output]
        #   refs[4 + 3L]           : hseq scratch (T*B, H)  f32 VMEM    [scratch]
        x_ref = refs[0]
        layer_refs = refs[1:1 + 3 * L]
        fc_w_ref = refs[1 + 3 * L]
        fc_b_ref = refs[2 + 3 * L]
        out_ref = refs[3 + 3 * L]
        hseq_scr = refs[4 + 3 * L]

        h = None
        for l in range(L):
            wih_ref = layer_refs[3 * l + 0]   # (4, in, H)
            whh_ref = layer_refs[3 * l + 1]   # (4, H, H)
            b_ref = layer_refs[3 * l + 2]     # (4, 1, H)

            # Layer input sequence as one 2-D slab: (T*B, in).
            seq2d = x_ref[...] if l == 0 else hseq_scr[...]

            # Hoisted input projection: one big GEMM per gate, bias folded in.
            # This removes half the matmuls (and the bias add) from the serial
            # recurrence below.
            xp = [
                jnp.dot(seq2d, wih_ref[k], preferred_element_type=jnp.float32)
                + b_ref[k]
                for k in range(4)
            ]                                   # 4 x (T*B, H), gate order i,f,g,o
            whh = [whh_ref[k] for k in range(4)]  # 4 x (H, H)

            h = jnp.zeros((B, H), jnp.float32)
            c = jnp.zeros((B, H), jnp.float32)

            # Serial recurrence (fully unrolled; T is small and static).
            for t in range(T):
                r0 = t * B
                pre = [
                    xp[k][r0:r0 + B, :]
                    + jnp.dot(h, whh[k], preferred_element_type=jnp.float32)
                    for k in range(4)
                ]
                i_g = jax.nn.sigmoid(pre[0])
                f_g = jax.nn.sigmoid(pre[1])
                g_g = jnp.tanh(pre[2])
                o_g = jax.nn.sigmoid(pre[3])
                c = f_g * c + i_g * g_g
                h = o_g * jnp.tanh(c)

                # Only intermediate layers need the full hidden sequence
                # (consumed by the next layer's hoisted GEMM); the last layer
                # never writes it -- only the final h feeds the FC head.
                if l + 1 < L:
                    hseq_scr[r0:r0 + B, :] = h

        # FC + sigmoid head on the last timestep's hidden state only.
        logits = (
            jnp.dot(h, fc_w_ref[...], preferred_element_type=jnp.float32)
            + fc_b_ref[...]
        )
        out_ref[...] = jax.nn.sigmoid(logits).astype(out_ref.dtype)

    return kernel


# ---------------------------------------------------------------------------
# Wrapper
# ---------------------------------------------------------------------------

@jax.jit
def lstm_binary_classifier_forward(x, params):
    """x: (B, T, n_features) batch_first, float32. Returns (B,) probabilities."""
    B, T, F = x.shape
    H = params["lstm"][0]["whh"].shape[-1]
    L = len(params["lstm"])
    n_out = params["fc_w_t"].shape[1]

    # Time-major 2-D slab: row index = t*B + b.
    x2d = jnp.transpose(x, (1, 0, 2)).reshape(T * B, F)

    flat_args = [x2d]
    for layer in params["lstm"]:
        flat_args += [layer["wih"], layer["whh"], layer["b"]]
    flat_args += [params["fc_w_t"], params["fc_b"]]

    vmem_spec = pl.BlockSpec(memory_space=pltpu.MemorySpace.VMEM)
    out = pl.pallas_call(
        _make_fused_kernel(T, B, F, H, L, n_out),
        out_shape=jax.ShapeDtypeStruct((B, n_out), jnp.float32),
        in_specs=[vmem_spec] * len(flat_args),
        out_specs=vmem_spec,
        scratch_shapes=[pltpu.VMEM((T * B, H), jnp.float32)],
    )(*flat_args)
    return jnp.squeeze(out, axis=1)


# ---------------------------------------------------------------------------
# Deterministic parameter init (same math as torch.nn.LSTM / Linear defaults,
# stored gate-major / transposed for lane-aligned in-kernel gate tensors)
# ---------------------------------------------------------------------------

def init_params(key, n_features, n_hidden, n_layers, n_out=1):
    k = 1.0 / math.sqrt(n_hidden)
    layers = []
    for l in range(n_layers):
        in_sz = n_features if l == 0 else n_hidden
        key, k1, k2, k3, k4 = jax.random.split(key, 5)
        w_ih = jax.random.uniform(k1, (4 * n_hidden, in_sz), jnp.float32, -k, k)
        w_hh = jax.random.uniform(k2, (4 * n_hidden, n_hidden), jnp.float32, -k, k)
        b_ih = jax.random.uniform(k3, (4 * n_hidden,), jnp.float32, -k, k)
        b_hh = jax.random.uniform(k4, (4 * n_hidden,), jnp.float32, -k, k)
        layers.append({
            "wih": jnp.transpose(w_ih.reshape(4, n_hidden, in_sz), (0, 2, 1)),    # (4, in, H)
            "whh": jnp.transpose(w_hh.reshape(4, n_hidden, n_hidden), (0, 2, 1)),  # (4, H, H)
            "b": (b_ih + b_hh).reshape(4, 1, n_hidden),                            # (4, 1, H)
        })
    key, k5, k6 = jax.random.split(key, 3)
    kf = 1.0 / math.sqrt(n_hidden)
    fc_w = jax.random.uniform(k5, (n_out, n_hidden), jnp.float32, -kf, kf)
    fc_b = jax.random.uniform(k6, (n_out,), jnp.float32, -kf, kf)
    return {"lstm": layers, "fc_w_t": fc_w.T, "fc_b": fc_b[None, :]}


# ---------------------------------------------------------------------------
# Pure-JAX reference (correctness check, same math as torch.nn.LSTM + Linear)
# ---------------------------------------------------------------------------

def reference_forward(x, params):
    B, T, _ = x.shape
    inp = x                                     # (B, T, in)
    for layer in params["lstm"]:
        wih, whh, b = layer["wih"], layer["whh"], layer["b"]
        H = whh.shape[-1]
        h = jnp.zeros((B, H), jnp.float32)
        c = jnp.zeros((B, H), jnp.float32)
        outs = []
        for t in range(T):
            xt = inp[:, t, :]
            pre = [xt @ wih[k] + h @ whh[k] + b[k] for k in range(4)]
            i_g = jax.nn.sigmoid(pre[0])
            f_g = jax.nn.sigmoid(pre[1])
            g_g = jnp.tanh(pre[2])
            o_g = jax.nn.sigmoid(pre[3])
            c = f_g * c + i_g * g_g
            h = o_g * jnp.tanh(c)
            outs.append(h)
        inp = jnp.stack(outs, axis=1)
    logits = inp[:, -1, :] @ params["fc_w_t"] + params["fc_b"]
    return jnp.squeeze(jax.nn.sigmoid(logits), axis=1)


# ---------------------------------------------------------------------------

if __name__ == "__main__":
    B, T, F, H, L = 2, 8, 16, 32, 2   # batch, seq, n_features, n_hidden, n_layers

    key = jax.random.PRNGKey(0)
    key, xkey = jax.random.split(key)
    x = jax.random.normal(xkey, (B, T, F), jnp.float32)

    params = init_params(key, n_features=F, n_hidden=H, n_layers=L, n_out=1)

    out = lstm_binary_classifier_forward(x, params)
    out = jax.block_until_ready(out)

    ref = reference_forward(x, params)
    np.testing.assert_allclose(np.asarray(out), np.asarray(ref), atol=1e-4, rtol=1e-4)
    assert out.shape == (B,)

    print("KERNEL_OK")
</pallas_src>

<mosaic_0001>
module attributes {stable_mosaic.version = 11 : i64} {
  func.func @kernel(%arg0: memref<16x16xf32, #tpu.memory_space<vmem>>, %arg1: memref<4x16x32xf32, #tpu.memory_space<vmem>>, %arg2: memref<4x32x32xf32, #tpu.memory_space<vmem>>, %arg3: memref<4x1x32xf32, #tpu.memory_space<vmem>>, %arg4: memref<4x32x32xf32, #tpu.memory_space<vmem>>, %arg5: memref<4x32x32xf32, #tpu.memory_space<vmem>>, %arg6: memref<4x1x32xf32, #tpu.memory_space<vmem>>, %arg7: memref<32x1xf32, #tpu.memory_space<vmem>>, %arg8: memref<1x1xf32, #tpu.memory_space<vmem>>, %arg9: memref<2x1xf32, #tpu.memory_space<vmem>>, %arg10: memref<16x32xf32, #tpu.memory_space<vmem>>) attributes {dimension_semantics = [], scalar_prefetch = 0 : i64, scratch_operands = 1 : i64, tpu.core_type = #tpu.core_type<tc>} {
    %c0 = arith.constant 0 : index
    %c0_0 = arith.constant 0 : index
    %0 = vector.load %arg0[%c0, %c0_0] : memref<16x16xf32, #tpu.memory_space<vmem>>, vector<16x16xf32>
    %c0_1 = arith.constant 0 : index
    %c0_2 = arith.constant 0 : index
    %c0_3 = arith.constant 0 : index
    %1 = vector.load %arg1[%c0_1, %c0_2, %c0_3] : memref<4x16x32xf32, #tpu.memory_space<vmem>>, vector<1x16x32xf32>
    %2 = vector.shape_cast %1 : vector<1x16x32xf32> to vector<16x32xf32>
    %cst = arith.constant dense<0.000000e+00> : vector<16x32xf32>
    %3 = tpu.matmul %0, %2, %cst {dimension_numbers = #tpu.dot_dimension_numbers<[1], [0], [0], [1], [0, 0, 1, 1], [], []>} : vector<16x16xf32>, vector<16x32xf32>, vector<16x32xf32> -> vector<16x32xf32>
    %c0_4 = arith.constant 0 : index
    %c0_5 = arith.constant 0 : index
    %c0_6 = arith.constant 0 : index
    %4 = vector.load %arg3[%c0_4, %c0_5, %c0_6] : memref<4x1x32xf32, #tpu.memory_space<vmem>>, vector<1x1x32xf32>
    %5 = vector.shape_cast %4 : vector<1x1x32xf32> to vector<1x32xf32>
    %6 = vector.broadcast %5 : vector<1x32xf32> to vector<16x32xf32>
    %7 = arith.addf %3, %6 : vector<16x32xf32>
    %c1 = arith.constant 1 : index
    %c0_7 = arith.constant 0 : index
    %c0_8 = arith.constant 0 : index
    %8 = vector.load %arg1[%c1, %c0_7, %c0_8] : memref<4x16x32xf32, #tpu.memory_space<vmem>>, vector<1x16x32xf32>
    %9 = vector.shape_cast %8 : vector<1x16x32xf32> to vector<16x32xf32>
    %cst_9 = arith.constant dense<0.000000e+00> : vector<16x32xf32>
    %10 = tpu.matmul %0, %9, %cst_9 {dimension_numbers = #tpu.dot_dimension_numbers<[1], [0], [0], [1], [0, 0, 1, 1], [], []>} : vector<16x16xf32>, vector<16x32xf32>, vector<16x32xf32> -> vector<16x32xf32>
    %c1_10 = arith.constant 1 : index
    %c0_11 = arith.constant 0 : index
    %c0_12 = arith.constant 0 : index
    %11 = vector.load %arg3[%c1_10, %c0_11, %c0_12] : memref<4x1x32xf32, #tpu.memory_space<vmem>>, vector<1x1x32xf32>
    %12 = vector.shape_cast %11 : vector<1x1x32xf32> to vector<1x32xf32>
    %13 = vector.broadcast %12 : vector<1x32xf32> to vector<16x32xf32>
    %14 = arith.addf %10, %13 : vector<16x32xf32>
    %c2 = arith.constant 2 : index
    %c0_13 = arith.constant 0 : index
    %c0_14 = arith.constant 0 : index
    %15 = vector.load %arg1[%c2, %c0_13, %c0_14] : memref<4x16x32xf32, #tpu.memory_space<vmem>>, vector<1x16x32xf32>
    %16 = vector.shape_cast %15 : vector<1x16x32xf32> to vector<16x32xf32>
    %cst_15 = arith.constant dense<0.000000e+00> : vector<16x32xf32>
    %17 = tpu.matmul %0, %16, %cst_15 {dimension_numbers = #tpu.dot_dimension_numbers<[1], [0], [0], [1], [0, 0, 1, 1], [], []>} : vector<16x16xf32>, vector<16x32xf32>, vector<16x32xf32> -> vector<16x32xf32>
    %c2_16 = arith.constant 2 : index
    %c0_17 = arith.constant 0 : index
    %c0_18 = arith.constant 0 : index
    %18 = vector.load %arg3[%c2_16, %c0_17, %c0_18] : memref<4x1x32xf32, #tpu.memory_space<vmem>>, vector<1x1x32xf32>
    %19 = vector.shape_cast %18 : vector<1x1x32xf32> to vector<1x32xf32>
    %20 = vector.broadcast %19 : vector<1x32xf32> to vector<16x32xf32>
    %21 = arith.addf %17, %20 : vector<16x32xf32>
    %c3 = arith.constant 3 : index
    %c0_19 = arith.constant 0 : index
    %c0_20 = arith.constant 0 : index
    %22 = vector.load %arg1[%c3, %c0_19, %c0_20] : memref<4x16x32xf32, #tpu.memory_space<vmem>>, vector<1x16x32xf32>
    %23 = vector.shape_cast %22 : vector<1x16x32xf32> to vector<16x32xf32>
    %cst_21 = arith.constant dense<0.000000e+00> : vector<16x32xf32>
    %24 = tpu.matmul %0, %23, %cst_21 {dimension_numbers = #tpu.dot_dimension_numbers<[1], [0], [0], [1], [0, 0, 1, 1], [], []>} : vector<16x16xf32>, vector<16x32xf32>, vector<16x32xf32> -> vector<16x32xf32>
    %c3_22 = arith.constant 3 : index
    %c0_23 = arith.constant 0 : index
    %c0_24 = arith.constant 0 : index
    %25 = vector.load %arg3[%c3_22, %c0_23, %c0_24] : memref<4x1x32xf32, #tpu.memory_space<vmem>>, vector<1x1x32xf32>
    %26 = vector.shape_cast %25 : vector<1x1x32xf32> to vector<1x32xf32>
    %27 = vector.broadcast %26 : vector<1x32xf32> to vector<16x32xf32>
    %28 = arith.addf %24, %27 : vector<16x32xf32>
    %c0_25 = arith.constant 0 : index
    %c0_26 = arith.constant 0 : index
    %c0_27 = arith.constant 0 : index
    %29 = vector.load %arg2[%c0_25, %c0_26, %c0_27] : memref<4x32x32xf32, #tpu.memory_space<vmem>>, vector<1x32x32xf32>
    %30 = vector.shape_cast %29 : vector<1x32x32xf32> to vector<32x32xf32>
    %c1_28 = arith.constant 1 : index
    %c0_29 = arith.constant 0 : index
    %c0_30 = arith.constant 0 : index
    %31 = vector.load %arg2[%c1_28, %c0_29, %c0_30] : memref<4x32x32xf32, #tpu.memory_space<vmem>>, vector<1x32x32xf32>
    %32 = vector.shape_cast %31 : vector<1x32x32xf32> to vector<32x32xf32>
    %c2_31 = arith.constant 2 : index
    %c0_32 = arith.constant 0 : index
    %c0_33 = arith.constant 0 : index
    %33 = vector.load %arg2[%c2_31, %c0_32, %c0_33] : memref<4x32x32xf32, #tpu.memory_space<vmem>>, vector<1x32x32xf32>
    %34 = vector.shape_cast %33 : vector<1x32x32xf32> to vector<32x32xf32>
    %c3_34 = arith.constant 3 : index
    %c0_35 = arith.constant 0 : index
    %c0_36 = arith.constant 0 : index
    %35 = vector.load %arg2[%c3_34, %c0_35, %c0_36] : memref<4x32x32xf32, #tpu.memory_space<vmem>>, vector<1x32x32xf32>
    %36 = vector.shape_cast %35 : vector<1x32x32xf32> to vector<32x32xf32>
    %cst_37 = arith.constant 0.000000e+00 : f32
    %37 = vector.broadcast %cst_37 : f32 to vector<2x32xf32>
    %cst_38 = arith.constant 0.000000e+00 : f32
    %38 = vector.broadcast %cst_38 : f32 to vector<2x32xf32>
    %39 = vector.extract_strided_slice %7 {offsets = [0, 0], sizes = [2, 32], strides = [1, 1]} : vector<16x32xf32> to vector<2x32xf32>
    %cst_39 = arith.constant dense<0.000000e+00> : vector<2x32xf32>
    %40 = tpu.matmul %37, %30, %cst_39 {dimension_numbers = #tpu.dot_dimension_numbers<[1], [0], [0], [1], [0, 0, 1, 1], [], []>} : vector<2x32xf32>, vector<32x32xf32>, vector<2x32xf32> -> vector<2x32xf32>
    %41 = arith.addf %39, %40 : vector<2x32xf32>
    %42 = vector.extract_strided_slice %14 {offsets = [0, 0], sizes = [2, 32], strides = [1, 1]} : vector<16x32xf32> to vector<2x32xf32>
    %cst_40 = arith.constant dense<0.000000e+00> : vector<2x32xf32>
    %43 = tpu.matmul %37, %32, %cst_40 {dimension_numbers = #tpu.dot_dimension_numbers<[1], [0], [0], [1], [0, 0, 1, 1], [], []>} : vector<2x32xf32>, vector<32x32xf32>, vector<2x32xf32> -> vector<2x32xf32>
    %44 = arith.addf %42, %43 : vector<2x32xf32>
    %45 = vector.extract_strided_slice %21 {offsets = [0, 0], sizes = [2, 32], strides = [1, 1]} : vector<16x32xf32> to vector<2x32xf32>
    %cst_41 = arith.constant dense<0.000000e+00> : vector<2x32xf32>
    %46 = tpu.matmul %37, %34, %cst_41 {dimension_numbers = #tpu.dot_dimension_numbers<[1], [0], [0], [1], [0, 0, 1, 1], [], []>} : vector<2x32xf32>, vector<32x32xf32>, vector<2x32xf32> -> vector<2x32xf32>
    %47 = arith.addf %45, %46 : vector<2x32xf32>
    %48 = vector.extract_strided_slice %28 {offsets = [0, 0], sizes = [2, 32], strides = [1, 1]} : vector<16x32xf32> to vector<2x32xf32>
    %cst_42 = arith.constant dense<0.000000e+00> : vector<2x32xf32>
    %49 = tpu.matmul %37, %36, %cst_42 {dimension_numbers = #tpu.dot_dimension_numbers<[1], [0], [0], [1], [0, 0, 1, 1], [], []>} : vector<2x32xf32>, vector<32x32xf32>, vector<2x32xf32> -> vector<2x32xf32>
    %50 = arith.addf %48, %49 : vector<2x32xf32>
    %51 = arith.negf %41 : vector<2x32xf32>
    %52 = math.exp %51 : vector<2x32xf32>
    %cst_43 = arith.constant 1.000000e+00 : f32
    %53 = vector.broadcast %cst_43 : f32 to vector<2x32xf32>
    %54 = arith.addf %53, %52 : vector<2x32xf32>
    %55 = arith.divf %53, %54 : vector<2x32xf32>
    %56 = arith.negf %44 : vector<2x32xf32>
    %57 = math.exp %56 : vector<2x32xf32>
    %cst_44 = arith.constant 1.000000e+00 : f32
    %58 = vector.broadcast %cst_44 : f32 to vector<2x32xf32>
    %59 = arith.addf %58, %57 : vector<2x32xf32>
    %60 = arith.divf %58, %59 : vector<2x32xf32>
    %61 = math.tanh %47 : vector<2x32xf32>
    %62 = arith.negf %50 : vector<2x32xf32>
    %63 = math.exp %62 : vector<2x32xf32>
    %cst_45 = arith.constant 1.000000e+00 : f32
    %64 = vector.broadcast %cst_45 : f32 to vector<2x32xf32>
    %65 = arith.addf %64, %63 : vector<2x32xf32>
    %66 = arith.divf %64, %65 : vector<2x32xf32>
    %67 = arith.mulf %60, %38 : vector<2x32xf32>
    %68 = arith.mulf %55, %61 : vector<2x32xf32>
    %69 = arith.addf %67, %68 : vector<2x32xf32>
    %70 = math.tanh %69 : vector<2x32xf32>
    %71 = arith.mulf %66, %70 : vector<2x32xf32>
    %c0_46 = arith.constant 0 : index
    %c0_47 = arith.constant 0 : index
    %72 = vector.load %arg10[%c0_46, %c0_47] : memref<16x32xf32, #tpu.memory_space<vmem>>, vector<2x32xf32>
    tpu.vector_store %arg10[%c0_46, %c0_47], %71 {strides = array<i32>} : memref<16x32xf32, #tpu.memory_space<vmem>>, vector<2x32xf32>,
    %73 = vector.extract_strided_slice %7 {offsets = [2, 0], sizes = [2, 32], strides = [1, 1]} : vector<16x32xf32> to vector<2x32xf32>
    %cst_48 = arith.constant dense<0.000000e+00> : vector<2x32xf32>
    %74 = tpu.matmul %71, %30, %cst_48 {dimension_numbers = #tpu.dot_dimension_numbers<[1], [0], [0], [1], [0, 0, 1, 1], [], []>} : vector<2x32xf32>, vector<32x32xf32>, vector<2x32xf32> -> vector<2x32xf32>
    %75 = arith.addf %73, %74 : vector<2x32xf32>
    %76 = vector.extract_strided_slice %14 {offsets = [2, 0], sizes = [2, 32], strides = [1, 1]} : vector<16x32xf32> to vector<2x32xf32>
    %cst_49 = arith.constant dense<0.000000e+00> : vector<2x32xf32>
    %77 = tpu.matmul %71, %32, %cst_49 {dimension_numbers = #tpu.dot_dimension_numbers<[1], [0], [0], [1], [0, 0, 1, 1], [], []>} : vector<2x32xf32>, vector<32x32xf32>, vector<2x32xf32> -> vector<2x32xf32>
    %78 = arith.addf %76, %77 : vector<2x32xf32>
    %79 = vector.extract_strided_slice %21 {offsets = [2, 0], sizes = [2, 32], strides = [1, 1]} : vector<16x32xf32> to vector<2x32xf32>
    %cst_50 = arith.constant dense<0.000000e+00> : vector<2x32xf32>
    %80 = tpu.matmul %71, %34, %cst_50 {dimension_numbers = #tpu.dot_dimension_numbers<[1], [0], [0], [1], [0, 0, 1, 1], [], []>} : vector<2x32xf32>, vector<32x32xf32>, vector<2x32xf32> -> vector<2x32xf32>
    %81 = arith.addf %79, %80 : vector<2x32xf32>
    %82 = vector.extract_strided_slice %28 {offsets = [2, 0], sizes = [2, 32], strides = [1, 1]} : vector<16x32xf32> to vector<2x32xf32>
    %cst_51 = arith.constant dense<0.000000e+00> : vector<2x32xf32>
    %83 = tpu.matmul %71, %36, %cst_51 {dimension_numbers = #tpu.dot_dimension_numbers<[1], [0], [0], [1], [0, 0, 1, 1], [], []>} : vector<2x32xf32>, vector<32x32xf32>, vector<2x32xf32> -> vector<2x32xf32>
    %84 = arith.addf %82, %83 : vector<2x32xf32>
    %85 = arith.negf %75 : vector<2x32xf32>
    %86 = math.exp %85 : vector<2x32xf32>
    %cst_52 = arith.constant 1.000000e+00 : f32
    %87 = vector.broadcast %cst_52 : f32 to vector<2x32xf32>
    %88 = arith.addf %87, %86 : vector<2x32xf32>
    %89 = arith.divf %87, %88 : vector<2x32xf32>
    %90 = arith.negf %78 : vector<2x32xf32>
    %91 = math.exp %90 : vector<2x32xf32>
    %cst_53 = arith.constant 1.000000e+00 : f32
    %92 = vector.broadcast %cst_53 : f32 to vector<2x32xf32>
    %93 = arith.addf %92, %91 : vector<2x32xf32>
    %94 = arith.divf %92, %93 : vector<2x32xf32>
    %95 = math.tanh %81 : vector<2x32xf32>
    %96 = arith.negf %84 : vector<2x32xf32>
    %97 = math.exp %96 : vector<2x32xf32>
    %cst_54 = arith.constant 1.000000e+00 : f32
    %98 = vector.broadcast %cst_54 : f32 to vector<2x32xf32>
    %99 = arith.addf %98, %97 : vector<2x32xf32>
    %100 = arith.divf %98, %99 : vector<2x32xf32>
    %101 = arith.mulf %94, %69 : vector<2x32xf32>
    %102 = arith.mulf %89, %95 : vector<2x32xf32>
    %103 = arith.addf %101, %102 : vector<2x32xf32>
    %104 = math.tanh %103 : vector<2x32xf32>
    %105 = arith.mulf %100, %104 : vector<2x32xf32>
    %c2_55 = arith.constant 2 : index
    %c0_56 = arith.constant 0 : index
    %106 = vector.load %arg10[%c2_55, %c0_56] : memref<16x32xf32, #tpu.memory_space<vmem>>, vector<2x32xf32>
    tpu.vector_store %arg10[%c2_55, %c0_56], %105 {strides = array<i32>} : memref<16x32xf32, #tpu.memory_space<vmem>>, vector<2x32xf32>,
    %107 = vector.extract_strided_slice %7 {offsets = [4, 0], sizes = [2, 32], strides = [1, 1]} : vector<16x32xf32> to vector<2x32xf32>
    %cst_57 = arith.constant dense<0.000000e+00> : vector<2x32xf32>
    %108 = tpu.matmul %105, %30, %cst_57 {dimension_numbers = #tpu.dot_dimension_numbers<[1], [0], [0], [1], [0, 0, 1, 1], [], []>} : vector<2x32xf32>, vector<32x32xf32>, vector<2x32xf32> -> vector<2x32xf32>
    %109 = arith.addf %107, %108 : vector<2x32xf32>
    %110 = vector.extract_strided_slice %14 {offsets = [4, 0], sizes = [2, 32], strides = [1, 1]} : vector<16x32xf32> to vector<2x32xf32>
    %cst_58 = arith.constant dense<0.000000e+00> : vector<2x32xf32>
    %111 = tpu.matmul %105, %32, %cst_58 {dimension_numbers = #tpu.dot_dimension_numbers<[1], [0], [0], [1], [0, 0, 1, 1], [], []>} : vector<2x32xf32>, vector<32x32xf32>, vector<2x32xf32> -> vector<2x32xf32>
    %112 = arith.addf %110, %111 : vector<2x32xf32>
    %113 = vector.extract_strided_slice %21 {offsets = [4, 0], sizes = [2, 32], strides = [1, 1]} : vector<16x32xf32> to vector<2x32xf32>
    %cst_59 = arith.constant dense<0.000000e+00> : vector<2x32xf32>
    %114 = tpu.matmul %105, %34, %cst_59 {dimension_numbers = #tpu.dot_dimension_numbers<[1], [0], [0], [1], [0, 0, 1, 1], [], []>} : vector<2x32xf32>, vector<32x32xf32>, vector<2x32xf32> -> vector<2x32xf32>
    %115 = arith.addf %113, %114 : vector<2x32xf32>
    %116 = vector.extract_strided_slice %28 {offsets = [4, 0], sizes = [2, 32], strides = [1, 1]} : vector<16x32xf32> to vector<2x32xf32>
    %cst_60 = arith.constant dense<0.000000e+00> : vector<2x32xf32>
    %117 = tpu.matmul %105, %36, %cst_60 {dimension_numbers = #tpu.dot_dimension_numbers<[1], [0], [0], [1], [0, 0, 1, 1], [], []>} : vector<2x32xf32>, vector<32x32xf32>, vector<2x32xf32> -> vector<2x32xf32>
    %118 = arith.addf %116, %117 : vector<2x32xf32>
    %119 = arith.negf %109 : vector<2x32xf32>
    %120 = math.exp %119 : vector<2x32xf32>
    %cst_61 = arith.constant 1.000000e+00 : f32
    %121 = vector.broadcast %cst_61 : f32 to vector<2x32xf32>
    %122 = arith.addf %121, %120 : vector<2x32xf32>
    %123 = arith.divf %121, %122 : vector<2x32xf32>
    %124 = arith.negf %112 : vector<2x32xf32>
    %125 = math.exp %124 : vector<2x32xf32>
    %cst_62 = arith.constant 1.000000e+00 : f32
    %126 = vector.broadcast %cst_62 : f32 to vector<2x32xf32>
    %127 = arith.addf %126, %125 : vector<2x32xf32>
    %128 = arith.divf %126, %127 : vector<2x32xf32>
    %129 = math.tanh %115 : vector<2x32xf32>
    %130 = arith.negf %118 : vector<2x32xf32>
    %131 = math.exp %130 : vector<2x32xf32>
    %cst_63 = arith.constant 1.000000e+00 : f32
    %132 = vector.broadcast %cst_63 : f32 to vector<2x32xf32>
    %133 = arith.addf %132, %131 : vector<2x32xf32>
    %134 = arith.divf %132, %133 : vector<2x32xf32>
    %135 = arith.mulf %128, %103 : vector<2x32xf32>
    %136 = arith.mulf %123, %129 : vector<2x32xf32>
    %137 = arith.addf %135, %136 : vector<2x32xf32>
    %138 = math.tanh %137 : vector<2x32xf32>
    %139 = arith.mulf %134, %138 : vector<2x32xf32>
    %c4 = arith.constant 4 : index
    %c0_64 = arith.constant 0 : index
    %140 = vector.load %arg10[%c4, %c0_64] : memref<16x32xf32, #tpu.memory_space<vmem>>, vector<2x32xf32>
    tpu.vector_store %arg10[%c4, %c0_64], %139 {strides = array<i32>} : memref<16x32xf32, #tpu.memory_space<vmem>>, vector<2x32xf32>,
    %141 = vector.extract_strided_slice %7 {offsets = [6, 0], sizes = [2, 32], strides = [1, 1]} : vector<16x32xf32> to vector<2x32xf32>
    %cst_65 = arith.constant dense<0.000000e+00> : vector<2x32xf32>
    %142 = tpu.matmul %139, %30, %cst_65 {dimension_numbers = #tpu.dot_dimension_numbers<[1], [0], [0], [1], [0, 0, 1, 1], [], []>} : vector<2x32xf32>, vector<32x32xf32>, vector<2x32xf32> -> vector<2x32xf32>
    %143 = arith.addf %141, %142 : vector<2x32xf32>
    %144 = vector.extract_strided_slice %14 {offsets = [6, 0], sizes = [2, 32], strides = [1, 1]} : vector<16x32xf32> to vector<2x32xf32>
    %cst_66 = arith.constant dense<0.000000e+00> : vector<2x32xf32>
    %145 = tpu.matmul %139, %32, %cst_66 {dimension_numbers = #tpu.dot_dimension_numbers<[1], [0], [0], [1], [0, 0, 1, 1], [], []>} : vector<2x32xf32>, vector<32x32xf32>, vector<2x32xf32> -> vector<2x32xf32>
    %146 = arith.addf %144, %145 : vector<2x32xf32>
    %147 = vector.extract_strided_slice %21 {offsets = [6, 0], sizes = [2, 32], strides = [1, 1]} : vector<16x32xf32> to vector<2x32xf32>
    %cst_67 = arith.constant dense<0.000000e+00> : vector<2x32xf32>
    %148 = tpu.matmul %139, %34, %cst_67 {dimension_numbers = #tpu.dot_dimension_numbers<[1], [0], [0], [1], [0, 0, 1, 1], [], []>} : vector<2x32xf32>, vector<32x32xf32>, vector<2x32xf32> -> vector<2x32xf32>
    %149 = arith.addf %147, %148 : vector<2x32xf32>
    %150 = vector.extract_strided_slice %28 {offsets = [6, 0], sizes = [2, 32], strides = [1, 1]} : vector<16x32xf32> to vector<2x32xf32>
    %cst_68 = arith.constant dense<0.000000e+00> : vector<2x32xf32>
    %151 = tpu.matmul %139, %36, %cst_68 {dimension_numbers = #tpu.dot_dimension_numbers<[1], [0], [0], [1], [0, 0, 1, 1], [], []>} : vector<2x32xf32>, vector<32x32xf32>, vector<2x32xf32> -> vector<2x32xf32>
    %152 = arith.addf %150, %151 : vector<2x32xf32>
    %153 = arith.negf %143 : vector<2x32xf32>
    %154 = math.exp %153 : vector<2x32xf32>
    %cst_69 = arith.constant 1.000000e+00 : f32
    %155 = vector.broadcast %cst_69 : f32 to vector<2x32xf32>
    %156 = arith.addf %155, %154 : vector<2x32xf32>
    %157 = arith.divf %155, %156 : vector<2x32xf32>
    %158 = arith.negf %146 : vector<2x32xf32>
    %159 = math.exp %158 : vector<2x32xf32>
    %cst_70 = arith.constant 1.000000e+00 : f32
    %160 = vector.broadcast %cst_70 : f32 to vector<2x32xf32>
    %161 = arith.addf %160, %159 : vector<2x32xf32>
    %162 = arith.divf %160, %161 : vector<2x32xf32>
    %163 = math.tanh %149 : vector<2x32xf32>
    %164 = arith.negf %152 : vector<2x32xf32>
    %165 = math.exp %164 : vector<2x32xf32>
    %cst_71 = arith.constant 1.000000e+00 : f32
    %166 = vector.broadcast %cst_71 : f32 to vector<2x32xf32>
    %167 = arith.addf %166, %165 : vector<2x32xf32>
    %168 = arith.divf %166, %167 : vector<2x32xf32>
    %169 = arith.mulf %162, %137 : vector<2x32xf32>
    %170 = arith.mulf %157, %163 : vector<2x32xf32>
    %171 = arith.addf %169, %170 : vector<2x32xf32>
    %172 = math.tanh %171 : vector<2x32xf32>
    %173 = arith.mulf %168, %172 : vector<2x32xf32>
    %c6 = arith.constant 6 : index
    %c0_72 = arith.constant 0 : index
    %174 = vector.load %arg10[%c6, %c0_72] : memref<16x32xf32, #tpu.memory_space<vmem>>, vector<2x32xf32>
    tpu.vector_store %arg10[%c6, %c0_72], %173 {strides = array<i32>} : memref<16x32xf32, #tpu.memory_space<vmem>>, vector<2x32xf32>,
    %175 = vector.extract_strided_slice %7 {offsets = [8, 0], sizes = [2, 32], strides = [1, 1]} : vector<16x32xf32> to vector<2x32xf32>
    %cst_73 = arith.constant dense<0.000000e+00> : vector<2x32xf32>
    %176 = tpu.matmul %173, %30, %cst_73 {dimension_numbers = #tpu.dot_dimension_numbers<[1], [0], [0], [1], [0, 0, 1, 1], [], []>} : vector<2x32xf32>, vector<32x32xf32>, vector<2x32xf32> -> vector<2x32xf32>
    %177 = arith.addf %175, %176 : vector<2x32xf32>
    %178 = vector.extract_strided_slice %14 {offsets = [8, 0], sizes = [2, 32], strides = [1, 1]} : vector<16x32xf32> to vector<2x32xf32>
    %cst_74 = arith.constant dense<0.000000e+00> : vector<2x32xf32>
    %179 = tpu.matmul %173, %32, %cst_74 {dimension_numbers = #tpu.dot_dimension_numbers<[1], [0], [0], [1], [0, 0, 1, 1], [], []>} : vector<2x32xf32>, vector<32x32xf32>, vector<2x32xf32> -> vector<2x32xf32>
    %180 = arith.addf %178, %179 : vector<2x32xf32>
    %181 = vector.extract_strided_slice %21 {offsets = [8, 0], sizes = [2, 32], strides = [1, 1]} : vector<16x32xf32> to vector<2x32xf32>
    %cst_75 = arith.constant dense<0.000000e+00> : vector<2x32xf32>
    %182 = tpu.matmul %173, %34, %cst_75 {dimension_numbers = #tpu.dot_dimension_numbers<[1], [0], [0], [1], [0, 0, 1, 1], [], []>} : vector<2x32xf32>, vector<32x32xf32>, vector<2x32xf32> -> vector<2x32xf32>
    %183 = arith.addf %181, %182 : vector<2x32xf32>
    %184 = vector.extract_strided_slice %28 {offsets = [8, 0], sizes = [2, 32], strides = [1, 1]} : vector<16x32xf32> to vector<2x32xf32>
    %cst_76 = arith.constant dense<0.000000e+00> : vector<2x32xf32>
    %185 = tpu.matmul %173, %36, %cst_76 {dimension_numbers = #tpu.dot_dimension_numbers<[1], [0], [0], [1], [0, 0, 1, 1], [], []>} : vector<2x32xf32>, vector<32x32xf32>, vector<2x32xf32> -> vector<2x32xf32>
    %186 = arith.addf %184, %185 : vector<2x32xf32>
    %187 = arith.negf %177 : vector<2x32xf32>
    %188 = math.exp %187 : vector<2x32xf32>
    %cst_77 = arith.constant 1.000000e+00 : f32
    %189 = vector.broadcast %cst_77 : f32 to vector<2x32xf32>
    %190 = arith.addf %189, %188 : vector<2x32xf32>
    %191 = arith.divf %189, %190 : vector<2x32xf32>
    %192 = arith.negf %180 : vector<2x32xf32>
    %193 = math.exp %192 : vector<2x32xf32>
    %cst_78 = arith.constant 1.000000e+00 : f32
    %194 = vector.broadcast %cst_78 : f32 to vector<2x32xf32>
    %195 = arith.addf %194, %193 : vector<2x32xf32>
    %196 = arith.divf %194, %195 : vector<2x32xf32>
    %197 = math.tanh %183 : vector<2x32xf32>
    %198 = arith.negf %186 : vector<2x32xf32>
    %199 = math.exp %198 : vector<2x32xf32>
    %cst_79 = arith.constant 1.000000e+00 : f32
    %200 = vector.broadcast %cst_79 : f32 to vector<2x32xf32>
    %201 = arith.addf %200, %199 : vector<2x32xf32>
    %202 = arith.divf %200, %201 : vector<2x32xf32>
    %203 = arith.mulf %196, %171 : vector<2x32xf32>
    %204 = arith.mulf %191, %197 : vector<2x32xf32>
    %205 = arith.addf %203, %204 : vector<2x32xf32>
    %206 = math.tanh %205 : vector<2x32xf32>
    %207 = arith.mulf %202, %206 : vector<2x32xf32>
    %c8 = arith.constant 8 : index
    %c0_80 = arith.constant 0 : index
    %208 = vector.load %arg10[%c8, %c0_80] : memref<16x32xf32, #tpu.memory_space<vmem>>, vector<2x32xf32>
    tpu.vector_store %arg10[%c8, %c0_80], %207 {strides = array<i32>} : memref<16x32xf32, #tpu.memory_space<vmem>>, vector<2x32xf32>,
    %209 = vector.extract_strided_slice %7 {offsets = [10, 0], sizes = [2, 32], strides = [1, 1]} : vector<16x32xf32> to vector<2x32xf32>
    %cst_81 = arith.constant dense<0.000000e+00> : vector<2x32xf32>
    %210 = tpu.matmul %207, %30, %cst_81 {dimension_numbers = #tpu.dot_dimension_numbers<[1], [0], [0], [1], [0, 0, 1, 1], [], []>} : vector<2x32xf32>, vector<32x32xf32>, vector<2x32xf32> -> vector<2x32xf32>
    %211 = arith.addf %209, %210 : vector<2x32xf32>
    %212 = vector.extract_strided_slice %14 {offsets = [10, 0], sizes = [2, 32], strides = [1, 1]} : vector<16x32xf32> to vector<2x32xf32>
    %cst_82 = arith.constant dense<0.000000e+00> : vector<2x32xf32>
    %213 = tpu.matmul %207, %32, %cst_82 {dimension_numbers = #tpu.dot_dimension_numbers<[1], [0], [0], [1], [0, 0, 1, 1], [], []>} : vector<2x32xf32>, vector<32x32xf32>, vector<2x32xf32> -> vector<2x32xf32>
    %214 = arith.addf %212, %213 : vector<2x32xf32>
    %215 = vector.extract_strided_slice %21 {offsets = [10, 0], sizes = [2, 32], strides = [1, 1]} : vector<16x32xf32> to vector<2x32xf32>
    %cst_83 = arith.constant dense<0.000000e+00> : vector<2x32xf32>
    %216 = tpu.matmul %207, %34, %cst_83 {dimension_numbers = #tpu.dot_dimension_numbers<[1], [0], [0], [1], [0, 0, 1, 1], [], []>} : vector<2x32xf32>, vector<32x32xf32>, vector<2x32xf32> -> vector<2x32xf32>
    %217 = arith.addf %215, %216 : vector<2x32xf32>
    %218 = vector.extract_strided_slice %28 {offsets = [10, 0], sizes = [2, 32], strides = [1, 1]} : vector<16x32xf32> to vector<2x32xf32>
    %cst_84 = arith.constant dense<0.000000e+00> : vector<2x32xf32>
    %219 = tpu.matmul %207, %36, %cst_84 {dimension_numbers = #tpu.dot_dimension_numbers<[1], [0], [0], [1], [0, 0, 1, 1], [], []>} : vector<2x32xf32>, vector<32x32xf32>, vector<2x32xf32> -> vector<2x32xf32>
    %220 = arith.addf %218, %219 : vector<2x32xf32>
    %221 = arith.negf %211 : vector<2x32xf32>
    %222 = math.exp %221 : vector<2x32xf32>
    %cst_85 = arith.constant 1.000000e+00 : f32
    %223 = vector.broadcast %cst_85 : f32 to vector<2x32xf32>
    %224 = arith.addf %223, %222 : vector<2x32xf32>
    %225 = arith.divf %223, %224 : vector<2x32xf32>
    %226 = arith.negf %214 : vector<2x32xf32>
    %227 = math.exp %226 : vector<2x32xf32>
    %cst_86 = arith.constant 1.000000e+00 : f32
    %228 = vector.broadcast %cst_86 : f32 to vector<2x32xf32>
    %229 = arith.addf %228, %227 : vector<2x32xf32>
    %230 = arith.divf %228, %229 : vector<2x32xf32>
    %231 = math.tanh %217 : vector<2x32xf32>
    %232 = arith.negf %220 : vector<2x32xf32>
    %233 = math.exp %232 : vector<2x32xf32>
    %cst_87 = arith.constant 1.000000e+00 : f32
    %234 = vector.broadcast %cst_87 : f32 to vector<2x32xf32>
    %235 = arith.addf %234, %233 : vector<2x32xf32>
    %236 = arith.divf %234, %235 : vector<2x32xf32>
    %237 = arith.mulf %230, %205 : vector<2x32xf32>
    %238 = arith.mulf %225, %231 : vector<2x32xf32>
    %239 = arith.addf %237, %238 : vector<2x32xf32>
    %240 = math.tanh %239 : vector<2x32xf32>
    %241 = arith.mulf %236, %240 : vector<2x32xf32>
    %c10 = arith.constant 10 : index
    %c0_88 = arith.constant 0 : index
    %242 = vector.load %arg10[%c10, %c0_88] : memref<16x32xf32, #tpu.memory_space<vmem>>, vector<2x32xf32>
    tpu.vector_store %arg10[%c10, %c0_88], %241 {strides = array<i32>} : memref<16x32xf32, #tpu.memory_space<vmem>>, vector<2x32xf32>,
    %243 = vector.extract_strided_slice %7 {offsets = [12, 0], sizes = [2, 32], strides = [1, 1]} : vector<16x32xf32> to vector<2x32xf32>
    %cst_89 = arith.constant dense<0.000000e+00> : vector<2x32xf32>
    %244 = tpu.matmul %241, %30, %cst_89 {dimension_numbers = #tpu.dot_dimension_numbers<[1], [0], [0], [1], [0, 0, 1, 1], [], []>} : vector<2x32xf32>, vector<32x32xf32>, vector<2x32xf32> -> vector<2x32xf32>
    %245 = arith.addf %243, %244 : vector<2x32xf32>
    %246 = vector.extract_strided_slice %14 {offsets = [12, 0], sizes = [2, 32], strides = [1, 1]} : vector<16x32xf32> to vector<2x32xf32>
    %cst_90 = arith.constant dense<0.000000e+00> : vector<2x32xf32>
    %247 = tpu.matmul %241, %32, %cst_90 {dimension_numbers = #tpu.dot_dimension_numbers<[1], [0], [0], [1], [0, 0, 1, 1], [], []>} : vector<2x32xf32>, vector<32x32xf32>, vector<2x32xf32> -> vector<2x32xf32>
    %248 = arith.addf %246, %247 : vector<2x32xf32>
    %249 = vector.extract_strided_slice %21 {offsets = [12, 0], sizes = [2, 32], strides = [1, 1]} : vector<16x32xf32> to vector<2x32xf32>
    %cst_91 = arith.constant dense<0.000000e+00> : vector<2x32xf32>
    %250 = tpu.matmul %241, %34, %cst_91 {dimension_numbers = #tpu.dot_dimension_numbers<[1], [0], [0], [1], [0, 0, 1, 1], [], []>} : vector<2x32xf32>, vector<32x32xf32>, vector<2x32xf32> -> vector<2x32xf32>
    %251 = arith.addf %249, %250 : vector<2x32xf32>
    %252 = vector.extract_strided_slice %28 {offsets = [12, 0], sizes = [2, 32], strides = [1, 1]} : vector<16x32xf32> to vector<2x32xf32>
    %cst_92 = arith.constant dense<0.000000e+00> : vector<2x32xf32>
    %253 = tpu.matmul %241, %36, %cst_92 {dimension_numbers = #tpu.dot_dimension_numbers<[1], [0], [0], [1], [0, 0, 1, 1], [], []>} : vector<2x32xf32>, vector<32x32xf32>, vector<2x32xf32> -> vector<2x32xf32>
    %254 = arith.addf %252, %253 : vector<2x32xf32>
    %255 = arith.negf %245 : vector<2x32xf32>
    %256 = math.exp %255 : vector<2x32xf32>
    %cst_93 = arith.constant 1.000000e+00 : f32
    %257 = vector.broadcast %cst_93 : f32 to vector<2x32xf32>
    %258 = arith.addf %257, %256 : vector<2x32xf32>
    %259 = arith.divf %257, %258 : vector<2x32xf32>
    %260 = arith.negf %248 : vector<2x32xf32>
    %261 = math.exp %260 : vector<2x32xf32>
    %cst_94 = arith.constant 1.000000e+00 : f32
    %262 = vector.broadcast %cst_94 : f32 to vector<2x32xf32>
    %263 = arith.addf %262, %261 : vector<2x32xf32>
    %264 = arith.divf %262, %263 : vector<2x32xf32>
    %265 = math.tanh %251 : vector<2x32xf32>
    %266 = arith.negf %254 : vector<2x32xf32>
    %267 = math.exp %266 : vector<2x32xf32>
    %cst_95 = arith.constant 1.000000e+00 : f32
    %268 = vector.broadcast %cst_95 : f32 to vector<2x32xf32>
    %269 = arith.addf %268, %267 : vector<2x32xf32>
    %270 = arith.divf %268, %269 : vector<2x32xf32>
    %271 = arith.mulf %264, %239 : vector<2x32xf32>
    %272 = arith.mulf %259, %265 : vector<2x32xf32>
    %273 = arith.addf %271, %272 : vector<2x32xf32>
    %274 = math.tanh %273 : vector<2x32xf32>
    %275 = arith.mulf %270, %274 : vector<2x32xf32>
    %c12 = arith.constant 12 : index
    %c0_96 = arith.constant 0 : index
    %276 = vector.load %arg10[%c12, %c0_96] : memref<16x32xf32, #tpu.memory_space<vmem>>, vector<2x32xf32>
    tpu.vector_store %arg10[%c12, %c0_96], %275 {strides = array<i32>} : memref<16x32xf32, #tpu.memory_space<vmem>>, vector<2x32xf32>,
    %277 = vector.extract_strided_slice %7 {offsets = [14, 0], sizes = [2, 32], strides = [1, 1]} : vector<16x32xf32> to vector<2x32xf32>
    %cst_97 = arith.constant dense<0.000000e+00> : vector<2x32xf32>
    %278 = tpu.matmul %275, %30, %cst_97 {dimension_numbers = #tpu.dot_dimension_numbers<[1], [0], [0], [1], [0, 0, 1, 1], [], []>} : vector<2x32xf32>, vector<32x32xf32>, vector<2x32xf32> -> vector<2x32xf32>
    %279 = arith.addf %277, %278 : vector<2x32xf32>
    %280 = vector.extract_strided_slice %14 {offsets = [14, 0], sizes = [2, 32], strides = [1, 1]} : vector<16x32xf32> to vector<2x32xf32>
    %cst_98 = arith.constant dense<0.000000e+00> : vector<2x32xf32>
    %281 = tpu.matmul %275, %32, %cst_98 {dimension_numbers = #tpu.dot_dimension_numbers<[1], [0], [0], [1], [0, 0, 1, 1], [], []>} : vector<2x32xf32>, vector<32x32xf32>, vector<2x32xf32> -> vector<2x32xf32>
    %282 = arith.addf %280, %281 : vector<2x32xf32>
    %283 = vector.extract_strided_slice %21 {offsets = [14, 0], sizes = [2, 32], strides = [1, 1]} : vector<16x32xf32> to vector<2x32xf32>
    %cst_99 = arith.constant dense<0.000000e+00> : vector<2x32xf32>
    %284 = tpu.matmul %275, %34, %cst_99 {dimension_numbers = #tpu.dot_dimension_numbers<[1], [0], [0], [1], [0, 0, 1, 1], [], []>} : vector<2x32xf32>, vector<32x32xf32>, vector<2x32xf32> -> vector<2x32xf32>
    %285 = arith.addf %283, %284 : vector<2x32xf32>
    %286 = vector.extract_strided_slice %28 {offsets = [14, 0], sizes = [2, 32], strides = [1, 1]} : vector<16x32xf32> to vector<2x32xf32>
    %cst_100 = arith.constant dense<0.000000e+00> : vector<2x32xf32>
    %287 = tpu.matmul %275, %36, %cst_100 {dimension_numbers = #tpu.dot_dimension_numbers<[1], [0], [0], [1], [0, 0, 1, 1], [], []>} : vector<2x32xf32>, vector<32x32xf32>, vector<2x32xf32> -> vector<2x32xf32>
    %288 = arith.addf %286, %287 : vector<2x32xf32>
    %289 = arith.negf %279 : vector<2x32xf32>
    %290 = math.exp %289 : vector<2x32xf32>
    %cst_101 = arith.constant 1.000000e+00 : f32
    %291 = vector.broadcast %cst_101 : f32 to vector<2x32xf32>
    %292 = arith.addf %291, %290 : vector<2x32xf32>
    %293 = arith.divf %291, %292 : vector<2x32xf32>
    %294 = arith.negf %282 : vector<2x32xf32>
    %295 = math.exp %294 : vector<2x32xf32>
    %cst_102 = arith.constant 1.000000e+00 : f32
    %296 = vector.broadcast %cst_102 : f32 to vector<2x32xf32>
    %297 = arith.addf %296, %295 : vector<2x32xf32>
    %298 = arith.divf %296, %297 : vector<2x32xf32>
    %299 = math.tanh %285 : vector<2x32xf32>
    %300 = arith.negf %288 : vector<2x32xf32>
    %301 = math.exp %300 : vector<2x32xf32>
    %cst_103 = arith.constant 1.000000e+00 : f32
    %302 = vector.broadcast %cst_103 : f32 to vector<2x32xf32>
    %303 = arith.addf %302, %301 : vector<2x32xf32>
    %304 = arith.divf %302, %303 : vector<2x32xf32>
    %305 = arith.mulf %298, %273 : vector<2x32xf32>
    %306 = arith.mulf %293, %299 : vector<2x32xf32>
    %307 = arith.addf %305, %306 : vector<2x32xf32>
    %308 = math.tanh %307 : vector<2x32xf32>
    %309 = arith.mulf %304, %308 : vector<2x32xf32>
    %c14 = arith.constant 14 : index
    %c0_104 = arith.constant 0 : index
    %310 = vector.load %arg10[%c14, %c0_104] : memref<16x32xf32, #tpu.memory_space<vmem>>, vector<2x32xf32>
    tpu.vector_store %arg10[%c14, %c0_104], %309 {strides = array<i32>} : memref<16x32xf32, #tpu.memory_space<vmem>>, vector<2x32xf32>,
    %c0_105 = arith.constant 0 : index
    %c0_106 = arith.constant 0 : index
    %311 = vector.load %arg10[%c0_105, %c0_106] : memref<16x32xf32, #tpu.memory_space<vmem>>, vector<16x32xf32>
    %c0_107 = arith.constant 0 : index
    %c0_108 = arith.constant 0 : index
    %c0_109 = arith.constant 0 : index
    %312 = vector.load %arg4[%c0_107, %c0_108, %c0_109] : memref<4x32x32xf32, #tpu.memory_space<vmem>>, vector<1x32x32xf32>
    %313 = vector.shape_cast %312 : vector<1x32x32xf32> to vector<32x32xf32>
    %cst_110 = arith.constant dense<0.000000e+00> : vector<16x32xf32>
    %314 = tpu.matmul %311, %313, %cst_110 {dimension_numbers = #tpu.dot_dimension_numbers<[1], [0], [0], [1], [0, 0, 1, 1], [], []>} : vector<16x32xf32>, vector<32x32xf32>, vector<16x32xf32> -> vector<16x32xf32>
    %c0_111 = arith.constant 0 : index
    %c0_112 = arith.constant 0 : index
    %c0_113 = arith.constant 0 : index
    %315 = vector.load %arg6[%c0_111, %c0_112, %c0_113] : memref<4x1x32xf32, #tpu.memory_space<vmem>>, vector<1x1x32xf32>
    %316 = vector.shape_cast %315 : vector<1x1x32xf32> to vector<1x32xf32>
    %317 = vector.broadcast %316 : vector<1x32xf32> to vector<16x32xf32>
    %318 = arith.addf %314, %317 : vector<16x32xf32>
    %c1_114 = arith.constant 1 : index
    %c0_115 = arith.constant 0 : index
    %c0_116 = arith.constant 0 : index
    %319 = vector.load %arg4[%c1_114, %c0_115, %c0_116] : memref<4x32x32xf32, #tpu.memory_space<vmem>>, vector<1x32x32xf32>
    %320 = vector.shape_cast %319 : vector<1x32x32xf32> to vector<32x32xf32>
    %cst_117 = arith.constant dense<0.000000e+00> : vector<16x32xf32>
    %321 = tpu.matmul %311, %320, %cst_117 {dimension_numbers = #tpu.dot_dimension_numbers<[1], [0], [0], [1], [0, 0, 1, 1], [], []>} : vector<16x32xf32>, vector<32x32xf32>, vector<16x32xf32> -> vector<16x32xf32>
    %c1_118 = arith.constant 1 : index
    %c0_119 = arith.constant 0 : index
    %c0_120 = arith.constant 0 : index
    %322 = vector.load %arg6[%c1_118, %c0_119, %c0_120] : memref<4x1x32xf32, #tpu.memory_space<vmem>>, vector<1x1x32xf32>
    %323 = vector.shape_cast %322 : vector<1x1x32xf32> to vector<1x32xf32>
    %324 = vector.broadcast %323 : vector<1x32xf32> to vector<16x32xf32>
    %325 = arith.addf %321, %324 : vector<16x32xf32>
    %c2_121 = arith.constant 2 : index
    %c0_122 = arith.constant 0 : index
    %c0_123 = arith.constant 0 : index
    %326 = vector.load %arg4[%c2_121, %c0_122, %c0_123] : memref<4x32x32xf32, #tpu.memory_space<vmem>>, vector<1x32x32xf32>
    %327 = vector.shape_cast %326 : vector<1x32x32xf32> to vector<32x32xf32>
    %cst_124 = arith.constant dense<0.000000e+00> : vector<16x32xf32>
    %328 = tpu.matmul %311, %327, %cst_124 {dimension_numbers = #tpu.dot_dimension_numbers<[1], [0], [0], [1], [0, 0, 1, 1], [], []>} : vector<16x32xf32>, vector<32x32xf32>, vector<16x32xf32> -> vector<16x32xf32>
    %c2_125 = arith.constant 2 : index
    %c0_126 = arith.constant 0 : index
    %c0_127 = arith.constant 0 : index
    %329 = vector.load %arg6[%c2_125, %c0_126, %c0_127] : memref<4x1x32xf32, #tpu.memory_space<vmem>>, vector<1x1x32xf32>
    %330 = vector.shape_cast %329 : vector<1x1x32xf32> to vector<1x32xf32>
    %331 = vector.broadcast %330 : vector<1x32xf32> to vector<16x32xf32>
    %332 = arith.addf %328, %331 : vector<16x32xf32>
    %c3_128 = arith.constant 3 : index
    %c0_129 = arith.constant 0 : index
    %c0_130 = arith.constant 0 : index
    %333 = vector.load %arg4[%c3_128, %c0_129, %c0_130] : memref<4x32x32xf32, #tpu.memory_space<vmem>>, vector<1x32x32xf32>
    %334 = vector.shape_cast %333 : vector<1x32x32xf32> to vector<32x32xf32>
    %cst_131 = arith.constant dense<0.000000e+00> : vector<16x32xf32>
    %335 = tpu.matmul %311, %334, %cst_131 {dimension_numbers = #tpu.dot_dimension_numbers<[1], [0], [0], [1], [0, 0, 1, 1], [], []>} : vector<16x32xf32>, vector<32x32xf32>, vector<16x32xf32> -> vector<16x32xf32>
    %c3_132 = arith.constant 3 : index
    %c0_133 = arith.constant 0 : index
    %c0_134 = arith.constant 0 : index
    %336 = vector.load %arg6[%c3_132, %c0_133, %c0_134] : memref<4x1x32xf32, #tpu.memory_space<vmem>>, vector<1x1x32xf32>
    %337 = vector.shape_cast %336 : vector<1x1x32xf32> to vector<1x32xf32>
    %338 = vector.broadcast %337 : vector<1x32xf32> to vector<16x32xf32>
    %339 = arith.addf %335, %338 : vector<16x32xf32>
    %c0_135 = arith.constant 0 : index
    %c0_136 = arith.constant 0 : index
    %c0_137 = arith.constant 0 : index
    %340 = vector.load %arg5[%c0_135, %c0_136, %c0_137] : memref<4x32x32xf32, #tpu.memory_space<vmem>>, vector<1x32x32xf32>
    %341 = vector.shape_cast %340 : vector<1x32x32xf32> to vector<32x32xf32>
    %c1_138 = arith.constant 1 : index
    %c0_139 = arith.constant 0 : index
    %c0_140 = arith.constant 0 : index
    %342 = vector.load %arg5[%c1_138, %c0_139, %c0_140] : memref<4x32x32xf32, #tpu.memory_space<vmem>>, vector<1x32x32xf32>
    %343 = vector.shape_cast %342 : vector<1x32x32xf32> to vector<32x32xf32>
    %c2_141 = arith.constant 2 : index
    %c0_142 = arith.constant 0 : index
    %c0_143 = arith.constant 0 : index
    %344 = vector.load %arg5[%c2_141, %c0_142, %c0_143] : memref<4x32x32xf32, #tpu.memory_space<vmem>>, vector<1x32x32xf32>
    %345 = vector.shape_cast %344 : vector<1x32x32xf32> to vector<32x32xf32>
    %c3_144 = arith.constant 3 : index
    %c0_145 = arith.constant 0 : index
    %c0_146 = arith.constant 0 : index
    %346 = vector.load %arg5[%c3_144, %c0_145, %c0_146] : memref<4x32x32xf32, #tpu.memory_space<vmem>>, vector<1x32x32xf32>
    %347 = vector.shape_cast %346 : vector<1x32x32xf32> to vector<32x32xf32>
    %cst_147 = arith.constant 0.000000e+00 : f32
    %348 = vector.broadcast %cst_147 : f32 to vector<2x32xf32>
    %cst_148 = arith.constant 0.000000e+00 : f32
    %349 = vector.broadcast %cst_148 : f32 to vector<2x32xf32>
    %350 = vector.extract_strided_slice %318 {offsets = [0, 0], sizes = [2, 32], strides = [1, 1]} : vector<16x32xf32> to vector<2x32xf32>
    %cst_149 = arith.constant dense<0.000000e+00> : vector<2x32xf32>
    %351 = tpu.matmul %348, %341, %cst_149 {dimension_numbers = #tpu.dot_dimension_numbers<[1], [0], [0], [1], [0, 0, 1, 1], [], []>} : vector<2x32xf32>, vector<32x32xf32>, vector<2x32xf32> -> vector<2x32xf32>
    %352 = arith.addf %350, %351 : vector<2x32xf32>
    %353 = vector.extract_strided_slice %325 {offsets = [0, 0], sizes = [2, 32], strides = [1, 1]} : vector<16x32xf32> to vector<2x32xf32>
    %cst_150 = arith.constant dense<0.000000e+00> : vector<2x32xf32>
    %354 = tpu.matmul %348, %343, %cst_150 {dimension_numbers = #tpu.dot_dimension_numbers<[1], [0], [0], [1], [0, 0, 1, 1], [], []>} : vector<2x32xf32>, vector<32x32xf32>, vector<2x32xf32> -> vector<2x32xf32>
    %355 = arith.addf %353, %354 : vector<2x32xf32>
    %356 = vector.extract_strided_slice %332 {offsets = [0, 0], sizes = [2, 32], strides = [1, 1]} : vector<16x32xf32> to vector<2x32xf32>
    %cst_151 = arith.constant dense<0.000000e+00> : vector<2x32xf32>
    %357 = tpu.matmul %348, %345, %cst_151 {dimension_numbers = #tpu.dot_dimension_numbers<[1], [0], [0], [1], [0, 0, 1, 1], [], []>} : vector<2x32xf32>, vector<32x32xf32>, vector<2x32xf32> -> vector<2x32xf32>
    %358 = arith.addf %356, %357 : vector<2x32xf32>
    %359 = vector.extract_strided_slice %339 {offsets = [0, 0], sizes = [2, 32], strides = [1, 1]} : vector<16x32xf32> to vector<2x32xf32>
    %cst_152 = arith.constant dense<0.000000e+00> : vector<2x32xf32>
    %360 = tpu.matmul %348, %347, %cst_152 {dimension_numbers = #tpu.dot_dimension_numbers<[1], [0], [0], [1], [0, 0, 1, 1], [], []>} : vector<2x32xf32>, vector<32x32xf32>, vector<2x32xf32> -> vector<2x32xf32>
    %361 = arith.addf %359, %360 : vector<2x32xf32>
    %362 = arith.negf %352 : vector<2x32xf32>
    %363 = math.exp %362 : vector<2x32xf32>
    %cst_153 = arith.constant 1.000000e+00 : f32
    %364 = vector.broadcast %cst_153 : f32 to vector<2x32xf32>
    %365 = arith.addf %364, %363 : vector<2x32xf32>
    %366 = arith.divf %364, %365 : vector<2x32xf32>
    %367 = arith.negf %355 : vector<2x32xf32>
    %368 = math.exp %367 : vector<2x32xf32>
    %cst_154 = arith.constant 1.000000e+00 : f32
    %369 = vector.broadcast %cst_154 : f32 to vector<2x32xf32>
    %370 = arith.addf %369, %368 : vector<2x32xf32>
    %371 = arith.divf %369, %370 : vector<2x32xf32>
    %372 = math.tanh %358 : vector<2x32xf32>
    %373 = arith.negf %361 : vector<2x32xf32>
    %374 = math.exp %373 : vector<2x32xf32>
    %cst_155 = arith.constant 1.000000e+00 : f32
    %375 = vector.broadcast %cst_155 : f32 to vector<2x32xf32>
    %376 = arith.addf %375, %374 : vector<2x32xf32>
    %377 = arith.divf %375, %376 : vector<2x32xf32>
    %378 = arith.mulf %371, %349 : vector<2x32xf32>
    %379 = arith.mulf %366, %372 : vector<2x32xf32>
    %380 = arith.addf %378, %379 : vector<2x32xf32>
    %381 = math.tanh %380 : vector<2x32xf32>
    %382 = arith.mulf %377, %381 : vector<2x32xf32>
    %383 = vector.extract_strided_slice %318 {offsets = [2, 0], sizes = [2, 32], strides = [1, 1]} : vector<16x32xf32> to vector<2x32xf32>
    %cst_156 = arith.constant dense<0.000000e+00> : vector<2x32xf32>
    %384 = tpu.matmul %382, %341, %cst_156 {dimension_numbers = #tpu.dot_dimension_numbers<[1], [0], [0], [1], [0, 0, 1, 1], [], []>} : vector<2x32xf32>, vector<32x32xf32>, vector<2x32xf32> -> vector<2x32xf32>
    %385 = arith.addf %383, %384 : vector<2x32xf32>
    %386 = vector.extract_strided_slice %325 {offsets = [2, 0], sizes = [2, 32], strides = [1, 1]} : vector<16x32xf32> to vector<2x32xf32>
    %cst_157 = arith.constant dense<0.000000e+00> : vector<2x32xf32>
    %387 = tpu.matmul %382, %343, %cst_157 {dimension_numbers = #tpu.dot_dimension_numbers<[1], [0], [0], [1], [0, 0, 1, 1], [], []>} : vector<2x32xf32>, vector<32x32xf32>, vector<2x32xf32> -> vector<2x32xf32>
    %388 = arith.addf %386, %387 : vector<2x32xf32>
    %389 = vector.extract_strided_slice %332 {offsets = [2, 0], sizes = [2, 32], strides = [1, 1]} : vector<16x32xf32> to vector<2x32xf32>
    %cst_158 = arith.constant dense<0.000000e+00> : vector<2x32xf32>
    %390 = tpu.matmul %382, %345, %cst_158 {dimension_numbers = #tpu.dot_dimension_numbers<[1], [0], [0], [1], [0, 0, 1, 1], [], []>} : vector<2x32xf32>, vector<32x32xf32>, vector<2x32xf32> -> vector<2x32xf32>
    %391 = arith.addf %389, %390 : vector<2x32xf32>
    %392 = vector.extract_strided_slice %339 {offsets = [2, 0], sizes = [2, 32], strides = [1, 1]} : vector<16x32xf32> to vector<2x32xf32>
    %cst_159 = arith.constant dense<0.000000e+00> : vector<2x32xf32>
    %393 = tpu.matmul %382, %347, %cst_159 {dimension_numbers = #tpu.dot_dimension_numbers<[1], [0], [0], [1], [0, 0, 1, 1], [], []>} : vector<2x32xf32>, vector<32x32xf32>, vector<2x32xf32> -> vector<2x32xf32>
    %394 = arith.addf %392, %393 : vector<2x32xf32>
    %395 = arith.negf %385 : vector<2x32xf32>
    %396 = math.exp %395 : vector<2x32xf32>
    %cst_160 = arith.constant 1.000000e+00 : f32
    %397 = vector.broadcast %cst_160 : f32 to vector<2x32xf32>
    %398 = arith.addf %397, %396 : vector<2x32xf32>
    %399 = arith.divf %397, %398 : vector<2x32xf32>
    %400 = arith.negf %388 : vector<2x32xf32>
    %401 = math.exp %400 : vector<2x32xf32>
    %cst_161 = arith.constant 1.000000e+00 : f32
    %402 = vector.broadcast %cst_161 : f32 to vector<2x32xf32>
    %403 = arith.addf %402, %401 : vector<2x32xf32>
    %404 = arith.divf %402, %403 : vector<2x32xf32>
    %405 = math.tanh %391 : vector<2x32xf32>
    %406 = arith.negf %394 : vector<2x32xf32>
    %407 = math.exp %406 : vector<2x32xf32>
    %cst_162 = arith.constant 1.000000e+00 : f32
    %408 = vector.broadcast %cst_162 : f32 to vector<2x32xf32>
    %409 = arith.addf %408, %407 : vector<2x32xf32>
    %410 = arith.divf %408, %409 : vector<2x32xf32>
    %411 = arith.mulf %404, %380 : vector<2x32xf32>
    %412 = arith.mulf %399, %405 : vector<2x32xf32>
    %413 = arith.addf %411, %412 : vector<2x32xf32>
    %414 = math.tanh %413 : vector<2x32xf32>
    %415 = arith.mulf %410, %414 : vector<2x32xf32>
    %416 = vector.extract_strided_slice %318 {offsets = [4, 0], sizes = [2, 32], strides = [1, 1]} : vector<16x32xf32> to vector<2x32xf32>
    %cst_163 = arith.constant dense<0.000000e+00> : vector<2x32xf32>
    %417 = tpu.matmul %415, %341, %cst_163 {dimension_numbers = #tpu.dot_dimension_numbers<[1], [0], [0], [1], [0, 0, 1, 1], [], []>} : vector<2x32xf32>, vector<32x32xf32>, vector<2x32xf32> -> vector<2x32xf32>
    %418 = arith.addf %416, %417 : vector<2x32xf32>
    %419 = vector.extract_strided_slice %325 {offsets = [4, 0], sizes = [2, 32], strides = [1, 1]} : vector<16x32xf32> to vector<2x32xf32>
    %cst_164 = arith.constant dense<0.000000e+00> : vector<2x32xf32>
    %420 = tpu.matmul %415, %343, %cst_164 {dimension_numbers = #tpu.dot_dimension_numbers<[1], [0], [0], [1], [0, 0, 1, 1], [], []>} : vector<2x32xf32>, vector<32x32xf32>, vector<2x32xf32> -> vector<2x32xf32>
    %421 = arith.addf %419, %420 : vector<2x32xf32>
    %422 = vector.extract_strided_slice %332 {offsets = [4, 0], sizes = [2, 32], strides = [1, 1]} : vector<16x32xf32> to vector<2x32xf32>
    %cst_165 = arith.constant dense<0.000000e+00> : vector<2x32xf32>
    %423 = tpu.matmul %415, %345, %cst_165 {dimension_numbers = #tpu.dot_dimension_numbers<[1], [0], [0], [1], [0, 0, 1, 1], [], []>} : vector<2x32xf32>, vector<32x32xf32>, vector<2x32xf32> -> vector<2x32xf32>
    %424 = arith.addf %422, %423 : vector<2x32xf32>
    %425 = vector.extract_strided_slice %339 {offsets = [4, 0], sizes = [2, 32], strides = [1, 1]} : vector<16x32xf32> to vector<2x32xf32>
    %cst_166 = arith.constant dense<0.000000e+00> : vector<2x32xf32>
    %426 = tpu.matmul %415, %347, %cst_166 {dimension_numbers = #tpu.dot_dimension_numbers<[1], [0], [0], [1], [0, 0, 1, 1], [], []>} : vector<2x32xf32>, vector<32x32xf32>, vector<2x32xf32> -> vector<2x32xf32>
    %427 = arith.addf %425, %426 : vector<2x32xf32>
    %428 = arith.negf %418 : vector<2x32xf32>
    %429 = math.exp %428 : vector<2x32xf32>
    %cst_167 = arith.constant 1.000000e+00 : f32
    %430 = vector.broadcast %cst_167 : f32 to vector<2x32xf32>
    %431 = arith.addf %430, %429 : vector<2x32xf32>
    %432 = arith.divf %430, %431 : vector<2x32xf32>
    %433 = arith.negf %421 : vector<2x32xf32>
    %434 = math.exp %433 : vector<2x32xf32>
    %cst_168 = arith.constant 1.000000e+00 : f32
    %435 = vector.broadcast %cst_168 : f32 to vector<2x32xf32>
    %436 = arith.addf %435, %434 : vector<2x32xf32>
    %437 = arith.divf %435, %436 : vector<2x32xf32>
    %438 = math.tanh %424 : vector<2x32xf32>
    %439 = arith.negf %427 : vector<2x32xf32>
    %440 = math.exp %439 : vector<2x32xf32>
    %cst_169 = arith.constant 1.000000e+00 : f32
    %441 = vector.broadcast %cst_169 : f32 to vector<2x32xf32>
    %442 = arith.addf %441, %440 : vector<2x32xf32>
    %443 = arith.divf %441, %442 : vector<2x32xf32>
    %444 = arith.mulf %437, %413 : vector<2x32xf32>
    %445 = arith.mulf %432, %438 : vector<2x32xf32>
    %446 = arith.addf %444, %445 : vector<2x32xf32>
    %447 = math.tanh %446 : vector<2x32xf32>
    %448 = arith.mulf %443, %447 : vector<2x32xf32>
    %449 = vector.extract_strided_slice %318 {offsets = [6, 0], sizes = [2, 32], strides = [1, 1]} : vector<16x32xf32> to vector<2x32xf32>
    %cst_170 = arith.constant dense<0.000000e+00> : vector<2x32xf32>
    %450 = tpu.matmul %448, %341, %cst_170 {dimension_numbers = #tpu.dot_dimension_numbers<[1], [0], [0], [1], [0, 0, 1, 1], [], []>} : vector<2x32xf32>, vector<32x32xf32>, vector<2x32xf32> -> vector<2x32xf32>
    %451 = arith.addf %449, %450 : vector<2x32xf32>
    %452 = vector.extract_strided_slice %325 {offsets = [6, 0], sizes = [2, 32], strides = [1, 1]} : vector<16x32xf32> to vector<2x32xf32>
    %cst_171 = arith.constant dense<0.000000e+00> : vector<2x32xf32>
    %453 = tpu.matmul %448, %343, %cst_171 {dimension_numbers = #tpu.dot_dimension_numbers<[1], [0], [0], [1], [0, 0, 1, 1], [], []>} : vector<2x32xf32>, vector<32x32xf32>, vector<2x32xf32> -> vector<2x32xf32>
    %454 = arith.addf %452, %453 : vector<2x32xf32>
    %455 = vector.extract_strided_slice %332 {offsets = [6, 0], sizes = [2, 32], strides = [1, 1]} : vector<16x32xf32> to vector<2x32xf32>
    %cst_172 = arith.constant dense<0.000000e+00> : vector<2x32xf32>
    %456 = tpu.matmul %448, %345, %cst_172 {dimension_numbers = #tpu.dot_dimension_numbers<[1], [0], [0], [1], [0, 0, 1, 1], [], []>} : vector<2x32xf32>, vector<32x32xf32>, vector<2x32xf32> -> vector<2x32xf32>
    %457 = arith.addf %455, %456 : vector<2x32xf32>
    %458 = vector.extract_strided_slice %339 {offsets = [6, 0], sizes = [2, 32], strides = [1, 1]} : vector<16x32xf32> to vector<2x32xf32>
    %cst_173 = arith.constant dense<0.000000e+00> : vector<2x32xf32>
    %459 = tpu.matmul %448, %347, %cst_173 {dimension_numbers = #tpu.dot_dimension_numbers<[1], [0], [0], [1], [0, 0, 1, 1], [], []>} : vector<2x32xf32>, vector<32x32xf32>, vector<2x32xf32> -> vector<2x32xf32>
    %460 = arith.addf %458, %459 : vector<2x32xf32>
    %461 = arith.negf %451 : vector<2x32xf32>
    %462 = math.exp %461 : vector<2x32xf32>
    %cst_174 = arith.constant 1.000000e+00 : f32
    %463 = vector.broadcast %cst_174 : f32 to vector<2x32xf32>
    %464 = arith.addf %463, %462 : vector<2x32xf32>
    %465 = arith.divf %463, %464 : vector<2x32xf32>
    %466 = arith.negf %454 : vector<2x32xf32>
    %467 = math.exp %466 : vector<2x32xf32>
    %cst_175 = arith.constant 1.000000e+00 : f32
    %468 = vector.broadcast %cst_175 : f32 to vector<2x32xf32>
    %469 = arith.addf %468, %467 : vector<2x32xf32>
    %470 = arith.divf %468, %469 : vector<2x32xf32>
    %471 = math.tanh %457 : vector<2x32xf32>
    %472 = arith.negf %460 : vector<2x32xf32>
    %473 = math.exp %472 : vector<2x32xf32>
    %cst_176 = arith.constant 1.000000e+00 : f32
    %474 = vector.broadcast %cst_176 : f32 to vector<2x32xf32>
    %475 = arith.addf %474, %473 : vector<2x32xf32>
    %476 = arith.divf %474, %475 : vector<2x32xf32>
    %477 = arith.mulf %470, %446 : vector<2x32xf32>
    %478 = arith.mulf %465, %471 : vector<2x32xf32>
    %479 = arith.addf %477, %478 : vector<2x32xf32>
    %480 = math.tanh %479 : vector<2x32xf32>
    %481 = arith.mulf %476, %480 : vector<2x32xf32>
    %482 = vector.extract_strided_slice %318 {offsets = [8, 0], sizes = [2, 32], strides = [1, 1]} : vector<16x32xf32> to vector<2x32xf32>
    %cst_177 = arith.constant dense<0.000000e+00> : vector<2x32xf32>
    %483 = tpu.matmul %481, %341, %cst_177 {dimension_numbers = #tpu.dot_dimension_numbers<[1], [0], [0], [1], [0, 0, 1, 1], [], []>} : vector<2x32xf32>, vector<32x32xf32>, vector<2x32xf32> -> vector<2x32xf32>
    %484 = arith.addf %482, %483 : vector<2x32xf32>
    %485 = vector.extract_strided_slice %325 {offsets = [8, 0], sizes = [2, 32], strides = [1, 1]} : vector<16x32xf32> to vector<2x32xf32>
    %cst_178 = arith.constant dense<0.000000e+00> : vector<2x32xf32>
    %486 = tpu.matmul %481, %343, %cst_178 {dimension_numbers = #tpu.dot_dimension_numbers<[1], [0], [0], [1], [0, 0, 1, 1], [], []>} : vector<2x32xf32>, vector<32x32xf32>, vector<2x32xf32> -> vector<2x32xf32>
    %487 = arith.addf %485, %486 : vector<2x32xf32>
    %488 = vector.extract_strided_slice %332 {offsets = [8, 0], sizes = [2, 32], strides = [1, 1]} : vector<16x32xf32> to vector<2x32xf32>
    %cst_179 = arith.constant dense<0.000000e+00> : vector<2x32xf32>
    %489 = tpu.matmul %481, %345, %cst_179 {dimension_numbers = #tpu.dot_dimension_numbers<[1], [0], [0], [1], [0, 0, 1, 1], [], []>} : vector<2x32xf32>, vector<32x32xf32>, vector<2x32xf32> -> vector<2x32xf32>
    %490 = arith.addf %488, %489 : vector<2x32xf32>
    %491 = vector.extract_strided_slice %339 {offsets = [8, 0], sizes = [2, 32], strides = [1, 1]} : vector<16x32xf32> to vector<2x32xf32>
    %cst_180 = arith.constant dense<0.000000e+00> : vector<2x32xf32>
    %492 = tpu.matmul %481, %347, %cst_180 {dimension_numbers = #tpu.dot_dimension_numbers<[1], [0], [0], [1], [0, 0, 1, 1], [], []>} : vector<2x32xf32>, vector<32x32xf32>, vector<2x32xf32> -> vector<2x32xf32>
    %493 = arith.addf %491, %492 : vector<2x32xf32>
    %494 = arith.negf %484 : vector<2x32xf32>
    %495 = math.exp %494 : vector<2x32xf32>
    %cst_181 = arith.constant 1.000000e+00 : f32
    %496 = vector.broadcast %cst_181 : f32 to vector<2x32xf32>
    %497 = arith.addf %496, %495 : vector<2x32xf32>
    %498 = arith.divf %496, %497 : vector<2x32xf32>
    %499 = arith.negf %487 : vector<2x32xf32>
    %500 = math.exp %499 : vector<2x32xf32>
    %cst_182 = arith.constant 1.000000e+00 : f32
    %501 = vector.broadcast %cst_182 : f32 to vector<2x32xf32>
    %502 = arith.addf %501, %500 : vector<2x32xf32>
    %503 = arith.divf %501, %502 : vector<2x32xf32>
    %504 = math.tanh %490 : vector<2x32xf32>
    %505 = arith.negf %493 : vector<2x32xf32>
    %506 = math.exp %505 : vector<2x32xf32>
    %cst_183 = arith.constant 1.000000e+00 : f32
    %507 = vector.broadcast %cst_183 : f32 to vector<2x32xf32>
    %508 = arith.addf %507, %506 : vector<2x32xf32>
    %509 = arith.divf %507, %508 : vector<2x32xf32>
    %510 = arith.mulf %503, %479 : vector<2x32xf32>
    %511 = arith.mulf %498, %504 : vector<2x32xf32>
    %512 = arith.addf %510, %511 : vector<2x32xf32>
    %513 = math.tanh %512 : vector<2x32xf32>
    %514 = arith.mulf %509, %513 : vector<2x32xf32>
    %515 = vector.extract_strided_slice %318 {offsets = [10, 0], sizes = [2, 32], strides = [1, 1]} : vector<16x32xf32> to vector<2x32xf32>
    %cst_184 = arith.constant dense<0.000000e+00> : vector<2x32xf32>
    %516 = tpu.matmul %514, %341, %cst_184 {dimension_numbers = #tpu.dot_dimension_numbers<[1], [0], [0], [1], [0, 0, 1, 1], [], []>} : vector<2x32xf32>, vector<32x32xf32>, vector<2x32xf32> -> vector<2x32xf32>
    %517 = arith.addf %515, %516 : vector<2x32xf32>
    %518 = vector.extract_strided_slice %325 {offsets = [10, 0], sizes = [2, 32], strides = [1, 1]} : vector<16x32xf32> to vector<2x32xf32>
    %cst_185 = arith.constant dense<0.000000e+00> : vector<2x32xf32>
    %519 = tpu.matmul %514, %343, %cst_185 {dimension_numbers = #tpu.dot_dimension_numbers<[1], [0], [0], [1], [0, 0, 1, 1], [], []>} : vector<2x32xf32>, vector<32x32xf32>, vector<2x32xf32> -> vector<2x32xf32>
    %520 = arith.addf %518, %519 : vector<2x32xf32>
    %521 = vector.extract_strided_slice %332 {offsets = [10, 0], sizes = [2, 32], strides = [1, 1]} : vector<16x32xf32> to vector<2x32xf32>
    %cst_186 = arith.constant dense<0.000000e+00> : vector<2x32xf32>
    %522 = tpu.matmul %514, %345, %cst_186 {dimension_numbers = #tpu.dot_dimension_numbers<[1], [0], [0], [1], [0, 0, 1, 1], [], []>} : vector<2x32xf32>, vector<32x32xf32>, vector<2x32xf32> -> vector<2x32xf32>
    %523 = arith.addf %521, %522 : vector<2x32xf32>
    %524 = vector.extract_strided_slice %339 {offsets = [10, 0], sizes = [2, 32], strides = [1, 1]} : vector<16x32xf32> to vector<2x32xf32>
    %cst_187 = arith.constant dense<0.000000e+00> : vector<2x32xf32>
    %525 = tpu.matmul %514, %347, %cst_187 {dimension_numbers = #tpu.dot_dimension_numbers<[1], [0], [0], [1], [0, 0, 1, 1], [], []>} : vector<2x32xf32>, vector<32x32xf32>, vector<2x32xf32> -> vector<2x32xf32>
    %526 = arith.addf %524, %525 : vector<2x32xf32>
    %527 = arith.negf %517 : vector<2x32xf32>
    %528 = math.exp %527 : vector<2x32xf32>
    %cst_188 = arith.constant 1.000000e+00 : f32
    %529 = vector.broadcast %cst_188 : f32 to vector<2x32xf32>
    %530 = arith.addf %529, %528 : vector<2x32xf32>
    %531 = arith.divf %529, %530 : vector<2x32xf32>
    %532 = arith.negf %520 : vector<2x32xf32>
    %533 = math.exp %532 : vector<2x32xf32>
    %cst_189 = arith.constant 1.000000e+00 : f32
    %534 = vector.broadcast %cst_189 : f32 to vector<2x32xf32>
    %535 = arith.addf %534, %533 : vector<2x32xf32>
    %536 = arith.divf %534, %535 : vector<2x32xf32>
    %537 = math.tanh %523 : vector<2x32xf32>
    %538 = arith.negf %526 : vector<2x32xf32>
    %539 = math.exp %538 : vector<2x32xf32>
    %cst_190 = arith.constant 1.000000e+00 : f32
    %540 = vector.broadcast %cst_190 : f32 to vector<2x32xf32>
    %541 = arith.addf %540, %539 : vector<2x32xf32>
    %542 = arith.divf %540, %541 : vector<2x32xf32>
    %543 = arith.mulf %536, %512 : vector<2x32xf32>
    %544 = arith.mulf %531, %537 : vector<2x32xf32>
    %545 = arith.addf %543, %544 : vector<2x32xf32>
    %546 = math.tanh %545 : vector<2x32xf32>
    %547 = arith.mulf %542, %546 : vector<2x32xf32>
    %548 = vector.extract_strided_slice %318 {offsets = [12, 0], sizes = [2, 32], strides = [1, 1]} : vector<16x32xf32> to vector<2x32xf32>
    %cst_191 = arith.constant dense<0.000000e+00> : vector<2x32xf32>
    %549 = tpu.matmul %547, %341, %cst_191 {dimension_numbers = #tpu.dot_dimension_numbers<[1], [0], [0], [1], [0, 0, 1, 1], [], []>} : vector<2x32xf32>, vector<32x32xf32>, vector<2x32xf32> -> vector<2x32xf32>
    %550 = arith.addf %548, %549 : vector<2x32xf32>
    %551 = vector.extract_strided_slice %325 {offsets = [12, 0], sizes = [2, 32], strides = [1, 1]} : vector<16x32xf32> to vector<2x32xf32>
    %cst_192 = arith.constant dense<0.000000e+00> : vector<2x32xf32>
    %552 = tpu.matmul %547, %343, %cst_192 {dimension_numbers = #tpu.dot_dimension_numbers<[1], [0], [0], [1], [0, 0, 1, 1], [], []>} : vector<2x32xf32>, vector<32x32xf32>, vector<2x32xf32> -> vector<2x32xf32>
    %553 = arith.addf %551, %552 : vector<2x32xf32>
    %554 = vector.extract_strided_slice %332 {offsets = [12, 0], sizes = [2, 32], strides = [1, 1]} : vector<16x32xf32> to vector<2x32xf32>
    %cst_193 = arith.constant dense<0.000000e+00> : vector<2x32xf32>
    %555 = tpu.matmul %547, %345, %cst_193 {dimension_numbers = #tpu.dot_dimension_numbers<[1], [0], [0], [1], [0, 0, 1, 1], [], []>} : vector<2x32xf32>, vector<32x32xf32>, vector<2x32xf32> -> vector<2x32xf32>
    %556 = arith.addf %554, %555 : vector<2x32xf32>
    %557 = vector.extract_strided_slice %339 {offsets = [12, 0], sizes = [2, 32], strides = [1, 1]} : vector<16x32xf32> to vector<2x32xf32>
    %cst_194 = arith.constant dense<0.000000e+00> : vector<2x32xf32>
    %558 = tpu.matmul %547, %347, %cst_194 {dimension_numbers = #tpu.dot_dimension_numbers<[1], [0], [0], [1], [0, 0, 1, 1], [], []>} : vector<2x32xf32>, vector<32x32xf32>, vector<2x32xf32> -> vector<2x32xf32>
    %559 = arith.addf %557, %558 : vector<2x32xf32>
    %560 = arith.negf %550 : vector<2x32xf32>
    %561 = math.exp %560 : vector<2x32xf32>
    %cst_195 = arith.constant 1.000000e+00 : f32
    %562 = vector.broadcast %cst_195 : f32 to vector<2x32xf32>
    %563 = arith.addf %562, %561 : vector<2x32xf32>
    %564 = arith.divf %562, %563 : vector<2x32xf32>
    %565 = arith.negf %553 : vector<2x32xf32>
    %566 = math.exp %565 : vector<2x32xf32>
    %cst_196 = arith.constant 1.000000e+00 : f32
    %567 = vector.broadcast %cst_196 : f32 to vector<2x32xf32>
    %568 = arith.addf %567, %566 : vector<2x32xf32>
    %569 = arith.divf %567, %568 : vector<2x32xf32>
    %570 = math.tanh %556 : vector<2x32xf32>
    %571 = arith.negf %559 : vector<2x32xf32>
    %572 = math.exp %571 : vector<2x32xf32>
    %cst_197 = arith.constant 1.000000e+00 : f32
    %573 = vector.broadcast %cst_197 : f32 to vector<2x32xf32>
    %574 = arith.addf %573, %572 : vector<2x32xf32>
    %575 = arith.divf %573, %574 : vector<2x32xf32>
    %576 = arith.mulf %569, %545 : vector<2x32xf32>
    %577 = arith.mulf %564, %570 : vector<2x32xf32>
    %578 = arith.addf %576, %577 : vector<2x32xf32>
    %579 = math.tanh %578 : vector<2x32xf32>
    %580 = arith.mulf %575, %579 : vector<2x32xf32>
    %581 = vector.extract_strided_slice %318 {offsets = [14, 0], sizes = [2, 32], strides = [1, 1]} : vector<16x32xf32> to vector<2x32xf32>
    %cst_198 = arith.constant dense<0.000000e+00> : vector<2x32xf32>
    %582 = tpu.matmul %580, %341, %cst_198 {dimension_numbers = #tpu.dot_dimension_numbers<[1], [0], [0], [1], [0, 0, 1, 1], [], []>} : vector<2x32xf32>, vector<32x32xf32>, vector<2x32xf32> -> vector<2x32xf32>
    %583 = arith.addf %581, %582 : vector<2x32xf32>
    %584 = vector.extract_strided_slice %325 {offsets = [14, 0], sizes = [2, 32], strides = [1, 1]} : vector<16x32xf32> to vector<2x32xf32>
    %cst_199 = arith.constant dense<0.000000e+00> : vector<2x32xf32>
    %585 = tpu.matmul %580, %343, %cst_199 {dimension_numbers = #tpu.dot_dimension_numbers<[1], [0], [0], [1], [0, 0, 1, 1], [], []>} : vector<2x32xf32>, vector<32x32xf32>, vector<2x32xf32> -> vector<2x32xf32>
    %586 = arith.addf %584, %585 : vector<2x32xf32>
    %587 = vector.extract_strided_slice %332 {offsets = [14, 0], sizes = [2, 32], strides = [1, 1]} : vector<16x32xf32> to vector<2x32xf32>
    %cst_200 = arith.constant dense<0.000000e+00> : vector<2x32xf32>
    %588 = tpu.matmul %580, %345, %cst_200 {dimension_numbers = #tpu.dot_dimension_numbers<[1], [0], [0], [1], [0, 0, 1, 1], [], []>} : vector<2x32xf32>, vector<32x32xf32>, vector<2x32xf32> -> vector<2x32xf32>
    %589 = arith.addf %587, %588 : vector<2x32xf32>
    %590 = vector.extract_strided_slice %339 {offsets = [14, 0], sizes = [2, 32], strides = [1, 1]} : vector<16x32xf32> to vector<2x32xf32>
    %cst_201 = arith.constant dense<0.000000e+00> : vector<2x32xf32>
    %591 = tpu.matmul %580, %347, %cst_201 {dimension_numbers = #tpu.dot_dimension_numbers<[1], [0], [0], [1], [0, 0, 1, 1], [], []>} : vector<2x32xf32>, vector<32x32xf32>, vector<2x32xf32> -> vector<2x32xf32>
    %592 = arith.addf %590, %591 : vector<2x32xf32>
    %593 = arith.negf %583 : vector<2x32xf32>
    %594 = math.exp %593 : vector<2x32xf32>
    %cst_202 = arith.constant 1.000000e+00 : f32
    %595 = vector.broadcast %cst_202 : f32 to vector<2x32xf32>
    %596 = arith.addf %595, %594 : vector<2x32xf32>
    %597 = arith.divf %595, %596 : vector<2x32xf32>
    %598 = arith.negf %586 : vector<2x32xf32>
    %599 = math.exp %598 : vector<2x32xf32>
    %cst_203 = arith.constant 1.000000e+00 : f32
    %600 = vector.broadcast %cst_203 : f32 to vector<2x32xf32>
    %601 = arith.addf %600, %599 : vector<2x32xf32>
    %602 = arith.divf %600, %601 : vector<2x32xf32>
    %603 = math.tanh %589 : vector<2x32xf32>
    %604 = arith.negf %592 : vector<2x32xf32>
    %605 = math.exp %604 : vector<2x32xf32>
    %cst_204 = arith.constant 1.000000e+00 : f32
    %606 = vector.broadcast %cst_204 : f32 to vector<2x32xf32>
    %607 = arith.addf %606, %605 : vector<2x32xf32>
    %608 = arith.divf %606, %607 : vector<2x32xf32>
    %609 = arith.mulf %602, %578 : vector<2x32xf32>
    %610 = arith.mulf %597, %603 : vector<2x32xf32>
    %611 = arith.addf %609, %610 : vector<2x32xf32>
    %612 = math.tanh %611 : vector<2x32xf32>
    %613 = arith.mulf %608, %612 : vector<2x32xf32>
    %c0_205 = arith.constant 0 : index
    %c0_206 = arith.constant 0 : index
    %614 = vector.load %arg7[%c0_205, %c0_206] : memref<32x1xf32, #tpu.memory_space<vmem>>, vector<32x1xf32>
    %cst_207 = arith.constant dense<0.000000e+00> : vector<2x1xf32>
    %615 = tpu.matmul %613, %614, %cst_207 {dimension_numbers = #tpu.dot_dimension_numbers<[1], [0], [0], [1], [0, 0, 1, 1], [], []>} : vector<2x32xf32>, vector<32x1xf32>, vector<2x1xf32> -> vector<2x1xf32>
    %c0_208 = arith.constant 0 : index
    %c0_209 = arith.constant 0 : index
    %616 = vector.load %arg8[%c0_208, %c0_209] : memref<1x1xf32, #tpu.memory_space<vmem>>, vector<1x1xf32>
    %617 = vector.broadcast %616 : vector<1x1xf32> to vector<2x1xf32>
    %618 = arith.addf %615, %617 : vector<2x1xf32>
    %619 = arith.negf %618 : vector<2x1xf32>
    %620 = math.exp %619 : vector<2x1xf32>
    %cst_210 = arith.constant 1.000000e+00 : f32
    %621 = vector.broadcast %cst_210 : f32 to vector<2x1xf32>
    %622 = arith.addf %621, %620 : vector<2x1xf32>
    %623 = arith.divf %621, %622 : vector<2x1xf32>
    %c0_211 = arith.constant 0 : index
    %c0_212 = arith.constant 0 : index
    %624 = vector.load %arg9[%c0_211, %c0_212] : memref<2x1xf32, #tpu.memory_space<vmem>>, vector<2x1xf32>
    tpu.vector_store %arg9[%c0_211, %c0_212], %623 {strides = array<i32>} : memref<2x1xf32, #tpu.memory_space<vmem>>, vector<2x1xf32>,
    return
  }
}

</mosaic_0001>

<llo_original>
// kernel: lstm_binary_classifier_forward.1
$region0: #{lstm_binary_classifier_forward.1}
  #allocation0 [shape = 'u32[]', space=smem, size = 0x4, offset = 0x4, fixed_abs, tag = 'smem constant byte address 0x4 - core index']
  #allocation1 [shape = 'u32[72,128]{1,0:T(1,128)}', space=vmem, size = 0x9000, scoped, tag = 'internal scratch']
  #allocation2 [shape = 'f32[16,32]{1,0:T(8,128)}', space=vmem, size = 0x2000, scoped, tag = 'scratch operand']
  #allocation3 [shape = 'f32[1,1]{1,0:T(1,128)S(1)}', space=vmem, size = 0x200, scoped, tag = 'scoped memory for lstm_binary_classifier_forward.1']
  %s0 = inlined_call_operand.vmem [shape: f32[16,16], index: 0, kind: input, shape index: {}]
  %s1 = inlined_call_operand.vmem [shape: f32[4,16,32], index: 1, kind: input, shape index: {}]
  %s2 = inlined_call_operand.hbm [shape: f32[4,32,32], index: 2, kind: input, shape index: {}]
  %s3 = inlined_call_operand.vmem [shape: f32[4,1,32], index: 3, kind: input, shape index: {}]
  %s4 = inlined_call_operand.hbm [shape: f32[4,32,32], index: 4, kind: input, shape index: {}]
  %s5 = inlined_call_operand.hbm [shape: f32[4,32,32], index: 5, kind: input, shape index: {}]
  %s6 = inlined_call_operand.vmem [shape: f32[4,1,32], index: 6, kind: input, shape index: {}]
  %s7 = inlined_call_operand.vmem [shape: f32[32,1], index: 7, kind: input, shape index: {}]
  %s8 = inlined_call_operand.<no memory space> [shape: f32[1,1], index: 8, kind: input, shape index: {}]
  %s9 = inlined_call_operand.vmem [shape: f32[2,1], index: 9, kind: output, shape index: {}]
  %s10 = sld [smem:[#allocation0]]
  $region58: #{lstm_binary_classifier_forward.1} parent=0
    _
  %s12 = ssub.s32 1, %s10
  %s13 = scalar_select 0, %s12, %s10
  %v14 = vstv %s8
  %15 = vst [vmem:[#allocation3] sm:$0x1] %v14
  $region1: #{lstm_binary_classifier_forward.1} parent=0
    #allocation4 [shape = 'u8[65536]{0}', space=vmem, size = 0x10000, scoped, tag = 'input window, operand 2, single buffered']
    #allocation5 [shape = 's32[1]{0}', space=sflag, size = 0x4, scoped, tag = 'scoped memory for lstm_binary_classifier_forward.1']
    #allocation6 [shape = 'u8[65536]{0}', space=vmem, size = 0x10000, scoped, tag = 'input window, operand 4, single buffered']
    #allocation7 [shape = 's32[1]{0}', space=sflag, size = 0x4, scoped, tag = 'scoped memory for lstm_binary_classifier_forward.1']
    #allocation8 [shape = 'u8[65536]{0}', space=vmem, size = 0x10000, scoped, tag = 'input window, operand 5, single buffered']
    %16 = vsyncpa [#allocation5], 0
    %17 = vsyncpa [#allocation7], 0
    // Predicated region
    $region2: #{lstm_binary_classifier_forward.1} parent=1 // pred_check
      _
    $region3: #{lstm_binary_classifier_forward.1} parent=1 // pred_check_branch
      %19 = sbr.rel (0) target = $region5
    $region4: #{lstm_binary_classifier_forward.1} parent=1 // pred_region
      _
    $region5: #{lstm_binary_classifier_forward.1} parent=1 // pred_fallthru
      _
    // Predicated region
    $region6: #{lstm_binary_classifier_forward.1} parent=1 // pred_check
      _
    $region7: #{lstm_binary_classifier_forward.1} parent=1 // pred_check_branch
      %21 = sbr.rel (0) target = $region9
    $region8: #{lstm_binary_classifier_forward.1} parent=1 // pred_region
      _
    $region9: #{lstm_binary_classifier_forward.1} parent=1 // pred_fallthru
      _
    // Predicated region
    $region10: #{lstm_binary_classifier_forward.1} parent=1 // pred_check
      _
    $region11: #{lstm_binary_classifier_forward.1} parent=1 // pred_check_branch
      %23 = sbr.rel (0) target = $region13
    $region12: #{lstm_binary_classifier_forward.1} parent=1 // pred_region
      %25 = vsyncadd [#allocation5], 0
      %s26 = sshll.u32 %s2, 4
      %s27 = int_to_ptr.hbm [resolvable:$true] %s26
      %s28 = sshll.u32 [#allocation4], 4
      %s29 = int_to_ptr.vmem [resolvable:$true] %s28
      %34 = dma.hbm_to_vmem [thread:$0]  %s27, 2048, %s29, [#allocation5], 128, 128, 8
    $region13: #{lstm_binary_classifier_forward.1} parent=1 // pred_fallthru
      _
    // Predicated region
    $region14: #{lstm_binary_classifier_forward.1} parent=1 // pred_check
      _
    $region15: #{lstm_binary_classifier_forward.1} parent=1 // pred_check_branch
      %36 = sbr.rel (0) target = $region17
    $region16: #{lstm_binary_classifier_forward.1} parent=1 // pred_region
      _
    $region17: #{lstm_binary_classifier_forward.1} parent=1 // pred_fallthru
      _
    // Predicated region
    $region18: #{lstm_binary_classifier_forward.1} parent=1 // pred_check
      _
    $region19: #{lstm_binary_classifier_forward.1} parent=1 // pred_check_branch
      %38 = sbr.rel (0) target = $region21
    $region20: #{lstm_binary_classifier_forward.1} parent=1 // pred_region
      %40 = vsyncadd [#allocation7], 0
      %s41 = sshll.u32 %s4, 4
      %s42 = int_to_ptr.hbm [resolvable:$true] %s41
      %s43 = sshll.u32 [#allocation6], 4
      %s44 = int_to_ptr.vmem [resolvable:$true] %s43
      %49 = dma.hbm_to_vmem [thread:$0]  %s42, 2048, %s44, [#allocation7], 128, 128, 8
    $region21: #{lstm_binary_classifier_forward.1} parent=1 // pred_fallthru
      _
    // Predicated region
    $region22: #{lstm_binary_classifier_forward.1} parent=1 // pred_check
      _
    $region23: #{lstm_binary_classifier_forward.1} parent=1 // pred_check_branch
      %51 = sbr.rel (0) target = $region25
    $region24: #{lstm_binary_classifier_forward.1} parent=1 // pred_region
      %53 = vsyncadd [#allocation7], 0
      %s54 = sshll.u32 %s5, 4
      %s55 = int_to_ptr.hbm [resolvable:$true] %s54
      %s56 = sshll.u32 [#allocation8], 4
      %s57 = int_to_ptr.vmem [resolvable:$true] %s56
      %62 = dma.hbm_to_vmem [thread:$0]  %s55, 2048, %s57, [#allocation7], 128, 128, 8
    $region25: #{lstm_binary_classifier_forward.1} parent=1 // pred_fallthru
      _
    // Predicated region
    $region26: #{lstm_binary_classifier_forward.1} parent=1 // pred_check
      _
    $region27: #{lstm_binary_classifier_forward.1} parent=1 // pred_check_branch
      %64 = sbr.rel (0) target = $region29
    $region28: #{lstm_binary_classifier_forward.1} parent=1 // pred_region
      _
    $region29: #{lstm_binary_classifier_forward.1} parent=1 // pred_fallthru
      _
    // Predicated region
    $region30: #{lstm_binary_classifier_forward.1} parent=1 // pred_check
      _
    $region31: #{lstm_binary_classifier_forward.1} parent=1 // pred_check_branch
      %66 = sbr.rel (0) target = $region33
    $region32: #{lstm_binary_classifier_forward.1} parent=1 // pred_region
      _
    $region33: #{lstm_binary_classifier_forward.1} parent=1 // pred_fallthru
      _
    // Predicated region
    $region34: #{lstm_binary_classifier_forward.1} parent=1 // pred_check
      _
    $region35: #{lstm_binary_classifier_forward.1} parent=1 // pred_check_branch
      %68 = sbr.rel (0) target = $region37
    $region36: #{lstm_binary_classifier_forward.1} parent=1 // pred_region
      _
    $region37: #{lstm_binary_classifier_forward.1} parent=1 // pred_fallthru
      _
    // Predicated region
    $region38: #{lstm_binary_classifier_forward.1} parent=1 // pred_check
      _
    $region39: #{lstm_binary_classifier_forward.1} parent=1 // pred_check_branch
      %70 = sbr.rel (0) target = $region41
    $region40: #{lstm_binary_classifier_forward.1} parent=1 // pred_region
      %72 = dma.done [#allocation5], 2048
    $region41: #{lstm_binary_classifier_forward.1} parent=1 // pred_fallthru
      _
    // Predicated region
    $region42: #{lstm_binary_classifier_forward.1} parent=1 // pred_check
      _
    $region43: #{lstm_binary_classifier_forward.1} parent=1 // pred_check_branch
      %74 = sbr.rel (0) target = $region45
    $region44: #{lstm_binary_classifier_forward.1} parent=1 // pred_region
      %76 = dma.done [#allocation7], 2048
    $region45: #{lstm_binary_classifier_forward.1} parent=1 // pred_fallthru
      _
    // Predicated region
    $region46: #{lstm_binary_classifier_forward.1} parent=1 // pred_check
      _
    $region47: #{lstm_binary_classifier_forward.1} parent=1 // pred_check_branch
      %78 = sbr.rel (0) target = $region49
    $region48: #{lstm_binary_classifier_forward.1} parent=1 // pred_region
      %80 = dma.done [#allocation7], 2048
    $region49: #{lstm_binary_classifier_forward.1} parent=1 // pred_fallthru
      _
    %v81 = vld [vmem:[%s0] sm:$0xff]
    %v82 = vld [vmem:[%s0 + $0x8] sm:$0xff]
    %v83 = vld [vmem:[%s1] sm:$0xff]
    %v84 = vld [vmem:[%s1 + $0x8] sm:$0xff]
    %v85 = vld [vmem:[%s3] sm:$0x1]
    %v87 = vperm.slane %v85, 0
    %vm89 = vcmask 130048
    %v91 = vsel %vm89, %v81, 0
    %v94 = vsel %vm89, %v82, 0
    %96 = vmatpush.msra.mxu0 0.0
    %97 = vmatpush.msra.mxu0 0.0
    %98 = vmatpush.msra.mxu0 0.0
    %99 = vmatpush.msra.mxu0 0.0
    %100 = vmatpush.msra.mxu0 0.0
    %101 = vmatpush.msra.mxu0 0.0
    %102 = vmatpush.msra.mxu0 0.0
    %103 = vmatpush.msra.mxu0 0.0
    %104 = vmatpush.msra.mxu0 0.0
    %105 = vmatpush.msra.mxu0 0.0
    %106 = vmatpush.msra.mxu0 0.0
    %107 = vmatpush.msra.mxu0 0.0
    %108 = vmatpush.msra.mxu0 0.0
    %109 = vmatpush.msra.mxu0 0.0
    %110 = vmatpush.msra.mxu0 %v84
    %111 = vmatpush.msra.mxu0 %v83
    %112 = vmatmul.f32.gmra.mxu0 %v91
    %v113 = vpop.f32.mrf.mxu0
    %v114 = vadd.f32 %v87, %v113
    %115 = vmatmul.f32.gmra.mxu0 %v94
    %v116 = vpop.f32.mrf.mxu0
    %v117 = vadd.f32 %v87, %v116
    %118 = vdwg.mxu0
    %s119 = scalar_lea.vmem %s1, 16
    %v120 = vld [vmem:[%s119] sm:$0xff]
    %v121 = vld [vmem:[%s119 + $0x8] sm:$0xff]
    %s122 = scalar_lea.vmem %s3, 1
    %v123 = vld [vmem:[%s122] sm:$0x1]
    %v125 = vperm.slane %v123, 0
    %127 = vmatpush.msra.mxu0 0.0
    %128 = vmatpush.msra.mxu0 0.0
    %129 = vmatpush.msra.mxu0 0.0
    %130 = vmatpush.msra.mxu0 0.0
    %131 = vmatpush.msra.mxu0 0.0
    %132 = vmatpush.msra.mxu0 0.0
    %133 = vmatpush.msra.mxu0 0.0
    %134 = vmatpush.msra.mxu0 0.0
    %135 = vmatpush.msra.mxu0 0.0
    %136 = vmatpush.msra.mxu0 0.0
    %137 = vmatpush.msra.mxu0 0.0
    %138 = vmatpush.msra.mxu0 0.0
    %139 = vmatpush.msra.mxu0 0.0
    %140 = vmatpush.msra.mxu0 0.0
    %141 = vmatpush.msra.mxu0 %v121
    %142 = vmatpush.msra.mxu0 %v120
    %143 = vmatmul.f32.gmra.mxu0 %v91
    %v144 = vpop.f32.mrf.mxu0
    %v145 = vadd.f32 %v125, %v144
    %146 = vmatmul.f32.gmra.mxu0 %v94
    %v147 = vpop.f32.mrf.mxu0
    %v148 = vadd.f32 %v125, %v147
    %149 = vdwg.mxu0
    %s150 = scalar_lea.vmem %s1, 32
    %v151 = vld [vmem:[%s150] sm:$0xff]
    %v152 = vld [vmem:[%s150 + $0x8] sm:$0xff]
    %s153 = scalar_lea.vmem %s3, 2
    %v154 = vld [vmem:[%s153] sm:$0x1]
    %v156 = vperm.slane %v154, 0
    %158 = vmatpush.msra.mxu0 0.0
    %159 = vmatpush.msra.mxu0 0.0
    %160 = vmatpush.msra.mxu0 0.0
    %161 = vmatpush.msra.mxu0 0.0
    %162 = vmatpush.msra.mxu0 0.0
    %163 = vmatpush.msra.mxu0 0.0
    %164 = vmatpush.msra.mxu0 0.0
    %165 = vmatpush.msra.mxu0 0.0
    %166 = vmatpush.msra.mxu0 0.0
    %167 = vmatpush.msra.mxu0 0.0
    %168 = vmatpush.msra.mxu0 0.0
    %169 = vmatpush.msra.mxu0 0.0
    %170 = vmatpush.msra.mxu0 0.0
    %171 = vmatpush.msra.mxu0 0.0
    %172 = vmatpush.msra.mxu0 %v152
    %173 = vmatpush.msra.mxu0 %v151
    %174 = vmatmul.f32.gmra.mxu0 %v91
    %v175 = vpop.f32.mrf.mxu0
    %v176 = vadd.f32 %v156, %v175
    %177 = vmatmul.f32.gmra.mxu0 %v94
    %v178 = vpop.f32.mrf.mxu0
    %v179 = vadd.f32 %v156, %v178
    %180 = vdwg.mxu0
    %s181 = scalar_lea.vmem %s1, 48
    %v182 = vld [vmem:[%s181] sm:$0xff]
    %v183 = vld [vmem:[%s181 + $0x8] sm:$0xff]
    %s184 = scalar_lea.vmem %s3, 3
    %v185 = vld [vmem:[%s184] sm:$0x1]
    %v187 = vperm.slane %v185, 0
    %189 = vmatpush.msra.mxu0 0.0
    %190 = vmatpush.msra.mxu0 0.0
    %191 = vmatpush.msra.mxu0 0.0
    %192 = vmatpush.msra.mxu0 0.0
    %193 = vmatpush.msra.mxu0 0.0
    %194 = vmatpush.msra.mxu0 0.0
    %195 = vmatpush.msra.mxu0 0.0
    %196 = vmatpush.msra.mxu0 0.0
    %197 = vmatpush.msra.mxu0 0.0
    %198 = vmatpush.msra.mxu0 0.0
    %199 = vmatpush.msra.mxu0 0.0
    %200 = vmatpush.msra.mxu0 0.0
    %201 = vmatpush.msra.mxu0 0.0
    %202 = vmatpush.msra.mxu0 0.0
    %203 = vmatpush.msra.mxu0 %v183
    %204 = vmatpush.msra.mxu0 %v182
    %205 = vmatmul.f32.gmra.mxu0 %v91
    %v206 = vpop.f32.mrf.mxu0
    %v207 = vadd.f32 %v187, %v206
    %208 = vmatmul.f32.gmra.mxu0 %v94
    %v209 = vpop.f32.mrf.mxu0
    %v210 = vadd.f32 %v187, %v209
    %211 = vdwg.mxu0
    %v212 = vld [vmem:[#allocation4] sm:$0xff]
    %v213 = vld [vmem:[#allocation4 + $0x8] sm:$0xff]
    %v214 = vld [vmem:[#allocation4 + $0x10] sm:$0xff]
    %v215 = vld [vmem:[#allocation4 + $0x18] sm:$0xff]
    %s216 = scalar_lea.vmem [#allocation4], 32
    %v217 = vld [vmem:[%s216] sm:$0xff]
    %v218 = vld [vmem:[%s216 + $0x8] sm:$0xff]
    %v219 = vld [vmem:[%s216 + $0x10] sm:$0xff]
    %v220 = vld [vmem:[%s216 + $0x18] sm:$0xff]
    %s221 = scalar_lea.vmem [#allocation4], 64
    %v222 = vld [vmem:[%s221] sm:$0xff]
    %v223 = vld [vmem:[%s221 + $0x8] sm:$0xff]
    %v224 = vld [vmem:[%s221 + $0x10] sm:$0xff]
    %v225 = vld [vmem:[%s221 + $0x18] sm:$0xff]
    %s226 = scalar_lea.vmem [#allocation4], 96
    %v227 = vld [vmem:[%s226] sm:$0xff]
    %v228 = vld [vmem:[%s226 + $0x8] sm:$0xff]
    %v229 = vld [vmem:[%s226 + $0x10] sm:$0xff]
    %v230 = vld [vmem:[%s226 + $0x18] sm:$0xff]
    %vm231 = vcmask 261120
    %v233 = vsel %vm231, 0.0, 0
    %235 = vmatpush.msra.mxu0 0.0
    %236 = vmatpush.msra.mxu0 0.0
    %237 = vmatpush.msra.mxu0 0.0
    %238 = vmatpush.msra.mxu0 0.0
    %239 = vmatpush.msra.mxu0 0.0
    %240 = vmatpush.msra.mxu0 0.0
    %241 = vmatpush.msra.mxu0 0.0
    %242 = vmatpush.msra.mxu0 0.0
    %243 = vmatpush.msra.mxu0 0.0
    %244 = vmatpush.msra.mxu0 0.0
    %245 = vmatpush.msra.mxu0 0.0
    %246 = vmatpush.msra.mxu0 0.0
    %247 = vmatpush.msra.mxu0 %v215
    %248 = vmatpush.msra.mxu0 %v214
    %249 = vmatpush.msra.mxu0 %v213
    %250 = vmatpush.msra.mxu0 %v212
    %251 = vmatmul.f32.gmra.mxu0 %v233
    %v252 = vpop.f32.mrf.mxu0
    %v253 = vadd.f32 0.0, %v252
    %254 = vdwg.mxu0
    %v255 = vadd.f32 %v114, %v253
    %256 = vmatpush.msra.mxu0 0.0
    %257 = vmatpush.msra.mxu0 0.0
    %258 = vmatpush.msra.mxu0 0.0
    %259 = vmatpush.msra.mxu0 0.0
    %260 = vmatpush.msra.mxu0 0.0
    %261 = vmatpush.msra.mxu0 0.0
    %262 = vmatpush.msra.mxu0 0.0
    %263 = vmatpush.msra.mxu0 0.0
    %264 = vmatpush.msra.mxu0 0.0
    %265 = vmatpush.msra.mxu0 0.0
    %266 = vmatpush.msra.mxu0 0.0
    %267 = vmatpush.msra.mxu0 0.0
    %268 = vmatpush.msra.mxu0 %v220
    %269 = vmatpush.msra.mxu0 %v219
    %270 = vmatpush.msra.mxu0 %v218
    %271 = vmatpush.msra.mxu0 %v217
    %272 = vmatmul.f32.gmra.mxu0 %v233
    %v273 = vpop.f32.mrf.mxu0
    %v274 = vadd.f32 0.0, %v273
    %275 = vdwg.mxu0
    %v276 = vadd.f32 %v145, %v274
    %277 = vmatpush.msra.mxu0 0.0
    %278 = vmatpush.msra.mxu0 0.0
    %279 = vmatpush.msra.mxu0 0.0
    %280 = vmatpush.msra.mxu0 0.0
    %281 = vmatpush.msra.mxu0 0.0
    %282 = vmatpush.msra.mxu0 0.0
    %283 = vmatpush.msra.mxu0 0.0
    %284 = vmatpush.msra.mxu0 0.0
    %285 = vmatpush.msra.mxu0 0.0
    %286 = vmatpush.msra.mxu0 0.0
    %287 = vmatpush.msra.mxu0 0.0
    %288 = vmatpush.msra.mxu0 0.0
    %289 = vmatpush.msra.mxu0 %v225
    %290 = vmatpush.msra.mxu0 %v224
    %291 = vmatpush.msra.mxu0 %v223
    %292 = vmatpush.msra.mxu0 %v222
    %293 = vmatmul.f32.gmra.mxu0 %v233
    %v294 = vpop.f32.mrf.mxu0
    %v295 = vadd.f32 0.0, %v294
    %296 = vdwg.mxu0
    %v297 = vadd.f32 %v176, %v295
    %298 = vmatpush.msra.mxu0 0.0
    %299 = vmatpush.msra.mxu0 0.0
    %300 = vmatpush.msra.mxu0 0.0
    %301 = vmatpush.msra.mxu0 0.0
    %302 = vmatpush.msra.mxu0 0.0
    %303 = vmatpush.msra.mxu0 0.0
    %304 = vmatpush.msra.mxu0 0.0
    %305 = vmatpush.msra.mxu0 0.0
    %306 = vmatpush.msra.mxu0 0.0
    %307 = vmatpush.msra.mxu0 0.0
    %308 = vmatpush.msra.mxu0 0.0
    %309 = vmatpush.msra.mxu0 0.0
    %310 = vmatpush.msra.mxu0 %v230
    %311 = vmatpush.msra.mxu0 %v229
    %312 = vmatpush.msra.mxu0 %v228
    %313 = vmatpush.msra.mxu0 %v227
    %314 = vmatmul.f32.gmra.mxu0 %v233
    %v315 = vpop.f32.mrf.mxu0
    %v316 = vadd.f32 0.0, %v315
    %317 = vdwg.mxu0
    %v318 = vadd.f32 %v207, %v316
    %v319 = vxor.u32 %v255, 2147483648
    %v320 = vmul.f32 %v319, 1.442695
    %v321 = vpow.pop %v320
    %v322 = vadd.f32 %v321, 1.0
    %v323 = vrcp.pop %v322
    %v324 = vmul.f32 %v322, %v323
    %v325 = vsub.f32 1.0, %v324
    %v326 = vmul.f32 %v323, %v325
    %v327 = vadd.f32 %v323, %v326
    %vm328 = vweird.f32 %v322
    %vm329 = vweird.f32 %v323
    %vm330 = vmor %vm328, %vm329
    %v331 = vsel %vm330, %v323, %v327
    %v332 = vand.u32 2147483647, %v322
    %vm333 = vcmp.eq.f32.partialorder %v332, 8.507059e+37
    %v334 = vand.u32 %v322, 2147483648
    %v335 = vor.u32 1.1754944e-38, %v334
    %v336 = vsel %vm333, %v335, %v331
    %v337 = vmul.f32 1.0, %v336
    %v338 = vxor.u32 %v276, 2147483648
    %v339 = vmul.f32 %v338, 1.442695
    %v340 = vpow.pop %v339
    %v341 = vadd.f32 %v340, 1.0
    %v342 = vrcp.pop %v341
    %v343 = vmul.f32 %v341, %v342
    %v344 = vsub.f32 1.0, %v343
    %v345 = vmul.f32 %v342, %v344
    %v346 = vadd.f32 %v342, %v345
    %vm347 = vweird.f32 %v341
    %vm348 = vweird.f32 %v342
    %vm349 = vmor %vm347, %vm348
    %v350 = vsel %vm349, %v342, %v346
    %v351 = vand.u32 2147483647, %v341
    %vm352 = vcmp.eq.f32.partialorder %v351, 8.507059e+37
    %v353 = vand.u32 %v341, 2147483648
    %v354 = vor.u32 1.1754944e-38, %v353
    %v355 = vsel %vm352, %v354, %v350
    %v356 = vmul.f32 1.0, %v355
    %v357 = vtanh.pop %v297
    %v358 = vxor.u32 %v318, 2147483648
    %v359 = vmul.f32 %v358, 1.442695
    %v360 = vpow.pop %v359
    %v361 = vadd.f32 %v360, 1.0
    %v362 = vrcp.pop %v361
    %v363 = vmul.f32 %v361, %v362
    %v364 = vsub.f32 1.0, %v363
    %v365 = vmul.f32 %v362, %v364
    %v366 = vadd.f32 %v362, %v365
    %vm367 = vweird.f32 %v361
    %vm368 = vweird.f32 %v362
    %vm369 = vmor %vm367, %vm368
    %v370 = vsel %vm369, %v362, %v366
    %v371 = vand.u32 2147483647, %v361
    %vm372 = vcmp.eq.f32.partialorder %v371, 8.507059e+37
    %v373 = vand.u32 %v361, 2147483648
    %v374 = vor.u32 1.1754944e-38, %v373
    %v375 = vsel %vm372, %v374, %v370
    %v376 = vmul.f32 1.0, %v375
    %v377 = vmul.f32 %v356, 0.0
    %v378 = vmul.f32 %v337, %v357
    %v379 = vadd.f32 %v377, %v378
    %v380 = vtanh.pop %v379
    %v381 = vmul.f32 %v376, %v380
    %vm382 = vcmask 254976
    %383 = vst.msk [vmem:[#allocation2] sm:$0x3] %vm382, %v381
    %v385 = vsel %vm231, %v381, 0
    %387 = vmatpush.msra.mxu0 0.0
    %388 = vmatpush.msra.mxu0 0.0
    %389 = vmatpush.msra.mxu0 0.0
    %390 = vmatpush.msra.mxu0 0.0
    %391 = vmatpush.msra.mxu0 0.0
    %392 = vmatpush.msra.mxu0 0.0
    %393 = vmatpush.msra.mxu0 0.0
    %394 = vmatpush.msra.mxu0 0.0
    %395 = vmatpush.msra.mxu0 0.0
    %396 = vmatpush.msra.mxu0 0.0
    %397 = vmatpush.msra.mxu0 0.0
    %398 = vmatpush.msra.mxu0 0.0
    %399 = vmatpush.msra.mxu0 %v215
    %400 = vmatpush.msra.mxu0 %v214
    %401 = vmatpush.msra.mxu0 %v213
    %402 = vmatpush.msra.mxu0 %v212
    %403 = vmatmul.f32.gmra.mxu0 %v385
    %v404 = vpop.f32.mrf.mxu0
    %v405 = vadd.f32 0.0, %v404
    %406 = vdwg.mxu0
    %v408 = vrot.slane %v405, 6
    %v410 = vadd.f32 %v114, %v408
    %411 = vmatpush.msra.mxu0 0.0
    %412 = vmatpush.msra.mxu0 0.0
    %413 = vmatpush.msra.mxu0 0.0
    %414 = vmatpush.msra.mxu0 0.0
    %415 = vmatpush.msra.mxu0 0.0
    %416 = vmatpush.msra.mxu0 0.0
    %417 = vmatpush.msra.mxu0 0.0
    %418 = vmatpush.msra.mxu0 0.0
    %419 = vmatpush.msra.mxu0 0.0
    %420 = vmatpush.msra.mxu0 0.0
    %421 = vmatpush.msra.mxu0 0.0
    %422 = vmatpush.msra.mxu0 0.0
    %423 = vmatpush.msra.mxu0 %v220
    %424 = vmatpush.msra.mxu0 %v219
    %425 = vmatpush.msra.mxu0 %v218
    %426 = vmatpush.msra.mxu0 %v217
    %427 = vmatmul.f32.gmra.mxu0 %v385
    %v428 = vpop.f32.mrf.mxu0
    %v429 = vadd.f32 0.0, %v428
    %430 = vdwg.mxu0
    %v432 = vrot.slane %v429, 6
    %v434 = vadd.f32 %v145, %v432
    %435 = vmatpush.msra.mxu0 0.0
    %436 = vmatpush.msra.mxu0 0.0
    %437 = vmatpush.msra.mxu0 0.0
    %438 = vmatpush.msra.mxu0 0.0
    %439 = vmatpush.msra.mxu0 0.0
    %440 = vmatpush.msra.mxu0 0.0
    %441 = vmatpush.msra.mxu0 0.0
    %442 = vmatpush.msra.mxu0 0.0
    %443 = vmatpush.msra.mxu0 0.0
    %444 = vmatpush.msra.mxu0 0.0
    %445 = vmatpush.msra.mxu0 0.0
    %446 = vmatpush.msra.mxu0 0.0
    %447 = vmatpush.msra.mxu0 %v225
    %448 = vmatpush.msra.mxu0 %v224
    %449 = vmatpush.msra.mxu0 %v223
    %450 = vmatpush.msra.mxu0 %v222
    %451 = vmatmul.f32.gmra.mxu0 %v385
    %v452 = vpop.f32.mrf.mxu0
    %v453 = vadd.f32 0.0, %v452
    %454 = vdwg.mxu0
    %v456 = vrot.slane %v453, 6
    %v458 = vadd.f32 %v176, %v456
    %459 = vmatpush.msra.mxu0 0.0
    %460 = vmatpush.msra.mxu0 0.0
    %461 = vmatpush.msra.mxu0 0.0
    %462 = vmatpush.msra.mxu0 0.0
    %463 = vmatpush.msra.mxu0 0.0
    %464 = vmatpush.msra.mxu0 0.0
    %465 = vmatpush.msra.mxu0 0.0
    %466 = vmatpush.msra.mxu0 0.0
    %467 = vmatpush.msra.mxu0 0.0
    %468 = vmatpush.msra.mxu0 0.0
    %469 = vmatpush.msra.mxu0 0.0
    %470 = vmatpush.msra.mxu0 0.0
    %471 = vmatpush.msra.mxu0 %v230
    %472 = vmatpush.msra.mxu0 %v229
    %473 = vmatpush.msra.mxu0 %v228
    %474 = vmatpush.msra.mxu0 %v227
    %475 = vmatmul.f32.gmra.mxu0 %v385
    %v476 = vpop.f32.mrf.mxu0
    %v477 = vadd.f32 0.0, %v476
    %478 = vdwg.mxu0
    %v480 = vrot.slane %v477, 6
    %v482 = vadd.f32 %v207, %v480
    %v483 = vxor.u32 %v410, 2147483648
    %v484 = vmul.f32 %v483, 1.442695
    %v485 = vpow.pop %v484
    %v486 = vadd.f32 %v485, 1.0
    %v487 = vrcp.pop %v486
    %v488 = vmul.f32 %v486, %v487
    %v489 = vsub.f32 1.0, %v488
    %v490 = vmul.f32 %v487, %v489
    %v491 = vadd.f32 %v487, %v490
    %vm492 = vweird.f32 %v486
    %vm493 = vweird.f32 %v487
    %vm494 = vmor %vm492, %vm493
    %v495 = vsel %vm494, %v487, %v491
    %v496 = vand.u32 2147483647, %v486
    %vm497 = vcmp.eq.f32.partialorder %v496, 8.507059e+37
    %v498 = vand.u32 %v486, 2147483648
    %v499 = vor.u32 1.1754944e-38, %v498
    %v500 = vsel %vm497, %v499, %v495
    %v501 = vmul.f32 1.0, %v500
    %v502 = vxor.u32 %v434, 2147483648
    %v503 = vmul.f32 %v502, 1.442695
    %v504 = vpow.pop %v503
    %v505 = vadd.f32 %v504, 1.0
    %v506 = vrcp.pop %v505
    %v507 = vmul.f32 %v505, %v506
    %v508 = vsub.f32 1.0, %v507
    %v509 = vmul.f32 %v506, %v508
    %v510 = vadd.f32 %v506, %v509
    %vm511 = vweird.f32 %v505
    %vm512 = vweird.f32 %v506
    %vm513 = vmor %vm511, %vm512
    %v514 = vsel %vm513, %v506, %v510
    %v515 = vand.u32 2147483647, %v505
    %vm516 = vcmp.eq.f32.partialorder %v515, 8.507059e+37
    %v517 = vand.u32 %v505, 2147483648
    %v518 = vor.u32 1.1754944e-38, %v517
    %v519 = vsel %vm516, %v518, %v514
    %v520 = vmul.f32 1.0, %v519
    %v521 = vtanh.pop %v458
    %v522 = vxor.u32 %v482, 2147483648
    %v523 = vmul.f32 %v522, 1.442695
    %v524 = vpow.pop %v523
    %v525 = vadd.f32 %v524, 1.0
    %v526 = vrcp.pop %v525
    %v527 = vmul.f32 %v525, %v526
    %v528 = vsub.f32 1.0, %v527
    %v529 = vmul.f32 %v526, %v528
    %v530 = vadd.f32 %v526, %v529
    %vm531 = vweird.f32 %v525
    %vm532 = vweird.f32 %v526
    %vm533 = vmor %vm531, %vm532
    %v534 = vsel %vm533, %v526, %v530
    %v535 = vand.u32 2147483647, %v525
    %vm536 = vcmp.eq.f32.partialorder %v535, 8.507059e+37
    %v537 = vand.u32 %v525, 2147483648
    %v538 = vor.u32 1.1754944e-38, %v537
    %v539 = vsel %vm536, %v538, %v534
    %v540 = vmul.f32 1.0, %v539
    %v542 = vrot.slane %v379, 6
    %v544 = vmul.f32 %v520, %v542
    %v545 = vmul.f32 %v501, %v521
    %v546 = vadd.f32 %v544, %v545
    %v547 = vtanh.pop %v546
    %v548 = vmul.f32 %v540, %v547
    %vm549 = vcmask 257026
    %550 = vst.msk [vmem:[#allocation2] sm:$0xc] %vm549, %v548
    %v552 = vrot.slane %v548, 2
    %v553 = vsel %vm231, %v552, 0
    %555 = vmatpush.msra.mxu0 0.0
    %556 = vmatpush.msra.mxu0 0.0
    %557 = vmatpush.msra.mxu0 0.0
    %558 = vmatpush.msra.mxu0 0.0
    %559 = vmatpush.msra.mxu0 0.0
    %560 = vmatpush.msra.mxu0 0.0
    %561 = vmatpush.msra.mxu0 0.0
    %562 = vmatpush.msra.mxu0 0.0
    %563 = vmatpush.msra.mxu0 0.0
    %564 = vmatpush.msra.mxu0 0.0
    %565 = vmatpush.msra.mxu0 0.0
    %566 = vmatpush.msra.mxu0 0.0
    %567 = vmatpush.msra.mxu0 %v215
    %568 = vmatpush.msra.mxu0 %v214
    %569 = vmatpush.msra.mxu0 %v213
    %570 = vmatpush.msra.mxu0 %v212
    %571 = vmatmul.f32.gmra.mxu0 %v553
    %v572 = vpop.f32.mrf.mxu0
    %v573 = vadd.f32 0.0, %v572
    %574 = vdwg.mxu0
    %v576 = vrot.slane %v573, 4
    %v578 = vadd.f32 %v114, %v576
    %579 = vmatpush.msra.mxu0 0.0
    %580 = vmatpush.msra.mxu0 0.0
    %581 = vmatpush.msra.mxu0 0.0
    %582 = vmatpush.msra.mxu0 0.0
    %583 = vmatpush.msra.mxu0 0.0
    %584 = vmatpush.msra.mxu0 0.0
    %585 = vmatpush.msra.mxu0 0.0
    %586 = vmatpush.msra.mxu0 0.0
    %587 = vmatpush.msra.mxu0 0.0
    %588 = vmatpush.msra.mxu0 0.0
    %589 = vmatpush.msra.mxu0 0.0
    %590 = vmatpush.msra.mxu0 0.0
    %591 = vmatpush.msra.mxu0 %v220
    %592 = vmatpush.msra.mxu0 %v219
    %593 = vmatpush.msra.mxu0 %v218
    %594 = vmatpush.msra.mxu0 %v217
    %595 = vmatmul.f32.gmra.mxu0 %v553
    %v596 = vpop.f32.mrf.mxu0
    %v597 = vadd.f32 0.0, %v596
    %598 = vdwg.mxu0
    %v600 = vrot.slane %v597, 4
    %v602 = vadd.f32 %v145, %v600
    %603 = vmatpush.msra.mxu0 0.0
    %604 = vmatpush.msra.mxu0 0.0
    %605 = vmatpush.msra.mxu0 0.0
    %606 = vmatpush.msra.mxu0 0.0
    %607 = vmatpush.msra.mxu0 0.0
    %608 = vmatpush.msra.mxu0 0.0
    %609 = vmatpush.msra.mxu0 0.0
    %610 = vmatpush.msra.mxu0 0.0
    %611 = vmatpush.msra.mxu0 0.0
    %612 = vmatpush.msra.mxu0 0.0
    %613 = vmatpush.msra.mxu0 0.0
    %614 = vmatpush.msra.mxu0 0.0
    %615 = vmatpush.msra.mxu0 %v225
    %616 = vmatpush.msra.mxu0 %v224
    %617 = vmatpush.msra.mxu0 %v223
    %618 = vmatpush.msra.mxu0 %v222
    %619 = vmatmul.f32.gmra.mxu0 %v553
    %v620 = vpop.f32.mrf.mxu0
    %v621 = vadd.f32 0.0, %v620
    %622 = vdwg.mxu0
    %v624 = vrot.slane %v621, 4
    %v626 = vadd.f32 %v176, %v624
    %627 = vmatpush.msra.mxu0 0.0
    %628 = vmatpush.msra.mxu0 0.0
    %629 = vmatpush.msra.mxu0 0.0
    %630 = vmatpush.msra.mxu0 0.0
    %631 = vmatpush.msra.mxu0 0.0
    %632 = vmatpush.msra.mxu0 0.0
    %633 = vmatpush.msra.mxu0 0.0
    %634 = vmatpush.msra.mxu0 0.0
    %635 = vmatpush.msra.mxu0 0.0
    %636 = vmatpush.msra.mxu0 0.0
    %637 = vmatpush.msra.mxu0 0.0
    %638 = vmatpush.msra.mxu0 0.0
    %639 = vmatpush.msra.mxu0 %v230
    %640 = vmatpush.msra.mxu0 %v229
    %641 = vmatpush.msra.mxu0 %v228
    %642 = vmatpush.msra.mxu0 %v227
    %643 = vmatmul.f32.gmra.mxu0 %v553
    %v644 = vpop.f32.mrf.mxu0
    %v645 = vadd.f32 0.0, %v644
    %646 = vdwg.mxu0
    %v648 = vrot.slane %v645, 4
    %v650 = vadd.f32 %v207, %v648
    %v651 = vxor.u32 %v578, 2147483648
    %v652 = vmul.f32 %v651, 1.442695
    %v653 = vpow.pop %v652
    %v654 = vadd.f32 %v653, 1.0
    %v655 = vrcp.pop %v654
    %v656 = vmul.f32 %v654, %v655
    %v657 = vsub.f32 1.0, %v656
    %v658 = vmul.f32 %v655, %v657
    %v659 = vadd.f32 %v655, %v658
    %vm660 = vweird.f32 %v654
    %vm661 = vweird.f32 %v655
    %vm662 = vmor %vm660, %vm661
    %v663 = vsel %vm662, %v655, %v659
    %v664 = vand.u32 2147483647, %v654
    %vm665 = vcmp.eq.f32.partialorder %v664, 8.507059e+37
    %v666 = vand.u32 %v654, 2147483648
    %v667 = vor.u32 1.1754944e-38, %v666
    %v668 = vsel %vm665, %v667, %v663
    %v669 = vmul.f32 1.0, %v668
    %v670 = vxor.u32 %v602, 2147483648
    %v671 = vmul.f32 %v670, 1.442695
    %v672 = vpow.pop %v671
    %v673 = vadd.f32 %v672, 1.0
    %v674 = vrcp.pop %v673
    %v675 = vmul.f32 %v673, %v674
    %v676 = vsub.f32 1.0, %v675
    %v677 = vmul.f32 %v674, %v676
    %v678 = vadd.f32 %v674, %v677
    %vm679 = vweird.f32 %v673
    %vm680 = vweird.f32 %v674
    %vm681 = vmor %vm679, %vm680
    %v682 = vsel %vm681, %v674, %v678
    %v683 = vand.u32 2147483647, %v673
    %vm684 = vcmp.eq.f32.partialorder %v683, 8.507059e+37
    %v685 = vand.u32 %v673, 2147483648
    %v686 = vor.u32 1.1754944e-38, %v685
    %v687 = vsel %vm684, %v686, %v682
    %v688 = vmul.f32 1.0, %v687
    %v689 = vtanh.pop %v626
    %v690 = vxor.u32 %v650, 2147483648
    %v691 = vmul.f32 %v690, 1.442695
    %v692 = vpow.pop %v691
    %v693 = vadd.f32 %v692, 1.0
    %v694 = vrcp.pop %v693
    %v695 = vmul.f32 %v693, %v694
    %v696 = vsub.f32 1.0, %v695
    %v697 = vmul.f32 %v694, %v696
    %v698 = vadd.f32 %v694, %v697
    %vm699 = vweird.f32 %v693
    %vm700 = vweird.f32 %v694
    %vm701 = vmor %vm699, %vm700
    %v702 = vsel %vm701, %v694, %v698
    %v703 = vand.u32 2147483647, %v693
    %vm704 = vcmp.eq.f32.partialorder %v703, 8.507059e+37
    %v705 = vand.u32 %v693, 2147483648
    %v706 = vor.u32 1.1754944e-38, %v705
    %v707 = vsel %vm704, %v706, %v702
    %v708 = vmul.f32 1.0, %v707
    %v710 = vrot.slane %v546, 6
    %v712 = vmul.f32 %v688, %v710
    %v713 = vmul.f32 %v669, %v689
    %v714 = vadd.f32 %v712, %v713
    %v715 = vtanh.pop %v714
    %v716 = vmul.f32 %v708, %v715
    %vm717 = vcmask 259076
    %718 = vst.msk [vmem:[#allocation2] sm:$0x30] %vm717, %v716
    %v720 = vrot.slane %v716, 4
    %v721 = vsel %vm231, %v720, 0
    %723 = vmatpush.msra.mxu0 0.0
    %724 = vmatpush.msra.mxu0 0.0
    %725 = vmatpush.msra.mxu0 0.0
    %726 = vmatpush.msra.mxu0 0.0
    %727 = vmatpush.msra.mxu0 0.0
    %728 = vmatpush.msra.mxu0 0.0
    %729 = vmatpush.msra.mxu0 0.0
    %730 = vmatpush.msra.mxu0 0.0
    %731 = vmatpush.msra.mxu0 0.0
    %732 = vmatpush.msra.mxu0 0.0
    %733 = vmatpush.msra.mxu0 0.0
    %734 = vmatpush.msra.mxu0 0.0
    %735 = vmatpush.msra.mxu0 %v215
    %736 = vmatpush.msra.mxu0 %v214
    %737 = vmatpush.msra.mxu0 %v213
    %738 = vmatpush.msra.mxu0 %v212
    %739 = vmatmul.f32.gmra.mxu0 %v721
    %v740 = vpop.f32.mrf.mxu0
    %v741 = vadd.f32 0.0, %v740
    %742 = vdwg.mxu0
    %v744 = vrot.slane %v741, 2
    %v746 = vadd.f32 %v114, %v744
    %747 = vmatpush.msra.mxu0 0.0
    %748 = vmatpush.msra.mxu0 0.0
    %749 = vmatpush.msra.mxu0 0.0
    %750 = vmatpush.msra.mxu0 0.0
    %751 = vmatpush.msra.mxu0 0.0
    %752 = vmatpush.msra.mxu0 0.0
    %753 = vmatpush.msra.mxu0 0.0
    %754 = vmatpush.msra.mxu0 0.0
    %755 = vmatpush.msra.mxu0 0.0
    %756 = vmatpush.msra.mxu0 0.0
    %757 = vmatpush.msra.mxu0 0.0
    %758 = vmatpush.msra.mxu0 0.0
    %759 = vmatpush.msra.mxu0 %v220
    %760 = vmatpush.msra.mxu0 %v219
    %761 = vmatpush.msra.mxu0 %v218
    %762 = vmatpush.msra.mxu0 %v217
    %763 = vmatmul.f32.gmra.mxu0 %v721
    %v764 = vpop.f32.mrf.mxu0
    %v765 = vadd.f32 0.0, %v764
    %766 = vdwg.mxu0
    %v768 = vrot.slane %v765, 2
    %v770 = vadd.f32 %v145, %v768
    %771 = vmatpush.msra.mxu0 0.0
    %772 = vmatpush.msra.mxu0 0.0
    %773 = vmatpush.msra.mxu0 0.0
    %774 = vmatpush.msra.mxu0 0.0
    %775 = vmatpush.msra.mxu0 0.0
    %776 = vmatpush.msra.mxu0 0.0
    %777 = vmatpush.msra.mxu0 0.0
    %778 = vmatpush.msra.mxu0 0.0
    %779 = vmatpush.msra.mxu0 0.0
    %780 = vmatpush.msra.mxu0 0.0
    %781 = vmatpush.msra.mxu0 0.0
    %782 = vmatpush.msra.mxu0 0.0
    %783 = vmatpush.msra.mxu0 %v225
    %784 = vmatpush.msra.mxu0 %v224
    %785 = vmatpush.msra.mxu0 %v223
    %786 = vmatpush.msra.mxu0 %v222
    %787 = vmatmul.f32.gmra.mxu0 %v721
    %v788 = vpop.f32.mrf.mxu0
    %v789 = vadd.f32 0.0, %v788
    %790 = vdwg.mxu0
    %v792 = vrot.slane %v789, 2
    %v794 = vadd.f32 %v176, %v792
    %795 = vmatpush.msra.mxu0 0.0
    %796 = vmatpush.msra.mxu0 0.0
    %797 = vmatpush.msra.mxu0 0.0
    %798 = vmatpush.msra.mxu0 0.0
    %799 = vmatpush.msra.mxu0 0.0
    %800 = vmatpush.msra.mxu0 0.0
    %801 = vmatpush.msra.mxu0 0.0
    %802 = vmatpush.msra.mxu0 0.0
    %803 = vmatpush.msra.mxu0 0.0
    %804 = vmatpush.msra.mxu0 0.0
    %805 = vmatpush.msra.mxu0 0.0
    %806 = vmatpush.msra.mxu0 0.0
    %807 = vmatpush.msra.mxu0 %v230
    %808 = vmatpush.msra.mxu0 %v229
    %809 = vmatpush.msra.mxu0 %v228
    %810 = vmatpush.msra.mxu0 %v227
    %811 = vmatmul.f32.gmra.mxu0 %v721
    %v812 = vpop.f32.mrf.mxu0
    %v813 = vadd.f32 0.0, %v812
    %814 = vdwg.mxu0
    %v816 = vrot.slane %v813, 2
    %v818 = vadd.f32 %v207, %v816
    %v819 = vxor.u32 %v746, 2147483648
    %v820 = vmul.f32 %v819, 1.442695
    %v821 = vpow.pop %v820
    %v822 = vadd.f32 %v821, 1.0
    %v823 = vrcp.pop %v822
    %v824 = vmul.f32 %v822, %v823
    %v825 = vsub.f32 1.0, %v824
    %v826 = vmul.f32 %v823, %v825
    %v827 = vadd.f32 %v823, %v826
    %vm828 = vweird.f32 %v822
    %vm829 = vweird.f32 %v823
    %vm830 = vmor %vm828, %vm829
    %v831 = vsel %vm830, %v823, %v827
    %v832 = vand.u32 2147483647, %v822
    %vm833 = vcmp.eq.f32.partialorder %v832, 8.507059e+37
    %v834 = vand.u32 %v822, 2147483648
    %v835 = vor.u32 1.1754944e-38, %v834
    %v836 = vsel %vm833, %v835, %v831
    %v837 = vmul.f32 1.0, %v836
    %v838 = vxor.u32 %v770, 2147483648
    %v839 = vmul.f32 %v838, 1.442695
    %v840 = vpow.pop %v839
    %v841 = vadd.f32 %v840, 1.0
    %v842 = vrcp.pop %v841
    %v843 = vmul.f32 %v841, %v842
    %v844 = vsub.f32 1.0, %v843
    %v845 = vmul.f32 %v842, %v844
    %v846 = vadd.f32 %v842, %v845
    %vm847 = vweird.f32 %v841
    %vm848 = vweird.f32 %v842
    %vm849 = vmor %vm847, %vm848
    %v850 = vsel %vm849, %v842, %v846
    %v851 = vand.u32 2147483647, %v841
    %vm852 = vcmp.eq.f32.partialorder %v851, 8.507059e+37
    %v853 = vand.u32 %v841, 2147483648
    %v854 = vor.u32 1.1754944e-38, %v853
    %v855 = vsel %vm852, %v854, %v850
    %v856 = vmul.f32 1.0, %v855
    %v857 = vtanh.pop %v794
    %v858 = vxor.u32 %v818, 2147483648
    %v859 = vmul.f32 %v858, 1.442695
    %v860 = vpow.pop %v859
    %v861 = vadd.f32 %v860, 1.0
    %v862 = vrcp.pop %v861
    %v863 = vmul.f32 %v861, %v862
    %v864 = vsub.f32 1.0, %v863
    %v865 = vmul.f32 %v862, %v864
    %v866 = vadd.f32 %v862, %v865
    %vm867 = vweird.f32 %v861
    %vm868 = vweird.f32 %v862
    %vm869 = vmor %vm867, %vm868
    %v870 = vsel %vm869, %v862, %v866
    %v871 = vand.u32 2147483647, %v861
    %vm872 = vcmp.eq.f32.partialorder %v871, 8.507059e+37
    %v873 = vand.u32 %v861, 2147483648
    %v874 = vor.u32 1.1754944e-38, %v873
    %v875 = vsel %vm872, %v874, %v870
    %v876 = vmul.f32 1.0, %v875
    %v878 = vrot.slane %v714, 6
    %v880 = vmul.f32 %v856, %v878
    %v881 = vmul.f32 %v837, %v857
    %v882 = vadd.f32 %v880, %v881
    %v883 = vtanh.pop %v882
    %v884 = vmul.f32 %v876, %v883
    %vm885 = vcmask 261126
    %886 = vst.msk [vmem:[#allocation2] sm:$0xc0] %vm885, %v884
    %v888 = vrot.slane %v884, 6
    %v889 = vsel %vm231, %v888, 0
    %891 = vmatpush.msra.mxu0 0.0
    %892 = vmatpush.msra.mxu0 0.0
    %893 = vmatpush.msra.mxu0 0.0
    %894 = vmatpush.msra.mxu0 0.0
    %895 = vmatpush.msra.mxu0 0.0
    %896 = vmatpush.msra.mxu0 0.0
    %897 = vmatpush.msra.mxu0 0.0
    %898 = vmatpush.msra.mxu0 0.0
    %899 = vmatpush.msra.mxu0 0.0
    %900 = vmatpush.msra.mxu0 0.0
    %901 = vmatpush.msra.mxu0 0.0
    %902 = vmatpush.msra.mxu0 0.0
    %903 = vmatpush.msra.mxu0 %v215
    %904 = vmatpush.msra.mxu0 %v214
    %905 = vmatpush.msra.mxu0 %v213
    %906 = vmatpush.msra.mxu0 %v212
    %907 = vmatmul.f32.gmra.mxu0 %v889
    %v908 = vpop.f32.mrf.mxu0
    %v909 = vadd.f32 0.0, %v908
    %910 = vdwg.mxu0
    %v911 = vadd.f32 %v117, %v909
    %912 = vmatpush.msra.mxu0 0.0
    %913 = vmatpush.msra.mxu0 0.0
    %914 = vmatpush.msra.mxu0 0.0
    %915 = vmatpush.msra.mxu0 0.0
    %916 = vmatpush.msra.mxu0 0.0
    %917 = vmatpush.msra.mxu0 0.0
    %918 = vmatpush.msra.mxu0 0.0
    %919 = vmatpush.msra.mxu0 0.0
    %920 = vmatpush.msra.mxu0 0.0
    %921 = vmatpush.msra.mxu0 0.0
    %922 = vmatpush.msra.mxu0 0.0
    %923 = vmatpush.msra.mxu0 0.0
    %924 = vmatpush.msra.mxu0 %v220
    %925 = vmatpush.msra.mxu0 %v219
    %926 = vmatpush.msra.mxu0 %v218
    %927 = vmatpush.msra.mxu0 %v217
    %928 = vmatmul.f32.gmra.mxu0 %v889
    %v929 = vpop.f32.mrf.mxu0
    %v930 = vadd.f32 0.0, %v929
    %931 = vdwg.mxu0
    %v932 = vadd.f32 %v148, %v930
    %933 = vmatpush.msra.mxu0 0.0
    %934 = vmatpush.msra.mxu0 0.0
    %935 = vmatpush.msra.mxu0 0.0
    %936 = vmatpush.msra.mxu0 0.0
    %937 = vmatpush.msra.mxu0 0.0
    %938 = vmatpush.msra.mxu0 0.0
    %939 = vmatpush.msra.mxu0 0.0
    %940 = vmatpush.msra.mxu0 0.0
    %941 = vmatpush.msra.mxu0 0.0
    %942 = vmatpush.msra.mxu0 0.0
    %943 = vmatpush.msra.mxu0 0.0
    %944 = vmatpush.msra.mxu0 0.0
    %945 = vmatpush.msra.mxu0 %v225
    %946 = vmatpush.msra.mxu0 %v224
    %947 = vmatpush.msra.mxu0 %v223
    %948 = vmatpush.msra.mxu0 %v222
    %949 = vmatmul.f32.gmra.mxu0 %v889
    %v950 = vpop.f32.mrf.mxu0
    %v951 = vadd.f32 0.0, %v950
    %952 = vdwg.mxu0
    %v953 = vadd.f32 %v179, %v951
    %954 = vmatpush.msra.mxu0 0.0
    %955 = vmatpush.msra.mxu0 0.0
    %956 = vmatpush.msra.mxu0 0.0
    %957 = vmatpush.msra.mxu0 0.0
    %958 = vmatpush.msra.mxu0 0.0
    %959 = vmatpush.msra.mxu0 0.0
    %960 = vmatpush.msra.mxu0 0.0
    %961 = vmatpush.msra.mxu0 0.0
    %962 = vmatpush.msra.mxu0 0.0
    %963 = vmatpush.msra.mxu0 0.0
    %964 = vmatpush.msra.mxu0 0.0
    %965 = vmatpush.msra.mxu0 0.0
    %966 = vmatpush.msra.mxu0 %v230
    %967 = vmatpush.msra.mxu0 %v229
    %968 = vmatpush.msra.mxu0 %v228
    %969 = vmatpush.msra.mxu0 %v227
    %970 = vmatmul.f32.gmra.mxu0 %v889
    %v971 = vpop.f32.mrf.mxu0
    %v972 = vadd.f32 0.0, %v971
    %973 = vdwg.mxu0
    %v974 = vadd.f32 %v210, %v972
    %v975 = vxor.u32 %v911, 2147483648
    %v976 = vmul.f32 %v975, 1.442695
    %v977 = vpow.pop %v976
    %v978 = vadd.f32 %v977, 1.0
    %v979 = vrcp.pop %v978
    %v980 = vmul.f32 %v978, %v979
    %v981 = vsub.f32 1.0, %v980
    %v982 = vmul.f32 %v979, %v981
    %v983 = vadd.f32 %v979, %v982
    %vm984 = vweird.f32 %v978
    %vm985 = vweird.f32 %v979
    %vm986 = vmor %vm984, %vm985
    %v987 = vsel %vm986, %v979, %v983
    %v988 = vand.u32 2147483647, %v978
    %vm989 = vcmp.eq.f32.partialorder %v988, 8.507059e+37
    %v990 = vand.u32 %v978, 2147483648
    %v991 = vor.u32 1.1754944e-38, %v990
    %v992 = vsel %vm989, %v991, %v987
    %v993 = vmul.f32 1.0, %v992
    %v994 = vxor.u32 %v932, 2147483648
    %v995 = vmul.f32 %v994, 1.442695
    %v996 = vpow.pop %v995
    %v997 = vadd.f32 %v996, 1.0
    %v998 = vrcp.pop %v997
    %v999 = vmul.f32 %v997, %v998
    %v1000 = vsub.f32 1.0, %v999
    %v1001 = vmul.f32 %v998, %v1000
    %v1002 = vadd.f32 %v998, %v1001
    %vm1003 = vweird.f32 %v997
    %vm1004 = vweird.f32 %v998
    %vm1005 = vmor %vm1003, %vm1004
    %v1006 = vsel %vm1005, %v998, %v1002
    %v1007 = vand.u32 2147483647, %v997
    %vm1008 = vcmp.eq.f32.partialorder %v1007, 8.507059e+37
    %v1009 = vand.u32 %v997, 2147483648
    %v1010 = vor.u32 1.1754944e-38, %v1009
    %v1011 = vsel %vm1008, %v1010, %v1006
    %v1012 = vmul.f32 1.0, %v1011
    %v1013 = vtanh.pop %v953
    %v1014 = vxor.u32 %v974, 2147483648
    %v1015 = vmul.f32 %v1014, 1.442695
    %v1016 = vpow.pop %v1015
    %v1017 = vadd.f32 %v1016, 1.0
    %v1018 = vrcp.pop %v1017
    %v1019 = vmul.f32 %v1017, %v1018
    %v1020 = vsub.f32 1.0, %v1019
    %v1021 = vmul.f32 %v1018, %v1020
    %v1022 = vadd.f32 %v1018, %v1021
    %vm1023 = vweird.f32 %v1017
    %vm1024 = vweird.f32 %v1018
    %vm1025 = vmor %vm1023, %vm1024
    %v1026 = vsel %vm1025, %v1018, %v1022
    %v1027 = vand.u32 2147483647, %v1017
    %vm1028 = vcmp.eq.f32.partialorder %v1027, 8.507059e+37
    %v1029 = vand.u32 %v1017, 2147483648
    %v1030 = vor.u32 1.1754944e-38, %v1029
    %v1031 = vsel %vm1028, %v1030, %v1026
    %v1032 = vmul.f32 1.0, %v1031
    %v1034 = vrot.slane %v882, 6
    %v1036 = vmul.f32 %v1012, %v1034
    %v1037 = vmul.f32 %v993, %v1013
    %v1038 = vadd.f32 %v1036, %v1037
    %v1039 = vtanh.pop %v1038
    %v1040 = vmul.f32 %v1032, %v1039
    %1041 = vst.msk [vmem:[#allocation2 + $0x8] sm:$0x3] %vm382, %v1040
    %v1043 = vsel %vm231, %v1040, 0
    %1045 = vmatpush.msra.mxu0 0.0
    %1046 = vmatpush.msra.mxu0 0.0
    %1047 = vmatpush.msra.mxu0 0.0
    %1048 = vmatpush.msra.mxu0 0.0
    %1049 = vmatpush.msra.mxu0 0.0
    %1050 = vmatpush.msra.mxu0 0.0
    %1051 = vmatpush.msra.mxu0 0.0
    %1052 = vmatpush.msra.mxu0 0.0
    %1053 = vmatpush.msra.mxu0 0.0
    %1054 = vmatpush.msra.mxu0 0.0
    %1055 = vmatpush.msra.mxu0 0.0
    %1056 = vmatpush.msra.mxu0 0.0
    %1057 = vmatpush.msra.mxu0 %v215
    %1058 = vmatpush.msra.mxu0 %v214
    %1059 = vmatpush.msra.mxu0 %v213
    %1060 = vmatpush.msra.mxu0 %v212
    %1061 = vmatmul.f32.gmra.mxu0 %v1043
    %v1062 = vpop.f32.mrf.mxu0
    %v1063 = vadd.f32 0.0, %v1062
    %1064 = vdwg.mxu0
    %v1066 = vrot.slane %v1063, 6
    %v1068 = vadd.f32 %v117, %v1066
    %1069 = vmatpush.msra.mxu0 0.0
    %1070 = vmatpush.msra.mxu0 0.0
    %1071 = vmatpush.msra.mxu0 0.0
    %1072 = vmatpush.msra.mxu0 0.0
    %1073 = vmatpush.msra.mxu0 0.0
    %1074 = vmatpush.msra.mxu0 0.0
    %1075 = vmatpush.msra.mxu0 0.0
    %1076 = vmatpush.msra.mxu0 0.0
    %1077 = vmatpush.msra.mxu0 0.0
    %1078 = vmatpush.msra.mxu0 0.0
    %1079 = vmatpush.msra.mxu0 0.0
    %1080 = vmatpush.msra.mxu0 0.0
    %1081 = vmatpush.msra.mxu0 %v220
    %1082 = vmatpush.msra.mxu0 %v219
    %1083 = vmatpush.msra.mxu0 %v218
    %1084 = vmatpush.msra.mxu0 %v217
    %1085 = vmatmul.f32.gmra.mxu0 %v1043
    %v1086 = vpop.f32.mrf.mxu0
    %v1087 = vadd.f32 0.0, %v1086
    %1088 = vdwg.mxu0
    %v1090 = vrot.slane %v1087, 6
    %v1092 = vadd.f32 %v148, %v1090
    %1093 = vmatpush.msra.mxu0 0.0
    %1094 = vmatpush.msra.mxu0 0.0
    %1095 = vmatpush.msra.mxu0 0.0
    %1096 = vmatpush.msra.mxu0 0.0
    %1097 = vmatpush.msra.mxu0 0.0
    %1098 = vmatpush.msra.mxu0 0.0
    %1099 = vmatpush.msra.mxu0 0.0
    %1100 = vmatpush.msra.mxu0 0.0
    %1101 = vmatpush.msra.mxu0 0.0
    %1102 = vmatpush.msra.mxu0 0.0
    %1103 = vmatpush.msra.mxu0 0.0
    %1104 = vmatpush.msra.mxu0 0.0
    %1105 = vmatpush.msra.mxu0 %v225
    %1106 = vmatpush.msra.mxu0 %v224
    %1107 = vmatpush.msra.mxu0 %v223
    %1108 = vmatpush.msra.mxu0 %v222
    %1109 = vmatmul.f32.gmra.mxu0 %v1043
    %v1110 = vpop.f32.mrf.mxu0
    %v1111 = vadd.f32 0.0, %v1110
    %1112 = vdwg.mxu0
    %v1114 = vrot.slane %v1111, 6
    %v1116 = vadd.f32 %v179, %v1114
    %1117 = vmatpush.msra.mxu0 0.0
    %1118 = vmatpush.msra.mxu0 0.0
    %1119 = vmatpush.msra.mxu0 0.0
    %1120 = vmatpush.msra.mxu0 0.0
    %1121 = vmatpush.msra.mxu0 0.0
    %1122 = vmatpush.msra.mxu0 0.0
    %1123 = vmatpush.msra.mxu0 0.0
    %1124 = vmatpush.msra.mxu0 0.0
    %1125 = vmatpush.msra.mxu0 0.0
    %1126 = vmatpush.msra.mxu0 0.0
    %1127 = vmatpush.msra.mxu0 0.0
    %1128 = vmatpush.msra.mxu0 0.0
    %1129 = vmatpush.msra.mxu0 %v230
    %1130 = vmatpush.msra.mxu0 %v229
    %1131 = vmatpush.msra.mxu0 %v228
    %1132 = vmatpush.msra.mxu0 %v227
    %1133 = vmatmul.f32.gmra.mxu0 %v1043
    %v1134 = vpop.f32.mrf.mxu0
    %v1135 = vadd.f32 0.0, %v1134
    %1136 = vdwg.mxu0
    %v1138 = vrot.slane %v1135, 6
    %v1140 = vadd.f32 %v210, %v1138
    %v1141 = vxor.u32 %v1068, 2147483648
    %v1142 = vmul.f32 %v1141, 1.442695
    %v1143 = vpow.pop %v1142
    %v1144 = vadd.f32 %v1143, 1.0
    %v1145 = vrcp.pop %v1144
    %v1146 = vmul.f32 %v1144, %v1145
    %v1147 = vsub.f32 1.0, %v1146
    %v1148 = vmul.f32 %v1145, %v1147
    %v1149 = vadd.f32 %v1145, %v1148
    %vm1150 = vweird.f32 %v1144
    %vm1151 = vweird.f32 %v1145
    %vm1152 = vmor %vm1150, %vm1151
    %v1153 = vsel %vm1152, %v1145, %v1149
    %v1154 = vand.u32 2147483647, %v1144
    %vm1155 = vcmp.eq.f32.partialorder %v1154, 8.507059e+37
    %v1156 = vand.u32 %v1144, 2147483648
    %v1157 = vor.u32 1.1754944e-38, %v1156
    %v1158 = vsel %vm1155, %v1157, %v1153
    %v1159 = vmul.f32 1.0, %v1158
    %v1160 = vxor.u32 %v1092, 2147483648
    %v1161 = vmul.f32 %v1160, 1.442695
    %v1162 = vpow.pop %v1161
    %v1163 = vadd.f32 %v1162, 1.0
    %v1164 = vrcp.pop %v1163
    %v1165 = vmul.f32 %v1163, %v1164
    %v1166 = vsub.f32 1.0, %v1165
    %v1167 = vmul.f32 %v1164, %v1166
    %v1168 = vadd.f32 %v1164, %v1167
    %vm1169 = vweird.f32 %v1163
    %vm1170 = vweird.f32 %v1164
    %vm1171 = vmor %vm1169, %vm1170
    %v1172 = vsel %vm1171, %v1164, %v1168
    %v1173 = vand.u32 2147483647, %v1163
    %vm1174 = vcmp.eq.f32.partialorder %v1173, 8.507059e+37
    %v1175 = vand.u32 %v1163, 2147483648
    %v1176 = vor.u32 1.1754944e-38, %v1175
    %v1177 = vsel %vm1174, %v1176, %v1172
    %v1178 = vmul.f32 1.0, %v1177
    %v1179 = vtanh.pop %v1116
    %v1180 = vxor.u32 %v1140, 2147483648
    %v1181 = vmul.f32 %v1180, 1.442695
    %v1182 = vpow.pop %v1181
    %v1183 = vadd.f32 %v1182, 1.0
    %v1184 = vrcp.pop %v1183
    %v1185 = vmul.f32 %v1183, %v1184
    %v1186 = vsub.f32 1.0, %v1185
    %v1187 = vmul.f32 %v1184, %v1186
    %v1188 = vadd.f32 %v1184, %v1187
    %vm1189 = vweird.f32 %v1183
    %vm1190 = vweird.f32 %v1184
    %vm1191 = vmor %vm1189, %vm1190
    %v1192 = vsel %vm1191, %v1184, %v1188
    %v1193 = vand.u32 2147483647, %v1183
    %vm1194 = vcmp.eq.f32.partialorder %v1193, 8.507059e+37
    %v1195 = vand.u32 %v1183, 2147483648
    %v1196 = vor.u32 1.1754944e-38, %v1195
    %v1197 = vsel %vm1194, %v1196, %v1192
    %v1198 = vmul.f32 1.0, %v1197
    %v1200 = vrot.slane %v1038, 6
    %v1202 = vmul.f32 %v1178, %v1200
    %v1203 = vmul.f32 %v1159, %v1179
    %v1204 = vadd.f32 %v1202, %v1203
    %v1205 = vtanh.pop %v1204
    %v1206 = vmul.f32 %v1198, %v1205
    %1207 = vst.msk [vmem:[#allocation2 + $0x8] sm:$0xc] %vm549, %v1206
    %v1209 = vrot.slane %v1206, 2
    %v1210 = vsel %vm231, %v1209, 0
    %1212 = vmatpush.msra.mxu0 0.0
    %1213 = vmatpush.msra.mxu0 0.0
    %1214 = vmatpush.msra.mxu0 0.0
    %1215 = vmatpush.msra.mxu0 0.0
    %1216 = vmatpush.msra.mxu0 0.0
    %1217 = vmatpush.msra.mxu0 0.0
    %1218 = vmatpush.msra.mxu0 0.0
    %1219 = vmatpush.msra.mxu0 0.0
    %1220 = vmatpush.msra.mxu0 0.0
    %1221 = vmatpush.msra.mxu0 0.0
    %1222 = vmatpush.msra.mxu0 0.0
    %1223 = vmatpush.msra.mxu0 0.0
    %1224 = vmatpush.msra.mxu0 %v215
    %1225 = vmatpush.msra.mxu0 %v214
    %1226 = vmatpush.msra.mxu0 %v213
    %1227 = vmatpush.msra.mxu0 %v212
    %1228 = vmatmul.f32.gmra.mxu0 %v1210
    %v1229 = vpop.f32.mrf.mxu0
    %v1230 = vadd.f32 0.0, %v1229
    %1231 = vdwg.mxu0
    %v1233 = vrot.slane %v1230, 4
    %v1235 = vadd.f32 %v117, %v1233
    %1236 = vmatpush.msra.mxu0 0.0
    %1237 = vmatpush.msra.mxu0 0.0
    %1238 = vmatpush.msra.mxu0 0.0
    %1239 = vmatpush.msra.mxu0 0.0
    %1240 = vmatpush.msra.mxu0 0.0
    %1241 = vmatpush.msra.mxu0 0.0
    %1242 = vmatpush.msra.mxu0 0.0
    %1243 = vmatpush.msra.mxu0 0.0
    %1244 = vmatpush.msra.mxu0 0.0
    %1245 = vmatpush.msra.mxu0 0.0
    %1246 = vmatpush.msra.mxu0 0.0
    %1247 = vmatpush.msra.mxu0 0.0
    %1248 = vmatpush.msra.mxu0 %v220
    %1249 = vmatpush.msra.mxu0 %v219
    %1250 = vmatpush.msra.mxu0 %v218
    %1251 = vmatpush.msra.mxu0 %v217
    %1252 = vmatmul.f32.gmra.mxu0 %v1210
    %v1253 = vpop.f32.mrf.mxu0
    %v1254 = vadd.f32 0.0, %v1253
    %1255 = vdwg.mxu0
    %v1257 = vrot.slane %v1254, 4
    %v1259 = vadd.f32 %v148, %v1257
    %1260 = vmatpush.msra.mxu0 0.0
    %1261 = vmatpush.msra.mxu0 0.0
    %1262 = vmatpush.msra.mxu0 0.0
    %1263 = vmatpush.msra.mxu0 0.0
    %1264 = vmatpush.msra.mxu0 0.0
    %1265 = vmatpush.msra.mxu0 0.0
    %1266 = vmatpush.msra.mxu0 0.0
    %1267 = vmatpush.msra.mxu0 0.0
    %1268 = vmatpush.msra.mxu0 0.0
    %1269 = vmatpush.msra.mxu0 0.0
    %1270 = vmatpush.msra.mxu0 0.0
    %1271 = vmatpush.msra.mxu0 0.0
    %1272 = vmatpush.msra.mxu0 %v225
    %1273 = vmatpush.msra.mxu0 %v224
    %1274 = vmatpush.msra.mxu0 %v223
    %1275 = vmatpush.msra.mxu0 %v222
    %1276 = vmatmul.f32.gmra.mxu0 %v1210
    %v1277 = vpop.f32.mrf.mxu0
    %v1278 = vadd.f32 0.0, %v1277
    %1279 = vdwg.mxu0
    %v1281 = vrot.slane %v1278, 4
    %v1283 = vadd.f32 %v179, %v1281
    %1284 = vmatpush.msra.mxu0 0.0
    %1285 = vmatpush.msra.mxu0 0.0
    %1286 = vmatpush.msra.mxu0 0.0
    %1287 = vmatpush.msra.mxu0 0.0
    %1288 = vmatpush.msra.mxu0 0.0
    %1289 = vmatpush.msra.mxu0 0.0
    %1290 = vmatpush.msra.mxu0 0.0
    %1291 = vmatpush.msra.mxu0 0.0
    %1292 = vmatpush.msra.mxu0 0.0
    %1293 = vmatpush.msra.mxu0 0.0
    %1294 = vmatpush.msra.mxu0 0.0
    %1295 = vmatpush.msra.mxu0 0.0
    %1296 = vmatpush.msra.mxu0 %v230
    %1297 = vmatpush.msra.mxu0 %v229
    %1298 = vmatpush.msra.mxu0 %v228
    %1299 = vmatpush.msra.mxu0 %v227
    %1300 = vmatmul.f32.gmra.mxu0 %v1210
    %v1301 = vpop.f32.mrf.mxu0
    %v1302 = vadd.f32 0.0, %v1301
    %1303 = vdwg.mxu0
    %v1305 = vrot.slane %v1302, 4
    %v1307 = vadd.f32 %v210, %v1305
    %v1308 = vxor.u32 %v1235, 2147483648
    %v1309 = vmul.f32 %v1308, 1.442695
    %v1310 = vpow.pop %v1309
    %v1311 = vadd.f32 %v1310, 1.0
    %v1312 = vrcp.pop %v1311
    %v1313 = vmul.f32 %v1311, %v1312
    %v1314 = vsub.f32 1.0, %v1313
    %v1315 = vmul.f32 %v1312, %v1314
    %v1316 = vadd.f32 %v1312, %v1315
    %vm1317 = vweird.f32 %v1311
    %vm1318 = vweird.f32 %v1312
    %vm1319 = vmor %vm1317, %vm1318
    %v1320 = vsel %vm1319, %v1312, %v1316
    %v1321 = vand.u32 2147483647, %v1311
    %vm1322 = vcmp.eq.f32.partialorder %v1321, 8.507059e+37
    %v1323 = vand.u32 %v1311, 2147483648
    %v1324 = vor.u32 1.1754944e-38, %v1323
    %v1325 = vsel %vm1322, %v1324, %v1320
    %v1326 = vmul.f32 1.0, %v1325
    %v1327 = vxor.u32 %v1259, 2147483648
    %v1328 = vmul.f32 %v1327, 1.442695
    %v1329 = vpow.pop %v1328
    %v1330 = vadd.f32 %v1329, 1.0
    %v1331 = vrcp.pop %v1330
    %v1332 = vmul.f32 %v1330, %v1331
    %v1333 = vsub.f32 1.0, %v1332
    %v1334 = vmul.f32 %v1331, %v1333
    %v1335 = vadd.f32 %v1331, %v1334
    %vm1336 = vweird.f32 %v1330
    %vm1337 = vweird.f32 %v1331
    %vm1338 = vmor %vm1336, %vm1337
    %v1339 = vsel %vm1338, %v1331, %v1335
    %v1340 = vand.u32 2147483647, %v1330
    %vm1341 = vcmp.eq.f32.partialorder %v1340, 8.507059e+37
    %v1342 = vand.u32 %v1330, 2147483648
    %v1343 = vor.u32 1.1754944e-38, %v1342
    %v1344 = vsel %vm1341, %v1343, %v1339
    %v1345 = vmul.f32 1.0, %v1344
    %v1346 = vtanh.pop %v1283
    %v1347 = vxor.u32 %v1307, 2147483648
    %v1348 = vmul.f32 %v1347, 1.442695
    %v1349 = vpow.pop %v1348
    %v1350 = vadd.f32 %v1349, 1.0
    %v1351 = vrcp.pop %v1350
    %v1352 = vmul.f32 %v1350, %v1351
    %v1353 = vsub.f32 1.0, %v1352
    %v1354 = vmul.f32 %v1351, %v1353
    %v1355 = vadd.f32 %v1351, %v1354
    %vm1356 = vweird.f32 %v1350
    %vm1357 = vweird.f32 %v1351
    %vm1358 = vmor %vm1356, %vm1357
    %v1359 = vsel %vm1358, %v1351, %v1355
    %v1360 = vand.u32 2147483647, %v1350
    %vm1361 = vcmp.eq.f32.partialorder %v1360, 8.507059e+37
    %v1362 = vand.u32 %v1350, 2147483648
    %v1363 = vor.u32 1.1754944e-38, %v1362
    %v1364 = vsel %vm1361, %v1363, %v1359
    %v1365 = vmul.f32 1.0, %v1364
    %v1367 = vrot.slane %v1204, 6
    %v1369 = vmul.f32 %v1345, %v1367
    %v1370 = vmul.f32 %v1326, %v1346
    %v1371 = vadd.f32 %v1369, %v1370
    %v1372 = vtanh.pop %v1371
    %v1373 = vmul.f32 %v1365, %v1372
    %1374 = vst.msk [vmem:[#allocation2 + $0x8] sm:$0x30] %vm717, %v1373
    %v1376 = vrot.slane %v1373, 4
    %v1377 = vsel %vm231, %v1376, 0
    %1379 = vmatpush.msra.mxu0 0.0
    %1380 = vmatpush.msra.mxu0 0.0
    %1381 = vmatpush.msra.mxu0 0.0
    %1382 = vmatpush.msra.mxu0 0.0
    %1383 = vmatpush.msra.mxu0 0.0
    %1384 = vmatpush.msra.mxu0 0.0
    %1385 = vmatpush.msra.mxu0 0.0
    %1386 = vmatpush.msra.mxu0 0.0
    %1387 = vmatpush.msra.mxu0 0.0
    %1388 = vmatpush.msra.mxu0 0.0
    %1389 = vmatpush.msra.mxu0 0.0
    %1390 = vmatpush.msra.mxu0 0.0
    %1391 = vmatpush.msra.mxu0 %v215
    %1392 = vmatpush.msra.mxu0 %v214
    %1393 = vmatpush.msra.mxu0 %v213
    %1394 = vmatpush.msra.mxu0 %v212
    %1395 = vmatmul.f32.gmra.mxu0 %v1377
    %v1396 = vpop.f32.mrf.mxu0
    %v1397 = vadd.f32 0.0, %v1396
    %1398 = vdwg.mxu0
    %v1400 = vrot.slane %v1397, 2
    %v1402 = vadd.f32 %v117, %v1400
    %1403 = vmatpush.msra.mxu0 0.0
    %1404 = vmatpush.msra.mxu0 0.0
    %1405 = vmatpush.msra.mxu0 0.0
    %1406 = vmatpush.msra.mxu0 0.0
    %1407 = vmatpush.msra.mxu0 0.0
    %1408 = vmatpush.msra.mxu0 0.0
    %1409 = vmatpush.msra.mxu0 0.0
    %1410 = vmatpush.msra.mxu0 0.0
    %1411 = vmatpush.msra.mxu0 0.0
    %1412 = vmatpush.msra.mxu0 0.0
    %1413 = vmatpush.msra.mxu0 0.0
    %1414 = vmatpush.msra.mxu0 0.0
    %1415 = vmatpush.msra.mxu0 %v220
    %1416 = vmatpush.msra.mxu0 %v219
    %1417 = vmatpush.msra.mxu0 %v218
    %1418 = vmatpush.msra.mxu0 %v217
    %1419 = vmatmul.f32.gmra.mxu0 %v1377
    %v1420 = vpop.f32.mrf.mxu0
    %v1421 = vadd.f32 0.0, %v1420
    %1422 = vdwg.mxu0
    %v1424 = vrot.slane %v1421, 2
    %v1426 = vadd.f32 %v148, %v1424
    %1427 = vmatpush.msra.mxu0 0.0
    %1428 = vmatpush.msra.mxu0 0.0
    %1429 = vmatpush.msra.mxu0 0.0
    %1430 = vmatpush.msra.mxu0 0.0
    %1431 = vmatpush.msra.mxu0 0.0
    %1432 = vmatpush.msra.mxu0 0.0
    %1433 = vmatpush.msra.mxu0 0.0
    %1434 = vmatpush.msra.mxu0 0.0
    %1435 = vmatpush.msra.mxu0 0.0
    %1436 = vmatpush.msra.mxu0 0.0
    %1437 = vmatpush.msra.mxu0 0.0
    %1438 = vmatpush.msra.mxu0 0.0
    %1439 = vmatpush.msra.mxu0 %v225
    %1440 = vmatpush.msra.mxu0 %v224
    %1441 = vmatpush.msra.mxu0 %v223
    %1442 = vmatpush.msra.mxu0 %v222
    %1443 = vmatmul.f32.gmra.mxu0 %v1377
    %v1444 = vpop.f32.mrf.mxu0
    %v1445 = vadd.f32 0.0, %v1444
    %1446 = vdwg.mxu0
    %v1448 = vrot.slane %v1445, 2
    %v1450 = vadd.f32 %v179, %v1448
    %1451 = vmatpush.msra.mxu0 0.0
    %1452 = vmatpush.msra.mxu0 0.0
    %1453 = vmatpush.msra.mxu0 0.0
    %1454 = vmatpush.msra.mxu0 0.0
    %1455 = vmatpush.msra.mxu0 0.0
    %1456 = vmatpush.msra.mxu0 0.0
    %1457 = vmatpush.msra.mxu0 0.0
    %1458 = vmatpush.msra.mxu0 0.0
    %1459 = vmatpush.msra.mxu0 0.0
    %1460 = vmatpush.msra.mxu0 0.0
    %1461 = vmatpush.msra.mxu0 0.0
    %1462 = vmatpush.msra.mxu0 0.0
    %1463 = vmatpush.msra.mxu0 %v230
    %1464 = vmatpush.msra.mxu0 %v229
    %1465 = vmatpush.msra.mxu0 %v228
    %1466 = vmatpush.msra.mxu0 %v227
    %1467 = vmatmul.f32.gmra.mxu0 %v1377
    %v1468 = vpop.f32.mrf.mxu0
    %v1469 = vadd.f32 0.0, %v1468
    %1470 = vdwg.mxu0
    %v1472 = vrot.slane %v1469, 2
    %v1474 = vadd.f32 %v210, %v1472
    %v1475 = vxor.u32 %v1402, 2147483648
    %v1476 = vmul.f32 %v1475, 1.442695
    %v1477 = vpow.pop %v1476
    %v1478 = vadd.f32 %v1477, 1.0
    %v1479 = vrcp.pop %v1478
    %v1480 = vmul.f32 %v1478, %v1479
    %v1481 = vsub.f32 1.0, %v1480
    %v1482 = vmul.f32 %v1479, %v1481
    %v1483 = vadd.f32 %v1479, %v1482
    %vm1484 = vweird.f32 %v1478
    %vm1485 = vweird.f32 %v1479
    %vm1486 = vmor %vm1484, %vm1485
    %v1487 = vsel %vm1486, %v1479, %v1483
    %v1488 = vand.u32 2147483647, %v1478
    %vm1489 = vcmp.eq.f32.partialorder %v1488, 8.507059e+37
    %v1490 = vand.u32 %v1478, 2147483648
    %v1491 = vor.u32 1.1754944e-38, %v1490
    %v1492 = vsel %vm1489, %v1491, %v1487
    %v1493 = vmul.f32 1.0, %v1492
    %v1494 = vxor.u32 %v1426, 2147483648
    %v1495 = vmul.f32 %v1494, 1.442695
    %v1496 = vpow.pop %v1495
    %v1497 = vadd.f32 %v1496, 1.0
    %v1498 = vrcp.pop %v1497
    %v1499 = vmul.f32 %v1497, %v1498
    %v1500 = vsub.f32 1.0, %v1499
    %v1501 = vmul.f32 %v1498, %v1500
    %v1502 = vadd.f32 %v1498, %v1501
    %vm1503 = vweird.f32 %v1497
    %vm1504 = vweird.f32 %v1498
    %vm1505 = vmor %vm1503, %vm1504
    %v1506 = vsel %vm1505, %v1498, %v1502
    %v1507 = vand.u32 2147483647, %v1497
    %vm1508 = vcmp.eq.f32.partialorder %v1507, 8.507059e+37
    %v1509 = vand.u32 %v1497, 2147483648
    %v1510 = vor.u32 1.1754944e-38, %v1509
    %v1511 = vsel %vm1508, %v1510, %v1506
    %v1512 = vmul.f32 1.0, %v1511
    %v1513 = vtanh.pop %v1450
    %v1514 = vxor.u32 %v1474, 2147483648
    %v1515 = vmul.f32 %v1514, 1.442695
    %v1516 = vpow.pop %v1515
    %v1517 = vadd.f32 %v1516, 1.0
    %v1518 = vrcp.pop %v1517
    %v1519 = vmul.f32 %v1517, %v1518
    %v1520 = vsub.f32 1.0, %v1519
    %v1521 = vmul.f32 %v1518, %v1520
    %v1522 = vadd.f32 %v1518, %v1521
    %vm1523 = vweird.f32 %v1517
    %vm1524 = vweird.f32 %v1518
    %vm1525 = vmor %vm1523, %vm1524
    %v1526 = vsel %vm1525, %v1518, %v1522
    %v1527 = vand.u32 2147483647, %v1517
    %vm1528 = vcmp.eq.f32.partialorder %v1527, 8.507059e+37
    %v1529 = vand.u32 %v1517, 2147483648
    %v1530 = vor.u32 1.1754944e-38, %v1529
    %v1531 = vsel %vm1528, %v1530, %v1526
    %v1532 = vmul.f32 1.0, %v1531
    %v1534 = vrot.slane %v1371, 6
    %v1536 = vmul.f32 %v1512, %v1534
    %v1537 = vmul.f32 %v1493, %v1513
    %v1538 = vadd.f32 %v1536, %v1537
    %v1539 = vtanh.pop %v1538
    %v1540 = vmul.f32 %v1532, %v1539
    %1541 = vst.msk [vmem:[#allocation2 + $0x8] sm:$0xc0] %vm885, %v1540
    %v1542 = vld [vmem:[#allocation2] sm:$0xff]
    %v1543 = vld [vmem:[#allocation2 + $0x8] sm:$0xff]
    %v1544 = vld [vmem:[#allocation6] sm:$0xff]
    %v1545 = vld [vmem:[#allocation6 + $0x8] sm:$0xff]
    %v1546 = vld [vmem:[#allocation6 + $0x10] sm:$0xff]
    %v1547 = vld [vmem:[#allocation6 + $0x18] sm:$0xff]
    %v1548 = vld [vmem:[%s6] sm:$0x1]
    %v1550 = vperm.slane %v1548, 0
    %v1553 = vsel %vm231, %v1542, 0
    %v1556 = vsel %vm231, %v1543, 0
    %1558 = vmatpush.msra.mxu0 0.0
    %1559 = vmatpush.msra.mxu0 0.0
    %1560 = vmatpush.msra.mxu0 0.0
    %1561 = vmatpush.msra.mxu0 0.0
    %1562 = vmatpush.msra.mxu0 0.0
    %1563 = vmatpush.msra.mxu0 0.0
    %1564 = vmatpush.msra.mxu0 0.0
    %1565 = vmatpush.msra.mxu0 0.0
    %1566 = vmatpush.msra.mxu0 0.0
    %1567 = vmatpush.msra.mxu0 0.0
    %1568 = vmatpush.msra.mxu0 0.0
    %1569 = vmatpush.msra.mxu0 0.0
    %1570 = vmatpush.msra.mxu0 %v1547
    %1571 = vmatpush.msra.mxu0 %v1546
    %1572 = vmatpush.msra.mxu0 %v1545
    %1573 = vmatpush.msra.mxu0 %v1544
    %1574 = vmatmul.f32.gmra.mxu0 %v1553
    %v1575 = vpop.f32.mrf.mxu0
    %v1576 = vadd.f32 %v1550, %v1575
    %1577 = vmatmul.f32.gmra.mxu0 %v1556
    %v1578 = vpop.f32.mrf.mxu0
    %v1579 = vadd.f32 %v1550, %v1578
    %1580 = vdwg.mxu0
    %s1581 = scalar_lea.vmem [#allocation6], 32
    %v1582 = vld [vmem:[%s1581] sm:$0xff]
    %v1583 = vld [vmem:[%s1581 + $0x8] sm:$0xff]
    %v1584 = vld [vmem:[%s1581 + $0x10] sm:$0xff]
    %v1585 = vld [vmem:[%s1581 + $0x18] sm:$0xff]
    %s1586 = scalar_lea.vmem %s6, 1
    %v1587 = vld [vmem:[%s1586] sm:$0x1]
    %v1589 = vperm.slane %v1587, 0
    %1591 = vmatpush.msra.mxu0 0.0
    %1592 = vmatpush.msra.mxu0 0.0
    %1593 = vmatpush.msra.mxu0 0.0
    %1594 = vmatpush.msra.mxu0 0.0
    %1595 = vmatpush.msra.mxu0 0.0
    %1596 = vmatpush.msra.mxu0 0.0
    %1597 = vmatpush.msra.mxu0 0.0
    %1598 = vmatpush.msra.mxu0 0.0
    %1599 = vmatpush.msra.mxu0 0.0
    %1600 = vmatpush.msra.mxu0 0.0
    %1601 = vmatpush.msra.mxu0 0.0
    %1602 = vmatpush.msra.mxu0 0.0
    %1603 = vmatpush.msra.mxu0 %v1585
    %1604 = vmatpush.msra.mxu0 %v1584
    %1605 = vmatpush.msra.mxu0 %v1583
    %1606 = vmatpush.msra.mxu0 %v1582
    %1607 = vmatmul.f32.gmra.mxu0 %v1553
    %v1608 = vpop.f32.mrf.mxu0
    %v1609 = vadd.f32 %v1589, %v1608
    %1610 = vmatmul.f32.gmra.mxu0 %v1556
    %v1611 = vpop.f32.mrf.mxu0
    %v1612 = vadd.f32 %v1589, %v1611
    %1613 = vdwg.mxu0
    %s1614 = scalar_lea.vmem [#allocation6], 64
    %v1615 = vld [vmem:[%s1614] sm:$0xff]
    %v1616 = vld [vmem:[%s1614 + $0x8] sm:$0xff]
    %v1617 = vld [vmem:[%s1614 + $0x10] sm:$0xff]
    %v1618 = vld [vmem:[%s1614 + $0x18] sm:$0xff]
    %s1619 = scalar_lea.vmem %s6, 2
    %v1620 = vld [vmem:[%s1619] sm:$0x1]
    %v1622 = vperm.slane %v1620, 0
    %1624 = vmatpush.msra.mxu0 0.0
    %1625 = vmatpush.msra.mxu0 0.0
    %1626 = vmatpush.msra.mxu0 0.0
    %1627 = vmatpush.msra.mxu0 0.0
    %1628 = vmatpush.msra.mxu0 0.0
    %1629 = vmatpush.msra.mxu0 0.0
    %1630 = vmatpush.msra.mxu0 0.0
    %1631 = vmatpush.msra.mxu0 0.0
    %1632 = vmatpush.msra.mxu0 0.0
    %1633 = vmatpush.msra.mxu0 0.0
    %1634 = vmatpush.msra.mxu0 0.0
    %1635 = vmatpush.msra.mxu0 0.0
    %1636 = vmatpush.msra.mxu0 %v1618
    %1637 = vmatpush.msra.mxu0 %v1617
    %1638 = vmatpush.msra.mxu0 %v1616
    %1639 = vmatpush.msra.mxu0 %v1615
    %1640 = vmatmul.f32.gmra.mxu0 %v1553
    %v1641 = vpop.f32.mrf.mxu0
    %v1642 = vadd.f32 %v1622, %v1641
    %1643 = vmatmul.f32.gmra.mxu0 %v1556
    %v1644 = vpop.f32.mrf.mxu0
    %v1645 = vadd.f32 %v1622, %v1644
    %1646 = vdwg.mxu0
    %s1647 = scalar_lea.vmem [#allocation6], 96
    %v1648 = vld [vmem:[%s1647] sm:$0xff]
    %v1649 = vld [vmem:[%s1647 + $0x8] sm:$0xff]
    %v1650 = vld [vmem:[%s1647 + $0x10] sm:$0xff]
    %v1651 = vld [vmem:[%s1647 + $0x18] sm:$0xff]
    %s1652 = scalar_lea.vmem %s6, 3
    %v1653 = vld [vmem:[%s1652] sm:$0x1]
    %v1655 = vperm.slane %v1653, 0
    %1657 = vmatpush.msra.mxu0 0.0
    %1658 = vmatpush.msra.mxu0 0.0
    %1659 = vmatpush.msra.mxu0 0.0
    %1660 = vmatpush.msra.mxu0 0.0
    %1661 = vmatpush.msra.mxu0 0.0
    %1662 = vmatpush.msra.mxu0 0.0
    %1663 = vmatpush.msra.mxu0 0.0
    %1664 = vmatpush.msra.mxu0 0.0
    %1665 = vmatpush.msra.mxu0 0.0
    %1666 = vmatpush.msra.mxu0 0.0
    %1667 = vmatpush.msra.mxu0 0.0
    %1668 = vmatpush.msra.mxu0 0.0
    %1669 = vmatpush.msra.mxu0 %v1651
    %1670 = vmatpush.msra.mxu0 %v1650
    %1671 = vmatpush.msra.mxu0 %v1649
    %1672 = vmatpush.msra.mxu0 %v1648
    %1673 = vmatmul.f32.gmra.mxu0 %v1553
    %v1674 = vpop.f32.mrf.mxu0
    %v1675 = vadd.f32 %v1655, %v1674
    %1676 = vmatmul.f32.gmra.mxu0 %v1556
    %v1677 = vpop.f32.mrf.mxu0
    %v1678 = vadd.f32 %v1655, %v1677
    %1679 = vdwg.mxu0
    %v1680 = vld [vmem:[#allocation8] sm:$0xff]
    %v1681 = vld [vmem:[#allocation8 + $0x8] sm:$0xff]
    %v1682 = vld [vmem:[#allocation8 + $0x10] sm:$0xff]
    %v1683 = vld [vmem:[#allocation8 + $0x18] sm:$0xff]
    %s1684 = scalar_lea.vmem [#allocation8], 32
    %v1685 = vld [vmem:[%s1684] sm:$0xff]
    %v1686 = vld [vmem:[%s1684 + $0x8] sm:$0xff]
    %v1687 = vld [vmem:[%s1684 + $0x10] sm:$0xff]
    %v1688 = vld [vmem:[%s1684 + $0x18] sm:$0xff]
    %s1689 = scalar_lea.vmem [#allocation8], 64
    %v1690 = vld [vmem:[%s1689] sm:$0xff]
    %v1691 = vld [vmem:[%s1689 + $0x8] sm:$0xff]
    %v1692 = vld [vmem:[%s1689 + $0x10] sm:$0xff]
    %v1693 = vld [vmem:[%s1689 + $0x18] sm:$0xff]
    %s1694 = scalar_lea.vmem [#allocation8], 96
    %v1695 = vld [vmem:[%s1694] sm:$0xff]
    %v1696 = vld [vmem:[%s1694 + $0x8] sm:$0xff]
    %v1697 = vld [vmem:[%s1694 + $0x10] sm:$0xff]
    %v1698 = vld [vmem:[%s1694 + $0x18] sm:$0xff]
    %1699 = vmatpush.msra.mxu0 0.0
    %1700 = vmatpush.msra.mxu0 0.0
    %1701 = vmatpush.msra.mxu0 0.0
    %1702 = vmatpush.msra.mxu0 0.0
    %1703 = vmatpush.msra.mxu0 0.0
    %1704 = vmatpush.msra.mxu0 0.0
    %1705 = vmatpush.msra.mxu0 0.0
    %1706 = vmatpush.msra.mxu0 0.0
    %1707 = vmatpush.msra.mxu0 0.0
    %1708 = vmatpush.msra.mxu0 0.0
    %1709 = vmatpush.msra.mxu0 0.0
    %1710 = vmatpush.msra.mxu0 0.0
    %1711 = vmatpush.msra.mxu0 %v1683
    %1712 = vmatpush.msra.mxu0 %v1682
    %1713 = vmatpush.msra.mxu0 %v1681
    %1714 = vmatpush.msra.mxu0 %v1680
    %1715 = vmatmul.f32.gmra.mxu0 %v233
    %v1716 = vpop.f32.mrf.mxu0
    %v1717 = vadd.f32 0.0, %v1716
    %1718 = vdwg.mxu0
    %v1719 = vadd.f32 %v1576, %v1717
    %1720 = vmatpush.msra.mxu0 0.0
    %1721 = vmatpush.msra.mxu0 0.0
    %1722 = vmatpush.msra.mxu0 0.0
    %1723 = vmatpush.msra.mxu0 0.0
    %1724 = vmatpush.msra.mxu0 0.0
    %1725 = vmatpush.msra.mxu0 0.0
    %1726 = vmatpush.msra.mxu0 0.0
    %1727 = vmatpush.msra.mxu0 0.0
    %1728 = vmatpush.msra.mxu0 0.0
    %1729 = vmatpush.msra.mxu0 0.0
    %1730 = vmatpush.msra.mxu0 0.0
    %1731 = vmatpush.msra.mxu0 0.0
    %1732 = vmatpush.msra.mxu0 %v1688
    %1733 = vmatpush.msra.mxu0 %v1687
    %1734 = vmatpush.msra.mxu0 %v1686
    %1735 = vmatpush.msra.mxu0 %v1685
    %1736 = vmatmul.f32.gmra.mxu0 %v233
    %v1737 = vpop.f32.mrf.mxu0
    %v1738 = vadd.f32 0.0, %v1737
    %1739 = vdwg.mxu0
    %v1740 = vadd.f32 %v1609, %v1738
    %1741 = vmatpush.msra.mxu0 0.0
    %1742 = vmatpush.msra.mxu0 0.0
    %1743 = vmatpush.msra.mxu0 0.0
    %1744 = vmatpush.msra.mxu0 0.0
    %1745 = vmatpush.msra.mxu0 0.0
    %1746 = vmatpush.msra.mxu0 0.0
    %1747 = vmatpush.msra.mxu0 0.0
    %1748 = vmatpush.msra.mxu0 0.0
    %1749 = vmatpush.msra.mxu0 0.0
    %1750 = vmatpush.msra.mxu0 0.0
    %1751 = vmatpush.msra.mxu0 0.0
    %1752 = vmatpush.msra.mxu0 0.0
    %1753 = vmatpush.msra.mxu0 %v1693
    %1754 = vmatpush.msra.mxu0 %v1692
    %1755 = vmatpush.msra.mxu0 %v1691
    %1756 = vmatpush.msra.mxu0 %v1690
    %1757 = vmatmul.f32.gmra.mxu0 %v233
    %v1758 = vpop.f32.mrf.mxu0
    %v1759 = vadd.f32 0.0, %v1758
    %1760 = vdwg.mxu0
    %v1761 = vadd.f32 %v1642, %v1759
    %1762 = vmatpush.msra.mxu0 0.0
    %1763 = vmatpush.msra.mxu0 0.0
    %1764 = vmatpush.msra.mxu0 0.0
    %1765 = vmatpush.msra.mxu0 0.0
    %1766 = vmatpush.msra.mxu0 0.0
    %1767 = vmatpush.msra.mxu0 0.0
    %1768 = vmatpush.msra.mxu0 0.0
    %1769 = vmatpush.msra.mxu0 0.0
    %1770 = vmatpush.msra.mxu0 0.0
    %1771 = vmatpush.msra.mxu0 0.0
    %1772 = vmatpush.msra.mxu0 0.0
    %1773 = vmatpush.msra.mxu0 0.0
    %1774 = vmatpush.msra.mxu0 %v1698
    %1775 = vmatpush.msra.mxu0 %v1697
    %1776 = vmatpush.msra.mxu0 %v1696
    %1777 = vmatpush.msra.mxu0 %v1695
    %1778 = vmatmul.f32.gmra.mxu0 %v233
    %v1779 = vpop.f32.mrf.mxu0
    %v1780 = vadd.f32 0.0, %v1779
    %1781 = vdwg.mxu0
    %v1782 = vadd.f32 %v1675, %v1780
    %v1783 = vxor.u32 %v1719, 2147483648
    %v1784 = vmul.f32 %v1783, 1.442695
    %v1785 = vpow.pop %v1784
    %v1786 = vadd.f32 %v1785, 1.0
    %v1787 = vrcp.pop %v1786
    %v1788 = vmul.f32 %v1786, %v1787
    %v1789 = vsub.f32 1.0, %v1788
    %v1790 = vmul.f32 %v1787, %v1789
    %v1791 = vadd.f32 %v1787, %v1790
    %vm1792 = vweird.f32 %v1786
    %vm1793 = vweird.f32 %v1787
    %vm1794 = vmor %vm1792, %vm1793
    %v1795 = vsel %vm1794, %v1787, %v1791
    %v1796 = vand.u32 2147483647, %v1786
    %vm1797 = vcmp.eq.f32.partialorder %v1796, 8.507059e+37
    %v1798 = vand.u32 %v1786, 2147483648
    %v1799 = vor.u32 1.1754944e-38, %v1798
    %v1800 = vsel %vm1797, %v1799, %v1795
    %v1801 = vmul.f32 1.0, %v1800
    %v1802 = vxor.u32 %v1740, 2147483648
    %v1803 = vmul.f32 %v1802, 1.442695
    %v1804 = vpow.pop %v1803
    %v1805 = vadd.f32 %v1804, 1.0
    %v1806 = vrcp.pop %v1805
    %v1807 = vmul.f32 %v1805, %v1806
    %v1808 = vsub.f32 1.0, %v1807
    %v1809 = vmul.f32 %v1806, %v1808
    %v1810 = vadd.f32 %v1806, %v1809
    %vm1811 = vweird.f32 %v1805
    %vm1812 = vweird.f32 %v1806
    %vm1813 = vmor %vm1811, %vm1812
    %v1814 = vsel %vm1813, %v1806, %v1810
    %v1815 = vand.u32 2147483647, %v1805
    %vm1816 = vcmp.eq.f32.partialorder %v1815, 8.507059e+37
    %v1817 = vand.u32 %v1805, 2147483648
    %v1818 = vor.u32 1.1754944e-38, %v1817
    %v1819 = vsel %vm1816, %v1818, %v1814
    %v1820 = vmul.f32 1.0, %v1819
    %v1821 = vtanh.pop %v1761
    %v1822 = vxor.u32 %v1782, 2147483648
    %v1823 = vmul.f32 %v1822, 1.442695
    %v1824 = vpow.pop %v1823
    %v1825 = vadd.f32 %v1824, 1.0
    %v1826 = vrcp.pop %v1825
    %v1827 = vmul.f32 %v1825, %v1826
    %v1828 = vsub.f32 1.0, %v1827
    %v1829 = vmul.f32 %v1826, %v1828
    %v1830 = vadd.f32 %v1826, %v1829
    %vm1831 = vweird.f32 %v1825
    %vm1832 = vweird.f32 %v1826
    %vm1833 = vmor %vm1831, %vm1832
    %v1834 = vsel %vm1833, %v1826, %v1830
    %v1835 = vand.u32 2147483647, %v1825
    %vm1836 = vcmp.eq.f32.partialorder %v1835, 8.507059e+37
    %v1837 = vand.u32 %v1825, 2147483648
    %v1838 = vor.u32 1.1754944e-38, %v1837
    %v1839 = vsel %vm1836, %v1838, %v1834
    %v1840 = vmul.f32 1.0, %v1839
    %v1841 = vmul.f32 %v1820, 0.0
    %v1842 = vmul.f32 %v1801, %v1821
    %v1843 = vadd.f32 %v1841, %v1842
    %v1844 = vtanh.pop %v1843
    %v1845 = vmul.f32 %v1840, %v1844
    %v1847 = vsel %vm231, %v1845, 0
    %1849 = vmatpush.msra.mxu0 0.0
    %1850 = vmatpush.msra.mxu0 0.0
    %1851 = vmatpush.msra.mxu0 0.0
    %1852 = vmatpush.msra.mxu0 0.0
    %1853 = vmatpush.msra.mxu0 0.0
    %1854 = vmatpush.msra.mxu0 0.0
    %1855 = vmatpush.msra.mxu0 0.0
    %1856 = vmatpush.msra.mxu0 0.0
    %1857 = vmatpush.msra.mxu0 0.0
    %1858 = vmatpush.msra.mxu0 0.0
    %1859 = vmatpush.msra.mxu0 0.0
    %1860 = vmatpush.msra.mxu0 0.0
    %1861 = vmatpush.msra.mxu0 %v1683
    %1862 = vmatpush.msra.mxu0 %v1682
    %1863 = vmatpush.msra.mxu0 %v1681
    %1864 = vmatpush.msra.mxu0 %v1680
    %1865 = vmatmul.f32.gmra.mxu0 %v1847
    %v1866 = vpop.f32.mrf.mxu0
    %v1867 = vadd.f32 0.0, %v1866
    %1868 = vdwg.mxu0
    %v1870 = vrot.slane %v1867, 6
    %v1872 = vadd.f32 %v1576, %v1870
    %1873 = vmatpush.msra.mxu0 0.0
    %1874 = vmatpush.msra.mxu0 0.0
    %1875 = vmatpush.msra.mxu0 0.0
    %1876 = vmatpush.msra.mxu0 0.0
    %1877 = vmatpush.msra.mxu0 0.0
    %1878 = vmatpush.msra.mxu0 0.0
    %1879 = vmatpush.msra.mxu0 0.0
    %1880 = vmatpush.msra.mxu0 0.0
    %1881 = vmatpush.msra.mxu0 0.0
    %1882 = vmatpush.msra.mxu0 0.0
    %1883 = vmatpush.msra.mxu0 0.0
    %1884 = vmatpush.msra.mxu0 0.0
    %1885 = vmatpush.msra.mxu0 %v1688
    %1886 = vmatpush.msra.mxu0 %v1687
    %1887 = vmatpush.msra.mxu0 %v1686
    %1888 = vmatpush.msra.mxu0 %v1685
    %1889 = vmatmul.f32.gmra.mxu0 %v1847
    %v1890 = vpop.f32.mrf.mxu0
    %v1891 = vadd.f32 0.0, %v1890
    %1892 = vdwg.mxu0
    %v1894 = vrot.slane %v1891, 6
    %v1896 = vadd.f32 %v1609, %v1894
    %1897 = vmatpush.msra.mxu0 0.0
    %1898 = vmatpush.msra.mxu0 0.0
    %1899 = vmatpush.msra.mxu0 0.0
    %1900 = vmatpush.msra.mxu0 0.0
    %1901 = vmatpush.msra.mxu0 0.0
    %1902 = vmatpush.msra.mxu0 0.0
    %1903 = vmatpush.msra.mxu0 0.0
    %1904 = vmatpush.msra.mxu0 0.0
    %1905 = vmatpush.msra.mxu0 0.0
    %1906 = vmatpush.msra.mxu0 0.0
    %1907 = vmatpush.msra.mxu0 0.0
    %1908 = vmatpush.msra.mxu0 0.0
    %1909 = vmatpush.msra.mxu0 %v1693
    %1910 = vmatpush.msra.mxu0 %v1692
    %1911 = vmatpush.msra.mxu0 %v1691
    %1912 = vmatpush.msra.mxu0 %v1690
    %1913 = vmatmul.f32.gmra.mxu0 %v1847
    %v1914 = vpop.f32.mrf.mxu0
    %v1915 = vadd.f32 0.0, %v1914
    %1916 = vdwg.mxu0
    %v1918 = vrot.slane %v1915, 6
    %v1920 = vadd.f32 %v1642, %v1918
    %1921 = vmatpush.msra.mxu0 0.0
    %1922 = vmatpush.msra.mxu0 0.0
    %1923 = vmatpush.msra.mxu0 0.0
    %1924 = vmatpush.msra.mxu0 0.0
    %1925 = vmatpush.msra.mxu0 0.0
    %1926 = vmatpush.msra.mxu0 0.0
    %1927 = vmatpush.msra.mxu0 0.0
    %1928 = vmatpush.msra.mxu0 0.0
    %1929 = vmatpush.msra.mxu0 0.0
    %1930 = vmatpush.msra.mxu0 0.0
    %1931 = vmatpush.msra.mxu0 0.0
    %1932 = vmatpush.msra.mxu0 0.0
    %1933 = vmatpush.msra.mxu0 %v1698
    %1934 = vmatpush.msra.mxu0 %v1697
    %1935 = vmatpush.msra.mxu0 %v1696
    %1936 = vmatpush.msra.mxu0 %v1695
    %1937 = vmatmul.f32.gmra.mxu0 %v1847
    %v1938 = vpop.f32.mrf.mxu0
    %v1939 = vadd.f32 0.0, %v1938
    %1940 = vdwg.mxu0
    %v1942 = vrot.slane %v1939, 6
    %v1944 = vadd.f32 %v1675, %v1942
    %v1945 = vxor.u32 %v1872, 2147483648
    %v1946 = vmul.f32 %v1945, 1.442695
    %v1947 = vpow.pop %v1946
    %v1948 = vadd.f32 %v1947, 1.0
    %v1949 = vrcp.pop %v1948
    %v1950 = vmul.f32 %v1948, %v1949
    %v1951 = vsub.f32 1.0, %v1950
    %v1952 = vmul.f32 %v1949, %v1951
    %v1953 = vadd.f32 %v1949, %v1952
    %vm1954 = vweird.f32 %v1948
    %vm1955 = vweird.f32 %v1949
    %vm1956 = vmor %vm1954, %vm1955
    %v1957 = vsel %vm1956, %v1949, %v1953
    %v1958 = vand.u32 2147483647, %v1948
    %vm1959 = vcmp.eq.f32.partialorder %v1958, 8.507059e+37
    %v1960 = vand.u32 %v1948, 2147483648
    %v1961 = vor.u32 1.1754944e-38, %v1960
    %v1962 = vsel %vm1959, %v1961, %v1957
    %v1963 = vmul.f32 1.0, %v1962
    %v1964 = vxor.u32 %v1896, 2147483648
    %v1965 = vmul.f32 %v1964, 1.442695
    %v1966 = vpow.pop %v1965
    %v1967 = vadd.f32 %v1966, 1.0
    %v1968 = vrcp.pop %v1967
    %v1969 = vmul.f32 %v1967, %v1968
    %v1970 = vsub.f32 1.0, %v1969
    %v1971 = vmul.f32 %v1968, %v1970
    %v1972 = vadd.f32 %v1968, %v1971
    %vm1973 = vweird.f32 %v1967
    %vm1974 = vweird.f32 %v1968
    %vm1975 = vmor %vm1973, %vm1974
    %v1976 = vsel %vm1975, %v1968, %v1972
    %v1977 = vand.u32 2147483647, %v1967
    %vm1978 = vcmp.eq.f32.partialorder %v1977, 8.507059e+37
    %v1979 = vand.u32 %v1967, 2147483648
    %v1980 = vor.u32 1.1754944e-38, %v1979
    %v1981 = vsel %vm1978, %v1980, %v1976
    %v1982 = vmul.f32 1.0, %v1981
    %v1983 = vtanh.pop %v1920
    %v1984 = vxor.u32 %v1944, 2147483648
    %v1985 = vmul.f32 %v1984, 1.442695
    %v1986 = vpow.pop %v1985
    %v1987 = vadd.f32 %v1986, 1.0
    %v1988 = vrcp.pop %v1987
    %v1989 = vmul.f32 %v1987, %v1988
    %v1990 = vsub.f32 1.0, %v1989
    %v1991 = vmul.f32 %v1988, %v1990
    %v1992 = vadd.f32 %v1988, %v1991
    %vm1993 = vweird.f32 %v1987
    %vm1994 = vweird.f32 %v1988
    %vm1995 = vmor %vm1993, %vm1994
    %v1996 = vsel %vm1995, %v1988, %v1992
    %v1997 = vand.u32 2147483647, %v1987
    %vm1998 = vcmp.eq.f32.partialorder %v1997, 8.507059e+37
    %v1999 = vand.u32 %v1987, 2147483648
    %v2000 = vor.u32 1.1754944e-38, %v1999
    %v2001 = vsel %vm1998, %v2000, %v1996
    %v2002 = vmul.f32 1.0, %v2001
    %v2004 = vrot.slane %v1843, 6
    %v2006 = vmul.f32 %v1982, %v2004
    %v2007 = vmul.f32 %v1963, %v1983
    %v2008 = vadd.f32 %v2006, %v2007
    %v2009 = vtanh.pop %v2008
    %v2010 = vmul.f32 %v2002, %v2009
    %v2012 = vrot.slane %v2010, 2
    %v2013 = vsel %vm231, %v2012, 0
    %2015 = vmatpush.msra.mxu0 0.0
    %2016 = vmatpush.msra.mxu0 0.0
    %2017 = vmatpush.msra.mxu0 0.0
    %2018 = vmatpush.msra.mxu0 0.0
    %2019 = vmatpush.msra.mxu0 0.0
    %2020 = vmatpush.msra.mxu0 0.0
    %2021 = vmatpush.msra.mxu0 0.0
    %2022 = vmatpush.msra.mxu0 0.0
    %2023 = vmatpush.msra.mxu0 0.0
    %2024 = vmatpush.msra.mxu0 0.0
    %2025 = vmatpush.msra.mxu0 0.0
    %2026 = vmatpush.msra.mxu0 0.0
    %2027 = vmatpush.msra.mxu0 %v1683
    %2028 = vmatpush.msra.mxu0 %v1682
    %2029 = vmatpush.msra.mxu0 %v1681
    %2030 = vmatpush.msra.mxu0 %v1680
    %2031 = vmatmul.f32.gmra.mxu0 %v2013
    %v2032 = vpop.f32.mrf.mxu0
    %v2033 = vadd.f32 0.0, %v2032
    %2034 = vdwg.mxu0
    %v2036 = vrot.slane %v2033, 4
    %v2038 = vadd.f32 %v1576, %v2036
    %2039 = vmatpush.msra.mxu0 0.0
    %2040 = vmatpush.msra.mxu0 0.0
    %2041 = vmatpush.msra.mxu0 0.0
    %2042 = vmatpush.msra.mxu0 0.0
    %2043 = vmatpush.msra.mxu0 0.0
    %2044 = vmatpush.msra.mxu0 0.0
    %2045 = vmatpush.msra.mxu0 0.0
    %2046 = vmatpush.msra.mxu0 0.0
    %2047 = vmatpush.msra.mxu0 0.0
    %2048 = vmatpush.msra.mxu0 0.0
    %2049 = vmatpush.msra.mxu0 0.0
    %2050 = vmatpush.msra.mxu0 0.0
    %2051 = vmatpush.msra.mxu0 %v1688
    %2052 = vmatpush.msra.mxu0 %v1687
    %2053 = vmatpush.msra.mxu0 %v1686
    %2054 = vmatpush.msra.mxu0 %v1685
    %2055 = vmatmul.f32.gmra.mxu0 %v2013
    %v2056 = vpop.f32.mrf.mxu0
    %v2057 = vadd.f32 0.0, %v2056
    %2058 = vdwg.mxu0
    %v2060 = vrot.slane %v2057, 4
    %v2062 = vadd.f32 %v1609, %v2060
    %2063 = vmatpush.msra.mxu0 0.0
    %2064 = vmatpush.msra.mxu0 0.0
    %2065 = vmatpush.msra.mxu0 0.0
    %2066 = vmatpush.msra.mxu0 0.0
    %2067 = vmatpush.msra.mxu0 0.0
    %2068 = vmatpush.msra.mxu0 0.0
    %2069 = vmatpush.msra.mxu0 0.0
    %2070 = vmatpush.msra.mxu0 0.0
    %2071 = vmatpush.msra.mxu0 0.0
    %2072 = vmatpush.msra.mxu0 0.0
    %2073 = vmatpush.msra.mxu0 0.0
    %2074 = vmatpush.msra.mxu0 0.0
    %2075 = vmatpush.msra.mxu0 %v1693
    %2076 = vmatpush.msra.mxu0 %v1692
    %2077 = vmatpush.msra.mxu0 %v1691
    %2078 = vmatpush.msra.mxu0 %v1690
    %2079 = vmatmul.f32.gmra.mxu0 %v2013
    %v2080 = vpop.f32.mrf.mxu0
    %v2081 = vadd.f32 0.0, %v2080
    %2082 = vdwg.mxu0
    %v2084 = vrot.slane %v2081, 4
    %v2086 = vadd.f32 %v1642, %v2084
    %2087 = vmatpush.msra.mxu0 0.0
    %2088 = vmatpush.msra.mxu0 0.0
    %2089 = vmatpush.msra.mxu0 0.0
    %2090 = vmatpush.msra.mxu0 0.0
    %2091 = vmatpush.msra.mxu0 0.0
    %2092 = vmatpush.msra.mxu0 0.0
    %2093 = vmatpush.msra.mxu0 0.0
    %2094 = vmatpush.msra.mxu0 0.0
    %2095 = vmatpush.msra.mxu0 0.0
    %2096 = vmatpush.msra.mxu0 0.0
    %2097 = vmatpush.msra.mxu0 0.0
    %2098 = vmatpush.msra.mxu0 0.0
    %2099 = vmatpush.msra.mxu0 %v1698
    %2100 = vmatpush.msra.mxu0 %v1697
    %2101 = vmatpush.msra.mxu0 %v1696
    %2102 = vmatpush.msra.mxu0 %v1695
    %2103 = vmatmul.f32.gmra.mxu0 %v2013
    %v2104 = vpop.f32.mrf.mxu0
    %v2105 = vadd.f32 0.0, %v2104
    %2106 = vdwg.mxu0
    %v2108 = vrot.slane %v2105, 4
    %v2110 = vadd.f32 %v1675, %v2108
    %v2111 = vxor.u32 %v2038, 2147483648
    %v2112 = vmul.f32 %v2111, 1.442695
    %v2113 = vpow.pop %v2112
    %v2114 = vadd.f32 %v2113, 1.0
    %v2115 = vrcp.pop %v2114
    %v2116 = vmul.f32 %v2114, %v2115
    %v2117 = vsub.f32 1.0, %v2116
    %v2118 = vmul.f32 %v2115, %v2117
    %v2119 = vadd.f32 %v2115, %v2118
    %vm2120 = vweird.f32 %v2114
    %vm2121 = vweird.f32 %v2115
    %vm2122 = vmor %vm2120, %vm2121
    %v2123 = vsel %vm2122, %v2115, %v2119
    %v2124 = vand.u32 2147483647, %v2114
    %vm2125 = vcmp.eq.f32.partialorder %v2124, 8.507059e+37
    %v2126 = vand.u32 %v2114, 2147483648
    %v2127 = vor.u32 1.1754944e-38, %v2126
    %v2128 = vsel %vm2125, %v2127, %v2123
    %v2129 = vmul.f32 1.0, %v2128
    %v2130 = vxor.u32 %v2062, 2147483648
    %v2131 = vmul.f32 %v2130, 1.442695
    %v2132 = vpow.pop %v2131
    %v2133 = vadd.f32 %v2132, 1.0
    %v2134 = vrcp.pop %v2133
    %v2135 = vmul.f32 %v2133, %v2134
    %v2136 = vsub.f32 1.0, %v2135
    %v2137 = vmul.f32 %v2134, %v2136
    %v2138 = vadd.f32 %v2134, %v2137
    %vm2139 = vweird.f32 %v2133
    %vm2140 = vweird.f32 %v2134
    %vm2141 = vmor %vm2139, %vm2140
    %v2142 = vsel %vm2141, %v2134, %v2138
    %v2143 = vand.u32 2147483647, %v2133
    %vm2144 = vcmp.eq.f32.partialorder %v2143, 8.507059e+37
    %v2145 = vand.u32 %v2133, 2147483648
    %v2146 = vor.u32 1.1754944e-38, %v2145
    %v2147 = vsel %vm2144, %v2146, %v2142
    %v2148 = vmul.f32 1.0, %v2147
    %v2149 = vtanh.pop %v2086
    %v2150 = vxor.u32 %v2110, 2147483648
    %v2151 = vmul.f32 %v2150, 1.442695
    %v2152 = vpow.pop %v2151
    %v2153 = vadd.f32 %v2152, 1.0
    %v2154 = vrcp.pop %v2153
    %v2155 = vmul.f32 %v2153, %v2154
    %v2156 = vsub.f32 1.0, %v2155
    %v2157 = vmul.f32 %v2154, %v2156
    %v2158 = vadd.f32 %v2154, %v2157
    %vm2159 = vweird.f32 %v2153
    %vm2160 = vweird.f32 %v2154
    %vm2161 = vmor %vm2159, %vm2160
    %v2162 = vsel %vm2161, %v2154, %v2158
    %v2163 = vand.u32 2147483647, %v2153
    %vm2164 = vcmp.eq.f32.partialorder %v2163, 8.507059e+37
    %v2165 = vand.u32 %v2153, 2147483648
    %v2166 = vor.u32 1.1754944e-38, %v2165
    %v2167 = vsel %vm2164, %v2166, %v2162
    %v2168 = vmul.f32 1.0, %v2167
    %v2170 = vrot.slane %v2008, 6
    %v2172 = vmul.f32 %v2148, %v2170
    %v2173 = vmul.f32 %v2129, %v2149
    %v2174 = vadd.f32 %v2172, %v2173
    %v2175 = vtanh.pop %v2174
    %v2176 = vmul.f32 %v2168, %v2175
    %v2178 = vrot.slane %v2176, 4
    %v2179 = vsel %vm231, %v2178, 0
    %2181 = vmatpush.msra.mxu0 0.0
    %2182 = vmatpush.msra.mxu0 0.0
    %2183 = vmatpush.msra.mxu0 0.0
    %2184 = vmatpush.msra.mxu0 0.0
    %2185 = vmatpush.msra.mxu0 0.0
    %2186 = vmatpush.msra.mxu0 0.0
    %2187 = vmatpush.msra.mxu0 0.0
    %2188 = vmatpush.msra.mxu0 0.0
    %2189 = vmatpush.msra.mxu0 0.0
    %2190 = vmatpush.msra.mxu0 0.0
    %2191 = vmatpush.msra.mxu0 0.0
    %2192 = vmatpush.msra.mxu0 0.0
    %2193 = vmatpush.msra.mxu0 %v1683
    %2194 = vmatpush.msra.mxu0 %v1682
    %2195 = vmatpush.msra.mxu0 %v1681
    %2196 = vmatpush.msra.mxu0 %v1680
    %2197 = vmatmul.f32.gmra.mxu0 %v2179
    %v2198 = vpop.f32.mrf.mxu0
    %v2199 = vadd.f32 0.0, %v2198
    %2200 = vdwg.mxu0
    %v2202 = vrot.slane %v2199, 2
    %v2204 = vadd.f32 %v1576, %v2202
    %2205 = vmatpush.msra.mxu0 0.0
    %2206 = vmatpush.msra.mxu0 0.0
    %2207 = vmatpush.msra.mxu0 0.0
    %2208 = vmatpush.msra.mxu0 0.0
    %2209 = vmatpush.msra.mxu0 0.0
    %2210 = vmatpush.msra.mxu0 0.0
    %2211 = vmatpush.msra.mxu0 0.0
    %2212 = vmatpush.msra.mxu0 0.0
    %2213 = vmatpush.msra.mxu0 0.0
    %2214 = vmatpush.msra.mxu0 0.0
    %2215 = vmatpush.msra.mxu0 0.0
    %2216 = vmatpush.msra.mxu0 0.0
    %2217 = vmatpush.msra.mxu0 %v1688
    %2218 = vmatpush.msra.mxu0 %v1687
    %2219 = vmatpush.msra.mxu0 %v1686
    %2220 = vmatpush.msra.mxu0 %v1685
    %2221 = vmatmul.f32.gmra.mxu0 %v2179
    %v2222 = vpop.f32.mrf.mxu0
    %v2223 = vadd.f32 0.0, %v2222
    %2224 = vdwg.mxu0
    %v2226 = vrot.slane %v2223, 2
    %v2228 = vadd.f32 %v1609, %v2226
    %2229 = vmatpush.msra.mxu0 0.0
    %2230 = vmatpush.msra.mxu0 0.0
    %2231 = vmatpush.msra.mxu0 0.0
    %2232 = vmatpush.msra.mxu0 0.0
    %2233 = vmatpush.msra.mxu0 0.0
    %2234 = vmatpush.msra.mxu0 0.0
    %2235 = vmatpush.msra.mxu0 0.0
    %2236 = vmatpush.msra.mxu0 0.0
    %2237 = vmatpush.msra.mxu0 0.0
    %2238 = vmatpush.msra.mxu0 0.0
    %2239 = vmatpush.msra.mxu0 0.0
    %2240 = vmatpush.msra.mxu0 0.0
    %2241 = vmatpush.msra.mxu0 %v1693
    %2242 = vmatpush.msra.mxu0 %v1692
    %2243 = vmatpush.msra.mxu0 %v1691
    %2244 = vmatpush.msra.mxu0 %v1690
    %2245 = vmatmul.f32.gmra.mxu0 %v2179
    %v2246 = vpop.f32.mrf.mxu0
    %v2247 = vadd.f32 0.0, %v2246
    %2248 = vdwg.mxu0
    %v2250 = vrot.slane %v2247, 2
    %v2252 = vadd.f32 %v1642, %v2250
    %2253 = vmatpush.msra.mxu0 0.0
    %2254 = vmatpush.msra.mxu0 0.0
    %2255 = vmatpush.msra.mxu0 0.0
    %2256 = vmatpush.msra.mxu0 0.0
    %2257 = vmatpush.msra.mxu0 0.0
    %2258 = vmatpush.msra.mxu0 0.0
    %2259 = vmatpush.msra.mxu0 0.0
    %2260 = vmatpush.msra.mxu0 0.0
    %2261 = vmatpush.msra.mxu0 0.0
    %2262 = vmatpush.msra.mxu0 0.0
    %2263 = vmatpush.msra.mxu0 0.0
    %2264 = vmatpush.msra.mxu0 0.0
    %2265 = vmatpush.msra.mxu0 %v1698
    %2266 = vmatpush.msra.mxu0 %v1697
    %2267 = vmatpush.msra.mxu0 %v1696
    %2268 = vmatpush.msra.mxu0 %v1695
    %2269 = vmatmul.f32.gmra.mxu0 %v2179
    %v2270 = vpop.f32.mrf.mxu0
    %v2271 = vadd.f32 0.0, %v2270
    %2272 = vdwg.mxu0
    %v2274 = vrot.slane %v2271, 2
    %v2276 = vadd.f32 %v1675, %v2274
    %v2277 = vxor.u32 %v2204, 2147483648
    %v2278 = vmul.f32 %v2277, 1.442695
    %v2279 = vpow.pop %v2278
    %v2280 = vadd.f32 %v2279, 1.0
    %v2281 = vrcp.pop %v2280
    %v2282 = vmul.f32 %v2280, %v2281
    %v2283 = vsub.f32 1.0, %v2282
    %v2284 = vmul.f32 %v2281, %v2283
    %v2285 = vadd.f32 %v2281, %v2284
    %vm2286 = vweird.f32 %v2280
    %vm2287 = vweird.f32 %v2281
    %vm2288 = vmor %vm2286, %vm2287
    %v2289 = vsel %vm2288, %v2281, %v2285
    %v2290 = vand.u32 2147483647, %v2280
    %vm2291 = vcmp.eq.f32.partialorder %v2290, 8.507059e+37
    %v2292 = vand.u32 %v2280, 2147483648
    %v2293 = vor.u32 1.1754944e-38, %v2292
    %v2294 = vsel %vm2291, %v2293, %v2289
    %v2295 = vmul.f32 1.0, %v2294
    %v2296 = vxor.u32 %v2228, 2147483648
    %v2297 = vmul.f32 %v2296, 1.442695
    %v2298 = vpow.pop %v2297
    %v2299 = vadd.f32 %v2298, 1.0
    %v2300 = vrcp.pop %v2299
    %v2301 = vmul.f32 %v2299, %v2300
    %v2302 = vsub.f32 1.0, %v2301
    %v2303 = vmul.f32 %v2300, %v2302
    %v2304 = vadd.f32 %v2300, %v2303
    %vm2305 = vweird.f32 %v2299
    %vm2306 = vweird.f32 %v2300
    %vm2307 = vmor %vm2305, %vm2306
    %v2308 = vsel %vm2307, %v2300, %v2304
    %v2309 = vand.u32 2147483647, %v2299
    %vm2310 = vcmp.eq.f32.partialorder %v2309, 8.507059e+37
    %v2311 = vand.u32 %v2299, 2147483648
    %v2312 = vor.u32 1.1754944e-38, %v2311
    %v2313 = vsel %vm2310, %v2312, %v2308
    %v2314 = vmul.f32 1.0, %v2313
    %v2315 = vtanh.pop %v2252
    %v2316 = vxor.u32 %v2276, 2147483648
    %v2317 = vmul.f32 %v2316, 1.442695
    %v2318 = vpow.pop %v2317
    %v2319 = vadd.f32 %v2318, 1.0
    %v2320 = vrcp.pop %v2319
    %v2321 = vmul.f32 %v2319, %v2320
    %v2322 = vsub.f32 1.0, %v2321
    %v2323 = vmul.f32 %v2320, %v2322
    %v2324 = vadd.f32 %v2320, %v2323
    %vm2325 = vweird.f32 %v2319
    %vm2326 = vweird.f32 %v2320
    %vm2327 = vmor %vm2325, %vm2326
    %v2328 = vsel %vm2327, %v2320, %v2324
    %v2329 = vand.u32 2147483647, %v2319
    %vm2330 = vcmp.eq.f32.partialorder %v2329, 8.507059e+37
    %v2331 = vand.u32 %v2319, 2147483648
    %v2332 = vor.u32 1.1754944e-38, %v2331
    %v2333 = vsel %vm2330, %v2332, %v2328
    %v2334 = vmul.f32 1.0, %v2333
    %v2336 = vrot.slane %v2174, 6
    %v2338 = vmul.f32 %v2314, %v2336
    %v2339 = vmul.f32 %v2295, %v2315
    %v2340 = vadd.f32 %v2338, %v2339
    %v2341 = vtanh.pop %v2340
    %v2342 = vmul.f32 %v2334, %v2341
    %v2344 = vrot.slane %v2342, 6
    %v2345 = vsel %vm231, %v2344, 0
    %2347 = vmatpush.msra.mxu0 0.0
    %2348 = vmatpush.msra.mxu0 0.0
    %2349 = vmatpush.msra.mxu0 0.0
    %2350 = vmatpush.msra.mxu0 0.0
    %2351 = vmatpush.msra.mxu0 0.0
    %2352 = vmatpush.msra.mxu0 0.0
    %2353 = vmatpush.msra.mxu0 0.0
    %2354 = vmatpush.msra.mxu0 0.0
    %2355 = vmatpush.msra.mxu0 0.0
    %2356 = vmatpush.msra.mxu0 0.0
    %2357 = vmatpush.msra.mxu0 0.0
    %2358 = vmatpush.msra.mxu0 0.0
    %2359 = vmatpush.msra.mxu0 %v1683
    %2360 = vmatpush.msra.mxu0 %v1682
    %2361 = vmatpush.msra.mxu0 %v1681
    %2362 = vmatpush.msra.mxu0 %v1680
    %2363 = vmatmul.f32.gmra.mxu0 %v2345
    %v2364 = vpop.f32.mrf.mxu0
    %v2365 = vadd.f32 0.0, %v2364
    %2366 = vdwg.mxu0
    %v2367 = vadd.f32 %v1579, %v2365
    %2368 = vmatpush.msra.mxu0 0.0
    %2369 = vmatpush.msra.mxu0 0.0
    %2370 = vmatpush.msra.mxu0 0.0
    %2371 = vmatpush.msra.mxu0 0.0
    %2372 = vmatpush.msra.mxu0 0.0
    %2373 = vmatpush.msra.mxu0 0.0
    %2374 = vmatpush.msra.mxu0 0.0
    %2375 = vmatpush.msra.mxu0 0.0
    %2376 = vmatpush.msra.mxu0 0.0
    %2377 = vmatpush.msra.mxu0 0.0
    %2378 = vmatpush.msra.mxu0 0.0
    %2379 = vmatpush.msra.mxu0 0.0
    %2380 = vmatpush.msra.mxu0 %v1688
    %2381 = vmatpush.msra.mxu0 %v1687
    %2382 = vmatpush.msra.mxu0 %v1686
    %2383 = vmatpush.msra.mxu0 %v1685
    %2384 = vmatmul.f32.gmra.mxu0 %v2345
    %v2385 = vpop.f32.mrf.mxu0
    %v2386 = vadd.f32 0.0, %v2385
    %2387 = vdwg.mxu0
    %v2388 = vadd.f32 %v1612, %v2386
    %2389 = vmatpush.msra.mxu0 0.0
    %2390 = vmatpush.msra.mxu0 0.0
    %2391 = vmatpush.msra.mxu0 0.0
    %2392 = vmatpush.msra.mxu0 0.0
    %2393 = vmatpush.msra.mxu0 0.0
    %2394 = vmatpush.msra.mxu0 0.0
    %2395 = vmatpush.msra.mxu0 0.0
    %2396 = vmatpush.msra.mxu0 0.0
    %2397 = vmatpush.msra.mxu0 0.0
    %2398 = vmatpush.msra.mxu0 0.0
    %2399 = vmatpush.msra.mxu0 0.0
    %2400 = vmatpush.msra.mxu0 0.0
    %2401 = vmatpush.msra.mxu0 %v1693
    %2402 = vmatpush.msra.mxu0 %v1692
    %2403 = vmatpush.msra.mxu0 %v1691
    %2404 = vmatpush.msra.mxu0 %v1690
    %2405 = vmatmul.f32.gmra.mxu0 %v2345
    %v2406 = vpop.f32.mrf.mxu0
    %v2407 = vadd.f32 0.0, %v2406
    %2408 = vdwg.mxu0
    %v2409 = vadd.f32 %v1645, %v2407
    %2410 = vmatpush.msra.mxu0 0.0
    %2411 = vmatpush.msra.mxu0 0.0
    %2412 = vmatpush.msra.mxu0 0.0
    %2413 = vmatpush.msra.mxu0 0.0
    %2414 = vmatpush.msra.mxu0 0.0
    %2415 = vmatpush.msra.mxu0 0.0
    %2416 = vmatpush.msra.mxu0 0.0
    %2417 = vmatpush.msra.mxu0 0.0
    %2418 = vmatpush.msra.mxu0 0.0
    %2419 = vmatpush.msra.mxu0 0.0
    %2420 = vmatpush.msra.mxu0 0.0
    %2421 = vmatpush.msra.mxu0 0.0
    %2422 = vmatpush.msra.mxu0 %v1698
    %2423 = vmatpush.msra.mxu0 %v1697
    %2424 = vmatpush.msra.mxu0 %v1696
    %2425 = vmatpush.msra.mxu0 %v1695
    %2426 = vmatmul.f32.gmra.mxu0 %v2345
    %v2427 = vpop.f32.mrf.mxu0
    %v2428 = vadd.f32 0.0, %v2427
    %2429 = vdwg.mxu0
    %v2430 = vadd.f32 %v1678, %v2428
    %v2431 = vxor.u32 %v2367, 2147483648
    %v2432 = vmul.f32 %v2431, 1.442695
    %v2433 = vpow.pop %v2432
    %v2434 = vadd.f32 %v2433, 1.0
    %v2435 = vrcp.pop %v2434
    %v2436 = vmul.f32 %v2434, %v2435
    %v2437 = vsub.f32 1.0, %v2436
    %v2438 = vmul.f32 %v2435, %v2437
    %v2439 = vadd.f32 %v2435, %v2438
    %vm2440 = vweird.f32 %v2434
    %vm2441 = vweird.f32 %v2435
    %vm2442 = vmor %vm2440, %vm2441
    %v2443 = vsel %vm2442, %v2435, %v2439
    %v2444 = vand.u32 2147483647, %v2434
    %vm2445 = vcmp.eq.f32.partialorder %v2444, 8.507059e+37
    %v2446 = vand.u32 %v2434, 2147483648
    %v2447 = vor.u32 1.1754944e-38, %v2446
    %v2448 = vsel %vm2445, %v2447, %v2443
    %v2449 = vmul.f32 1.0, %v2448
    %v2450 = vxor.u32 %v2388, 2147483648
    %v2451 = vmul.f32 %v2450, 1.442695
    %v2452 = vpow.pop %v2451
    %v2453 = vadd.f32 %v2452, 1.0
    %v2454 = vrcp.pop %v2453
    %v2455 = vmul.f32 %v2453, %v2454
    %v2456 = vsub.f32 1.0, %v2455
    %v2457 = vmul.f32 %v2454, %v2456
    %v2458 = vadd.f32 %v2454, %v2457
    %vm2459 = vweird.f32 %v2453
    %vm2460 = vweird.f32 %v2454
    %vm2461 = vmor %vm2459, %vm2460
    %v2462 = vsel %vm2461, %v2454, %v2458
    %v2463 = vand.u32 2147483647, %v2453
    %vm2464 = vcmp.eq.f32.partialorder %v2463, 8.507059e+37
    %v2465 = vand.u32 %v2453, 2147483648
    %v2466 = vor.u32 1.1754944e-38, %v2465
    %v2467 = vsel %vm2464, %v2466, %v2462
    %v2468 = vmul.f32 1.0, %v2467
    %v2469 = vtanh.pop %v2409
    %v2470 = vxor.u32 %v2430, 2147483648
    %v2471 = vmul.f32 %v2470, 1.442695
    %v2472 = vpow.pop %v2471
    %v2473 = vadd.f32 %v2472, 1.0
    %v2474 = vrcp.pop %v2473
    %v2475 = vmul.f32 %v2473, %v2474
    %v2476 = vsub.f32 1.0, %v2475
    %v2477 = vmul.f32 %v2474, %v2476
    %v2478 = vadd.f32 %v2474, %v2477
    %vm2479 = vweird.f32 %v2473
    %vm2480 = vweird.f32 %v2474
    %vm2481 = vmor %vm2479, %vm2480
    %v2482 = vsel %vm2481, %v2474, %v2478
    %v2483 = vand.u32 2147483647, %v2473
    %vm2484 = vcmp.eq.f32.partialorder %v2483, 8.507059e+37
    %v2485 = vand.u32 %v2473, 2147483648
    %v2486 = vor.u32 1.1754944e-38, %v2485
    %v2487 = vsel %vm2484, %v2486, %v2482
    %v2488 = vmul.f32 1.0, %v2487
    %v2490 = vrot.slane %v2340, 6
    %v2492 = vmul.f32 %v2468, %v2490
    %v2493 = vmul.f32 %v2449, %v2469
    %v2494 = vadd.f32 %v2492, %v2493
    %v2495 = vtanh.pop %v2494
    %v2496 = vmul.f32 %v2488, %v2495
    %v2498 = vsel %vm231, %v2496, 0
    %2500 = vmatpush.msra.mxu0 0.0
    %2501 = vmatpush.msra.mxu0 0.0
    %2502 = vmatpush.msra.mxu0 0.0
    %2503 = vmatpush.msra.mxu0 0.0
    %2504 = vmatpush.msra.mxu0 0.0
    %2505 = vmatpush.msra.mxu0 0.0
    %2506 = vmatpush.msra.mxu0 0.0
    %2507 = vmatpush.msra.mxu0 0.0
    %2508 = vmatpush.msra.mxu0 0.0
    %2509 = vmatpush.msra.mxu0 0.0
    %2510 = vmatpush.msra.mxu0 0.0
    %2511 = vmatpush.msra.mxu0 0.0
    %2512 = vmatpush.msra.mxu0 %v1683
    %2513 = vmatpush.msra.mxu0 %v1682
    %2514 = vmatpush.msra.mxu0 %v1681
    %2515 = vmatpush.msra.mxu0 %v1680
    %2516 = vmatmul.f32.gmra.mxu0 %v2498
    %v2517 = vpop.f32.mrf.mxu0
    %v2518 = vadd.f32 0.0, %v2517
    %2519 = vdwg.mxu0
    %v2521 = vrot.slane %v2518, 6
    %v2523 = vadd.f32 %v1579, %v2521
    %2524 = vmatpush.msra.mxu0 0.0
    %2525 = vmatpush.msra.mxu0 0.0
    %2526 = vmatpush.msra.mxu0 0.0
    %2527 = vmatpush.msra.mxu0 0.0
    %2528 = vmatpush.msra.mxu0 0.0
    %2529 = vmatpush.msra.mxu0 0.0
    %2530 = vmatpush.msra.mxu0 0.0
    %2531 = vmatpush.msra.mxu0 0.0
    %2532 = vmatpush.msra.mxu0 0.0
    %2533 = vmatpush.msra.mxu0 0.0
    %2534 = vmatpush.msra.mxu0 0.0
    %2535 = vmatpush.msra.mxu0 0.0
    %2536 = vmatpush.msra.mxu0 %v1688
    %2537 = vmatpush.msra.mxu0 %v1687
    %2538 = vmatpush.msra.mxu0 %v1686
    %2539 = vmatpush.msra.mxu0 %v1685
    %2540 = vmatmul.f32.gmra.mxu0 %v2498
    %v2541 = vpop.f32.mrf.mxu0
    %v2542 = vadd.f32 0.0, %v2541
    %2543 = vdwg.mxu0
    %v2545 = vrot.slane %v2542, 6
    %v2547 = vadd.f32 %v1612, %v2545
    %2548 = vmatpush.msra.mxu0 0.0
    %2549 = vmatpush.msra.mxu0 0.0
    %2550 = vmatpush.msra.mxu0 0.0
    %2551 = vmatpush.msra.mxu0 0.0
    %2552 = vmatpush.msra.mxu0 0.0
    %2553 = vmatpush.msra.mxu0 0.0
    %2554 = vmatpush.msra.mxu0 0.0
    %2555 = vmatpush.msra.mxu0 0.0
    %2556 = vmatpush.msra.mxu0 0.0
    %2557 = vmatpush.msra.mxu0 0.0
    %2558 = vmatpush.msra.mxu0 0.0
    %2559 = vmatpush.msra.mxu0 0.0
    %2560 = vmatpush.msra.mxu0 %v1693
    %2561 = vmatpush.msra.mxu0 %v1692
    %2562 = vmatpush.msra.mxu0 %v1691
    %2563 = vmatpush.msra.mxu0 %v1690
    %2564 = vmatmul.f32.gmra.mxu0 %v2498
    %v2565 = vpop.f32.mrf.mxu0
    %v2566 = vadd.f32 0.0, %v2565
    %2567 = vdwg.mxu0
    %v2569 = vrot.slane %v2566, 6
    %v2571 = vadd.f32 %v1645, %v2569
    %2572 = vmatpush.msra.mxu0 0.0
    %2573 = vmatpush.msra.mxu0 0.0
    %2574 = vmatpush.msra.mxu0 0.0
    %2575 = vmatpush.msra.mxu0 0.0
    %2576 = vmatpush.msra.mxu0 0.0
    %2577 = vmatpush.msra.mxu0 0.0
    %2578 = vmatpush.msra.mxu0 0.0
    %2579 = vmatpush.msra.mxu0 0.0
    %2580 = vmatpush.msra.mxu0 0.0
    %2581 = vmatpush.msra.mxu0 0.0
    %2582 = vmatpush.msra.mxu0 0.0
    %2583 = vmatpush.msra.mxu0 0.0
    %2584 = vmatpush.msra.mxu0 %v1698
    %2585 = vmatpush.msra.mxu0 %v1697
    %2586 = vmatpush.msra.mxu0 %v1696
    %2587 = vmatpush.msra.mxu0 %v1695
    %2588 = vmatmul.f32.gmra.mxu0 %v2498
    %v2589 = vpop.f32.mrf.mxu0
    %v2590 = vadd.f32 0.0, %v2589
    %2591 = vdwg.mxu0
    %v2593 = vrot.slane %v2590, 6
    %v2595 = vadd.f32 %v1678, %v2593
    %v2596 = vxor.u32 %v2523, 2147483648
    %v2597 = vmul.f32 %v2596, 1.442695
    %v2598 = vpow.pop %v2597
    %v2599 = vadd.f32 %v2598, 1.0
    %v2600 = vrcp.pop %v2599
    %v2601 = vmul.f32 %v2599, %v2600
    %v2602 = vsub.f32 1.0, %v2601
    %v2603 = vmul.f32 %v2600, %v2602
    %v2604 = vadd.f32 %v2600, %v2603
    %vm2605 = vweird.f32 %v2599
    %vm2606 = vweird.f32 %v2600
    %vm2607 = vmor %vm2605, %vm2606
    %v2608 = vsel %vm2607, %v2600, %v2604
    %v2609 = vand.u32 2147483647, %v2599
    %vm2610 = vcmp.eq.f32.partialorder %v2609, 8.507059e+37
    %v2611 = vand.u32 %v2599, 2147483648
    %v2612 = vor.u32 1.1754944e-38, %v2611
    %v2613 = vsel %vm2610, %v2612, %v2608
    %v2614 = vmul.f32 1.0, %v2613
    %v2615 = vxor.u32 %v2547, 2147483648
    %v2616 = vmul.f32 %v2615, 1.442695
    %v2617 = vpow.pop %v2616
    %v2618 = vadd.f32 %v2617, 1.0
    %v2619 = vrcp.pop %v2618
    %v2620 = vmul.f32 %v2618, %v2619
    %v2621 = vsub.f32 1.0, %v2620
    %v2622 = vmul.f32 %v2619, %v2621
    %v2623 = vadd.f32 %v2619, %v2622
    %vm2624 = vweird.f32 %v2618
    %vm2625 = vweird.f32 %v2619
    %vm2626 = vmor %vm2624, %vm2625
    %v2627 = vsel %vm2626, %v2619, %v2623
    %v2628 = vand.u32 2147483647, %v2618
    %vm2629 = vcmp.eq.f32.partialorder %v2628, 8.507059e+37
    %v2630 = vand.u32 %v2618, 2147483648
    %v2631 = vor.u32 1.1754944e-38, %v2630
    %v2632 = vsel %vm2629, %v2631, %v2627
    %v2633 = vmul.f32 1.0, %v2632
    %v2634 = vtanh.pop %v2571
    %v2635 = vxor.u32 %v2595, 2147483648
    %v2636 = vmul.f32 %v2635, 1.442695
    %v2637 = vpow.pop %v2636
    %v2638 = vadd.f32 %v2637, 1.0
    %v2639 = vrcp.pop %v2638
    %v2640 = vmul.f32 %v2638, %v2639
    %v2641 = vsub.f32 1.0, %v2640
    %v2642 = vmul.f32 %v2639, %v2641
    %v2643 = vadd.f32 %v2639, %v2642
    %vm2644 = vweird.f32 %v2638
    %vm2645 = vweird.f32 %v2639
    %vm2646 = vmor %vm2644, %vm2645
    %v2647 = vsel %vm2646, %v2639, %v2643
    %v2648 = vand.u32 2147483647, %v2638
    %vm2649 = vcmp.eq.f32.partialorder %v2648, 8.507059e+37
    %v2650 = vand.u32 %v2638, 2147483648
    %v2651 = vor.u32 1.1754944e-38, %v2650
    %v2652 = vsel %vm2649, %v2651, %v2647
    %v2653 = vmul.f32 1.0, %v2652
    %v2655 = vrot.slane %v2494, 6
    %v2657 = vmul.f32 %v2633, %v2655
    %v2658 = vmul.f32 %v2614, %v2634
    %v2659 = vadd.f32 %v2657, %v2658
    %v2660 = vtanh.pop %v2659
    %v2661 = vmul.f32 %v2653, %v2660
    %v2663 = vrot.slane %v2661, 2
    %v2664 = vsel %vm231, %v2663, 0
    %2666 = vmatpush.msra.mxu0 0.0
    %2667 = vmatpush.msra.mxu0 0.0
    %2668 = vmatpush.msra.mxu0 0.0
    %2669 = vmatpush.msra.mxu0 0.0
    %2670 = vmatpush.msra.mxu0 0.0
    %2671 = vmatpush.msra.mxu0 0.0
    %2672 = vmatpush.msra.mxu0 0.0
    %2673 = vmatpush.msra.mxu0 0.0
    %2674 = vmatpush.msra.mxu0 0.0
    %2675 = vmatpush.msra.mxu0 0.0
    %2676 = vmatpush.msra.mxu0 0.0
    %2677 = vmatpush.msra.mxu0 0.0
    %2678 = vmatpush.msra.mxu0 %v1683
    %2679 = vmatpush.msra.mxu0 %v1682
    %2680 = vmatpush.msra.mxu0 %v1681
    %2681 = vmatpush.msra.mxu0 %v1680
    %2682 = vmatmul.f32.gmra.mxu0 %v2664
    %v2683 = vpop.f32.mrf.mxu0
    %v2684 = vadd.f32 0.0, %v2683
    %2685 = vdwg.mxu0
    %v2687 = vrot.slane %v2684, 4
    %v2689 = vadd.f32 %v1579, %v2687
    %2690 = vmatpush.msra.mxu0 0.0
    %2691 = vmatpush.msra.mxu0 0.0
    %2692 = vmatpush.msra.mxu0 0.0
    %2693 = vmatpush.msra.mxu0 0.0
    %2694 = vmatpush.msra.mxu0 0.0
    %2695 = vmatpush.msra.mxu0 0.0
    %2696 = vmatpush.msra.mxu0 0.0
    %2697 = vmatpush.msra.mxu0 0.0
    %2698 = vmatpush.msra.mxu0 0.0
    %2699 = vmatpush.msra.mxu0 0.0
    %2700 = vmatpush.msra.mxu0 0.0
    %2701 = vmatpush.msra.mxu0 0.0
    %2702 = vmatpush.msra.mxu0 %v1688
    %2703 = vmatpush.msra.mxu0 %v1687
    %2704 = vmatpush.msra.mxu0 %v1686
    %2705 = vmatpush.msra.mxu0 %v1685
    %2706 = vmatmul.f32.gmra.mxu0 %v2664
    %v2707 = vpop.f32.mrf.mxu0
    %v2708 = vadd.f32 0.0, %v2707
    %2709 = vdwg.mxu0
    %v2711 = vrot.slane %v2708, 4
    %v2713 = vadd.f32 %v1612, %v2711
    %2714 = vmatpush.msra.mxu0 0.0
    %2715 = vmatpush.msra.mxu0 0.0
    %2716 = vmatpush.msra.mxu0 0.0
    %2717 = vmatpush.msra.mxu0 0.0
    %2718 = vmatpush.msra.mxu0 0.0
    %2719 = vmatpush.msra.mxu0 0.0
    %2720 = vmatpush.msra.mxu0 0.0
    %2721 = vmatpush.msra.mxu0 0.0
    %2722 = vmatpush.msra.mxu0 0.0
    %2723 = vmatpush.msra.mxu0 0.0
    %2724 = vmatpush.msra.mxu0 0.0
    %2725 = vmatpush.msra.mxu0 0.0
    %2726 = vmatpush.msra.mxu0 %v1693
    %2727 = vmatpush.msra.mxu0 %v1692
    %2728 = vmatpush.msra.mxu0 %v1691
    %2729 = vmatpush.msra.mxu0 %v1690
    %2730 = vmatmul.f32.gmra.mxu0 %v2664
    %v2731 = vpop.f32.mrf.mxu0
    %v2732 = vadd.f32 0.0, %v2731
    %2733 = vdwg.mxu0
    %v2735 = vrot.slane %v2732, 4
    %v2737 = vadd.f32 %v1645, %v2735
    %2738 = vmatpush.msra.mxu0 0.0
    %2739 = vmatpush.msra.mxu0 0.0
    %2740 = vmatpush.msra.mxu0 0.0
    %2741 = vmatpush.msra.mxu0 0.0
    %2742 = vmatpush.msra.mxu0 0.0
    %2743 = vmatpush.msra.mxu0 0.0
    %2744 = vmatpush.msra.mxu0 0.0
    %2745 = vmatpush.msra.mxu0 0.0
    %2746 = vmatpush.msra.mxu0 0.0
    %2747 = vmatpush.msra.mxu0 0.0
    %2748 = vmatpush.msra.mxu0 0.0
    %2749 = vmatpush.msra.mxu0 0.0
    %2750 = vmatpush.msra.mxu0 %v1698
    %2751 = vmatpush.msra.mxu0 %v1697
    %2752 = vmatpush.msra.mxu0 %v1696
    %2753 = vmatpush.msra.mxu0 %v1695
    %2754 = vmatmul.f32.gmra.mxu0 %v2664
    %v2755 = vpop.f32.mrf.mxu0
    %v2756 = vadd.f32 0.0, %v2755
    %2757 = vdwg.mxu0
    %v2759 = vrot.slane %v2756, 4
    %v2761 = vadd.f32 %v1678, %v2759
    %v2762 = vxor.u32 %v2689, 2147483648
    %v2763 = vmul.f32 %v2762, 1.442695
    %v2764 = vpow.pop %v2763
    %v2765 = vadd.f32 %v2764, 1.0
    %v2766 = vrcp.pop %v2765
    %v2767 = vmul.f32 %v2765, %v2766
    %v2768 = vsub.f32 1.0, %v2767
    %v2769 = vmul.f32 %v2766, %v2768
    %v2770 = vadd.f32 %v2766, %v2769
    %vm2771 = vweird.f32 %v2765
    %vm2772 = vweird.f32 %v2766
    %vm2773 = vmor %vm2771, %vm2772
    %v2774 = vsel %vm2773, %v2766, %v2770
    %v2775 = vand.u32 2147483647, %v2765
    %vm2776 = vcmp.eq.f32.partialorder %v2775, 8.507059e+37
    %v2777 = vand.u32 %v2765, 2147483648
    %v2778 = vor.u32 1.1754944e-38, %v2777
    %v2779 = vsel %vm2776, %v2778, %v2774
    %v2780 = vmul.f32 1.0, %v2779
    %v2781 = vxor.u32 %v2713, 2147483648
    %v2782 = vmul.f32 %v2781, 1.442695
    %v2783 = vpow.pop %v2782
    %v2784 = vadd.f32 %v2783, 1.0
    %v2785 = vrcp.pop %v2784
    %v2786 = vmul.f32 %v2784, %v2785
    %v2787 = vsub.f32 1.0, %v2786
    %v2788 = vmul.f32 %v2785, %v2787
    %v2789 = vadd.f32 %v2785, %v2788
    %vm2790 = vweird.f32 %v2784
    %vm2791 = vweird.f32 %v2785
    %vm2792 = vmor %vm2790, %vm2791
    %v2793 = vsel %vm2792, %v2785, %v2789
    %v2794 = vand.u32 2147483647, %v2784
    %vm2795 = vcmp.eq.f32.partialorder %v2794, 8.507059e+37
    %v2796 = vand.u32 %v2784, 2147483648
    %v2797 = vor.u32 1.1754944e-38, %v2796
    %v2798 = vsel %vm2795, %v2797, %v2793
    %v2799 = vmul.f32 1.0, %v2798
    %v2800 = vtanh.pop %v2737
    %v2801 = vxor.u32 %v2761, 2147483648
    %v2802 = vmul.f32 %v2801, 1.442695
    %v2803 = vpow.pop %v2802
    %v2804 = vadd.f32 %v2803, 1.0
    %v2805 = vrcp.pop %v2804
    %v2806 = vmul.f32 %v2804, %v2805
    %v2807 = vsub.f32 1.0, %v2806
    %v2808 = vmul.f32 %v2805, %v2807
    %v2809 = vadd.f32 %v2805, %v2808
    %vm2810 = vweird.f32 %v2804
    %vm2811 = vweird.f32 %v2805
    %vm2812 = vmor %vm2810, %vm2811
    %v2813 = vsel %vm2812, %v2805, %v2809
    %v2814 = vand.u32 2147483647, %v2804
    %vm2815 = vcmp.eq.f32.partialorder %v2814, 8.507059e+37
    %v2816 = vand.u32 %v2804, 2147483648
    %v2817 = vor.u32 1.1754944e-38, %v2816
    %v2818 = vsel %vm2815, %v2817, %v2813
    %v2819 = vmul.f32 1.0, %v2818
    %v2821 = vrot.slane %v2659, 6
    %v2823 = vmul.f32 %v2799, %v2821
    %v2824 = vmul.f32 %v2780, %v2800
    %v2825 = vadd.f32 %v2823, %v2824
    %v2826 = vtanh.pop %v2825
    %v2827 = vmul.f32 %v2819, %v2826
    %v2829 = vrot.slane %v2827, 4
    %v2830 = vsel %vm231, %v2829, 0
    %2832 = vmatpush.msra.mxu0 0.0
    %2833 = vmatpush.msra.mxu0 0.0
    %2834 = vmatpush.msra.mxu0 0.0
    %2835 = vmatpush.msra.mxu0 0.0
    %2836 = vmatpush.msra.mxu0 0.0
    %2837 = vmatpush.msra.mxu0 0.0
    %2838 = vmatpush.msra.mxu0 0.0
    %2839 = vmatpush.msra.mxu0 0.0
    %2840 = vmatpush.msra.mxu0 0.0
    %2841 = vmatpush.msra.mxu0 0.0
    %2842 = vmatpush.msra.mxu0 0.0
    %2843 = vmatpush.msra.mxu0 0.0
    %2844 = vmatpush.msra.mxu0 %v1683
    %2845 = vmatpush.msra.mxu0 %v1682
    %2846 = vmatpush.msra.mxu0 %v1681
    %2847 = vmatpush.msra.mxu0 %v1680
    %2848 = vmatmul.f32.gmra.mxu0 %v2830
    %v2849 = vpop.f32.mrf.mxu0
    %v2850 = vadd.f32 0.0, %v2849
    %2851 = vdwg.mxu0
    %v2853 = vrot.slane %v2850, 2
    %v2855 = vadd.f32 %v1579, %v2853
    %2856 = vmatpush.msra.mxu0 0.0
    %2857 = vmatpush.msra.mxu0 0.0
    %2858 = vmatpush.msra.mxu0 0.0
    %2859 = vmatpush.msra.mxu0 0.0
    %2860 = vmatpush.msra.mxu0 0.0
    %2861 = vmatpush.msra.mxu0 0.0
    %2862 = vmatpush.msra.mxu0 0.0
    %2863 = vmatpush.msra.mxu0 0.0
    %2864 = vmatpush.msra.mxu0 0.0
    %2865 = vmatpush.msra.mxu0 0.0
    %2866 = vmatpush.msra.mxu0 0.0
    %2867 = vmatpush.msra.mxu0 0.0
    %2868 = vmatpush.msra.mxu0 %v1688
    %2869 = vmatpush.msra.mxu0 %v1687
    %2870 = vmatpush.msra.mxu0 %v1686
    %2871 = vmatpush.msra.mxu0 %v1685
    %2872 = vmatmul.f32.gmra.mxu0 %v2830
    %v2873 = vpop.f32.mrf.mxu0
    %v2874 = vadd.f32 0.0, %v2873
    %2875 = vdwg.mxu0
    %v2877 = vrot.slane %v2874, 2
    %v2879 = vadd.f32 %v1612, %v2877
    %2880 = vmatpush.msra.mxu0 0.0
    %2881 = vmatpush.msra.mxu0 0.0
    %2882 = vmatpush.msra.mxu0 0.0
    %2883 = vmatpush.msra.mxu0 0.0
    %2884 = vmatpush.msra.mxu0 0.0
    %2885 = vmatpush.msra.mxu0 0.0
    %2886 = vmatpush.msra.mxu0 0.0
    %2887 = vmatpush.msra.mxu0 0.0
    %2888 = vmatpush.msra.mxu0 0.0
    %2889 = vmatpush.msra.mxu0 0.0
    %2890 = vmatpush.msra.mxu0 0.0
    %2891 = vmatpush.msra.mxu0 0.0
    %2892 = vmatpush.msra.mxu0 %v1693
    %2893 = vmatpush.msra.mxu0 %v1692
    %2894 = vmatpush.msra.mxu0 %v1691
    %2895 = vmatpush.msra.mxu0 %v1690
    %2896 = vmatmul.f32.gmra.mxu0 %v2830
    %v2897 = vpop.f32.mrf.mxu0
    %v2898 = vadd.f32 0.0, %v2897
    %2899 = vdwg.mxu0
    %v2901 = vrot.slane %v2898, 2
    %v2903 = vadd.f32 %v1645, %v2901
    %2904 = vmatpush.msra.mxu0 0.0
    %2905 = vmatpush.msra.mxu0 0.0
    %2906 = vmatpush.msra.mxu0 0.0
    %2907 = vmatpush.msra.mxu0 0.0
    %2908 = vmatpush.msra.mxu0 0.0
    %2909 = vmatpush.msra.mxu0 0.0
    %2910 = vmatpush.msra.mxu0 0.0
    %2911 = vmatpush.msra.mxu0 0.0
    %2912 = vmatpush.msra.mxu0 0.0
    %2913 = vmatpush.msra.mxu0 0.0
    %2914 = vmatpush.msra.mxu0 0.0
    %2915 = vmatpush.msra.mxu0 0.0
    %2916 = vmatpush.msra.mxu0 %v1698
    %2917 = vmatpush.msra.mxu0 %v1697
    %2918 = vmatpush.msra.mxu0 %v1696
    %2919 = vmatpush.msra.mxu0 %v1695
    %2920 = vmatmul.f32.gmra.mxu0 %v2830
    %v2921 = vpop.f32.mrf.mxu0
    %v2922 = vadd.f32 0.0, %v2921
    %2923 = vdwg.mxu0
    %v2925 = vrot.slane %v2922, 2
    %v2927 = vadd.f32 %v1678, %v2925
    %v2928 = vxor.u32 %v2855, 2147483648
    %v2929 = vmul.f32 %v2928, 1.442695
    %v2930 = vpow.pop %v2929
    %v2931 = vadd.f32 %v2930, 1.0
    %v2932 = vrcp.pop %v2931
    %v2933 = vmul.f32 %v2931, %v2932
    %v2934 = vsub.f32 1.0, %v2933
    %v2935 = vmul.f32 %v2932, %v2934
    %v2936 = vadd.f32 %v2932, %v2935
    %vm2937 = vweird.f32 %v2931
    %vm2938 = vweird.f32 %v2932
    %vm2939 = vmor %vm2937, %vm2938
    %v2940 = vsel %vm2939, %v2932, %v2936
    %v2941 = vand.u32 2147483647, %v2931
    %vm2942 = vcmp.eq.f32.partialorder %v2941, 8.507059e+37
    %v2943 = vand.u32 %v2931, 2147483648
    %v2944 = vor.u32 1.1754944e-38, %v2943
    %v2945 = vsel %vm2942, %v2944, %v2940
    %v2946 = vmul.f32 1.0, %v2945
    %v2947 = vxor.u32 %v2879, 2147483648
    %v2948 = vmul.f32 %v2947, 1.442695
    %v2949 = vpow.pop %v2948
    %v2950 = vadd.f32 %v2949, 1.0
    %v2951 = vrcp.pop %v2950
    %v2952 = vmul.f32 %v2950, %v2951
    %v2953 = vsub.f32 1.0, %v2952
    %v2954 = vmul.f32 %v2951, %v2953
    %v2955 = vadd.f32 %v2951, %v2954
    %vm2956 = vweird.f32 %v2950
    %vm2957 = vweird.f32 %v2951
    %vm2958 = vmor %vm2956, %vm2957
    %v2959 = vsel %vm2958, %v2951, %v2955
    %v2960 = vand.u32 2147483647, %v2950
    %vm2961 = vcmp.eq.f32.partialorder %v2960, 8.507059e+37
    %v2962 = vand.u32 %v2950, 2147483648
    %v2963 = vor.u32 1.1754944e-38, %v2962
    %v2964 = vsel %vm2961, %v2963, %v2959
    %v2965 = vmul.f32 1.0, %v2964
    %v2966 = vtanh.pop %v2903
    %v2967 = vxor.u32 %v2927, 2147483648
    %v2968 = vmul.f32 %v2967, 1.442695
    %v2969 = vpow.pop %v2968
    %v2970 = vadd.f32 %v2969, 1.0
    %v2971 = vrcp.pop %v2970
    %v2972 = vmul.f32 %v2970, %v2971
    %v2973 = vsub.f32 1.0, %v2972
    %v2974 = vmul.f32 %v2971, %v2973
    %v2975 = vadd.f32 %v2971, %v2974
    %vm2976 = vweird.f32 %v2970
    %vm2977 = vweird.f32 %v2971
    %vm2978 = vmor %vm2976, %vm2977
    %v2979 = vsel %vm2978, %v2971, %v2975
    %v2980 = vand.u32 2147483647, %v2970
    %vm2981 = vcmp.eq.f32.partialorder %v2980, 8.507059e+37
    %v2982 = vand.u32 %v2970, 2147483648
    %v2983 = vor.u32 1.1754944e-38, %v2982
    %v2984 = vsel %vm2981, %v2983, %v2979
    %v2985 = vmul.f32 1.0, %v2984
    %v2987 = vrot.slane %v2825, 6
    %v2989 = vmul.f32 %v2965, %v2987
    %v2990 = vmul.f32 %v2946, %v2966
    %v2991 = vadd.f32 %v2989, %v2990
    %v2992 = vtanh.pop %v2991
    %v2993 = vmul.f32 %v2985, %v2992
    %v2994 = vld [vmem:[%s7] sm:$0xff]
    %v2995 = vld [vmem:[%s7 + $0x8] sm:$0xff]
    %v2996 = vld [vmem:[%s7 + $0x10] sm:$0xff]
    %v2997 = vld [vmem:[%s7 + $0x18] sm:$0xff]
    %v2998 = vld [vmem:[#allocation3] sm:$0x1]
    %v3000 = vperm.slane %v2998, 0
    %v3003 = vrot.slane %v2993, 6
    %v3004 = vsel %vm231, %v3003, 0
    %3006 = vmatpush.msra.mxu0 0.0
    %3007 = vmatpush.msra.mxu0 0.0
    %3008 = vmatpush.msra.mxu0 0.0
    %3009 = vmatpush.msra.mxu0 0.0
    %3010 = vmatpush.msra.mxu0 0.0
    %3011 = vmatpush.msra.mxu0 0.0
    %3012 = vmatpush.msra.mxu0 0.0
    %3013 = vmatpush.msra.mxu0 0.0
    %3014 = vmatpush.msra.mxu0 0.0
    %3015 = vmatpush.msra.mxu0 0.0
    %3016 = vmatpush.msra.mxu0 0.0
    %3017 = vmatpush.msra.mxu0 0.0
    %3018 = vmatpush.msra.mxu0 %v2997
    %3019 = vmatpush.msra.mxu0 %v2996
    %3020 = vmatpush.msra.mxu0 %v2995
    %3021 = vmatpush.msra.mxu0 %v2994
    %3022 = vmatmul.f32.gmra.mxu0 %v3004
    %v3023 = vpop.f32.mrf.mxu0
    %v3024 = vadd.f32 %v3000, %v3023
    %3025 = vdwg.mxu0
    %v3026 = vxor.u32 %v3024, 2147483648
    %v3027 = vmul.f32 %v3026, 1.442695
    %v3028 = vpow.pop %v3027
    %v3029 = vadd.f32 %v3028, 1.0
    %v3030 = vrcp.pop %v3029
    %v3031 = vmul.f32 %v3029, %v3030
    %v3032 = vsub.f32 1.0, %v3031
    %v3033 = vmul.f32 %v3030, %v3032
    %v3034 = vadd.f32 %v3030, %v3033
    %vm3035 = vweird.f32 %v3029
    %vm3036 = vweird.f32 %v3030
    %vm3037 = vmor %vm3035, %vm3036
    %v3038 = vsel %vm3037, %v3030, %v3034
    %v3039 = vand.u32 2147483647, %v3029
    %vm3040 = vcmp.eq.f32.partialorder %v3039, 8.507059e+37
    %v3041 = vand.u32 %v3029, 2147483648
    %v3042 = vor.u32 1.1754944e-38, %v3041
    %v3043 = vsel %vm3040, %v3042, %v3038
    %v3044 = vmul.f32 1.0, %v3043
    %vm3045 = vcmask 1024
    %3046 = vst.msk [vmem:[%s9] sm:$0x3] %vm3045, %v3044
    // Predicated region
    $region50: #{lstm_binary_classifier_forward.1} parent=1 // pred_check
      _
    $region51: #{lstm_binary_classifier_forward.1} parent=1 // pred_check_branch
      %3048 = sbr.rel (0) target = $region53
    $region52: #{lstm_binary_classifier_forward.1} parent=1 // pred_region
      _
    $region53: #{lstm_binary_classifier_forward.1} parent=1 // pred_fallthru
      _
    // Predicated region
    $region54: #{lstm_binary_classifier_forward.1} parent=1 // pred_check
      _
    $region55: #{lstm_binary_classifier_forward.1} parent=1 // pred_check_branch
      %3050 = sbr.rel (0) target = $region57
    $region56: #{lstm_binary_classifier_forward.1} parent=1 // pred_region
      _
    $region57: #{lstm_binary_classifier_forward.1} parent=1 // pred_fallthru
      _
    %3051 = vsyncpa [#allocation5], 1
    %3052 = vsyncpa [#allocation7], 1

</llo_original>
